<compile_context>
chip_gen: v7x
topology: tpu7x:2x2x1
jax: 0.10.0
libtpu: 0.0.40
codegen_flags: <defaults>
</compile_context>

<pallas_src>
import jax
import jax.numpy as jnp
import numpy as np
from jax import lax
from jax.experimental import pallas as pl
from jax.experimental.pallas import tpu as pltpu


def bottleneck_forward_nhwc(x_nhwc, w1, w2, w3, *, stride=1, images_per_step=None):
    """x_nhwc: (N, H, W, Cin); w*: PyTorch layout (Cout, Cin, 3, 3). Returns NHWC."""
    assert stride == 1, "only stride=1 (module default) is implemented"
    N, H, W, Cin = x_nhwc.shape
    planes = w1.shape[0]
    cout3 = w3.shape[0]
    assert w1.shape == (planes, Cin, 3, 3)
    assert w2.shape == (planes, planes, 3, 3)
    assert w3.shape == (cout3, planes, 3, 3)
    H1, W1 = H - 2, W - 2                  # conv1 / conv2 output size
    H3, W3 = H1 - 2, W1 - 2                # conv3 output size
    assert H3 > 0 and W3 > 0, "image too small for three 3x3 convs"

    # Images per grid step: fold several images into the matmul M dim, but keep
    # >= 2 grid steps when possible so the 'parallel' axis feeds both v7x TCs.
    if images_per_step is None:
        nb = max(1, min(8, N // 2))
        while N % nb:
            nb -= 1
    else:
        nb = images_per_step
        assert N % nb == 0, "N must be divisible by images_per_step"
    steps = N // nb

    M_blk = nb * H * W                     # flat rows per grid step
    Mc = M_blk - (2 * W + 2)               # computed output rows (covers all valid)
    S_rows = -(-(M_blk + W + 1) // 8) * 8  # staging strip rows (rounded to 8)
    Kmax = 9 * max(Cin, planes)

    # Weights: (Cout, Cin, 3, 3) -> (3, 3, Cin, Cout) -> (9*Cin, Cout), f32.
    # Row ordering (kh, kw, ci) matches the patch column ordering below.
    def _wflat(w):
        return jnp.transpose(w, (2, 3, 1, 0)).reshape(-1, w.shape[0]).astype(jnp.float32)

    w1f, w2f, w3f = _wflat(w1), _wflat(w2), _wflat(w3)

    # Validity mask on the flattened row-stride-W grid (1 at (h<H1, w<W1), else
    # 0).  Built once on the host; passed as a tiny constant input.
    mnp = np.zeros((nb, H, W), np.float32)
    mnp[:, :H1, :W1] = 1.0
    mask = jnp.asarray(mnp.reshape(-1)[:Mc][:, None])        # (Mc, 1)

    x_flat = x_nhwc.reshape(N * H * W, Cin)

    def kernel(x_ref, mask_ref, w1_ref, w2_ref, w3_ref, o_ref, s_ref, patch_ref):
        msk = mask_ref[...]                                   # (Mc, 1)

        def conv3x3(load_tap, w_ref, cin_c):
            # im2col: 9 lane-sliced stores build the (Mc, 9*cin_c) patch, then
            # ONE MXU matmul contracts K = 9*cin_c (f32 accumulation).
            for kh in range(3):
                for kw in range(3):
                    c0 = (kh * 3 + kw) * cin_c
                    tap = load_tap(kh * W + kw)               # (Mc, cin_c)
                    patch_ref[:, c0:c0 + cin_c] = tap.astype(patch_ref.dtype)
            out = jnp.dot(patch_ref[:, :9 * cin_c], w_ref[...],
                          preferred_element_type=jnp.float32)
            return jnp.maximum(out, 0.0)

        # Zero the never-written head/tail of the zero-padded staging strip.
        # Done every step (cheap: ~3W rows) so correctness does not depend on
        # which TensorCore executed step 0 of the 'parallel' grid axis.
        s_ref[0:W + 1, :] = jnp.zeros((W + 1, s_ref.shape[1]), s_ref.dtype)
        s_ref[W + 1 + Mc:, :] = jnp.zeros(
            (S_rows - (W + 1 + Mc), s_ref.shape[1]), s_ref.dtype)

        # conv1 (valid) + ReLU on the flattened grid.
        out1 = conv3x3(lambda off: x_ref[pl.ds(off, Mc), :], w1_ref, Cin)
        # Stage as conv2's zero-padded input: a shift of (W+1) rows == pad (1,1)
        # on the (H, W) grid; the mask turns wrap-around garbage into the zero
        # border, and the head/tail zeros complete it.
        s_ref[W + 1:W + 1 + Mc, :] = out1 * msk

        # conv2 (pad=1, stride=1) + ReLU.
        out2 = conv3x3(lambda off: s_ref[pl.ds(off, Mc), :], w2_ref, planes)
        s_ref[W + 1:W + 1 + Mc, :] = out2 * msk

        # conv3 (valid) + ReLU: same staging convention, read at +(W+1).
        out3 = conv3x3(lambda off: s_ref[pl.ds(W + 1 + off, Mc), :], w3_ref, planes)

        o_ref[0:Mc, :] = out3.astype(o_ref.dtype)
        o_ref[Mc:, :] = jnp.zeros((M_blk - Mc, cout3), o_ref.dtype)

    out_flat = pl.pallas_call(
        kernel,
        out_shape=jax.ShapeDtypeStruct((N * H * W, cout3), x_nhwc.dtype),
        grid_spec=pltpu.PrefetchScalarGridSpec(
            num_scalar_prefetch=0,
            grid=(steps,),
            in_specs=[
                pl.BlockSpec((M_blk, Cin), lambda s: (s, 0)),
                pl.BlockSpec((Mc, 1), lambda s: (0, 0)),
                pl.BlockSpec((9 * Cin, planes), lambda s: (0, 0)),
                pl.BlockSpec((9 * planes, planes), lambda s: (0, 0)),
                pl.BlockSpec((9 * planes, cout3), lambda s: (0, 0)),
            ],
            out_specs=pl.BlockSpec((M_blk, cout3), lambda s: (s, 0)),
            scratch_shapes=[
                pltpu.VMEM((S_rows, planes), jnp.float32),   # padded staging strip
                pltpu.VMEM((Mc, Kmax), jnp.float32),         # im2col patch
            ],
        ),
        compiler_params=pltpu.CompilerParams(
            dimension_semantics=("parallel",),
        ),
    )(x_flat, mask, w1f, w2f, w3f)

    # Valid outputs live at (h < H3, w < W3) of the row-stride-W grid; the
    # wrapper drops the garbage/wrap positions.
    return out_flat.reshape(N, H, W, cout3)[:, :H3, :W3, :]


def bottleneck_forward(x_nchw, w1, w2, w3, *, stride=1, images_per_step=None):
    """NCHW adapter matching the PyTorch module's layout (relayouts stay in the
    wrapper; use bottleneck_forward_nhwc to avoid them entirely)."""
    x_nhwc = jnp.transpose(x_nchw, (0, 2, 3, 1))
    out_nhwc = bottleneck_forward_nhwc(x_nhwc, w1, w2, w3, stride=stride,
                                       images_per_step=images_per_step)
    return jnp.transpose(out_nhwc, (0, 3, 1, 2))


def bottleneck_ref(x_nchw, w1, w2, w3):
    """Pure-JAX reference mirroring the PyTorch forward (NCHW, full precision)."""
    dn = lax.conv_dimension_numbers(x_nchw.shape, w1.shape, ("NCHW", "OIHW", "NCHW"))
    hp = lax.Precision.HIGHEST
    out = lax.conv_general_dilated(x_nchw, w1, (1, 1), "VALID",
                                   dimension_numbers=dn, precision=hp)
    out = jnp.maximum(out, 0.0)
    out = lax.conv_general_dilated(out, w2, (1, 1), ((1, 1), (1, 1)),
                                   dimension_numbers=dn, precision=hp)
    out = jnp.maximum(out, 0.0)
    out = lax.conv_general_dilated(out, w3, (1, 1), "VALID",
                                   dimension_numbers=dn, precision=hp)
    out = jnp.maximum(out, 0.0)
    return out


if __name__ == "__main__":
    key = jax.random.PRNGKey(0)
    kx, k1, k2, k3 = jax.random.split(key, 4)

    # Small shapes consistent with the module: inplanes=4, planes=4, expansion=4.
    N, inplanes, planes, H, W = 2, 4, 4, 16, 16
    x = jax.random.normal(kx, (N, inplanes, H, W), jnp.float32)
    w1 = jax.random.normal(k1, (planes, inplanes, 3, 3), jnp.float32) * 0.2
    w2 = jax.random.normal(k2, (planes, planes, 3, 3), jnp.float32) * 0.2
    w3 = jax.random.normal(k3, (planes * 4, planes, 3, 3), jnp.float32) * 0.2

    ref = bottleneck_ref(x, w1, w2, w3)

    # Default path: nb=1 -> 2 parallel grid steps (both v7x TensorCores get work).
    out = jax.jit(bottleneck_forward)(x, w1, w2, w3)
    out = jax.block_until_ready(out)
    assert out.shape == ref.shape == (N, planes * 4, H - 4, W - 4), (out.shape, ref.shape)
    # Kernel uses default (single-pass bf16-feed) MXU precision; reference is
    # HIGHEST, hence the ~1e-2 tolerance across three chained convs.
    np.testing.assert_allclose(np.asarray(out), np.asarray(ref), rtol=2e-2, atol=2e-2)

    # Batched path: both images folded into one matmul M (single grid step).
    out_b = jax.block_until_ready(
        bottleneck_forward(x, w1, w2, w3, images_per_step=2))
    np.testing.assert_allclose(np.asarray(out_b), np.asarray(ref), rtol=2e-2, atol=2e-2)

    print("KERNEL_OK")
</pallas_src>

<mosaic_0001>
module attributes {stable_mosaic.version = 11 : i64} {
  func.func @kernel(%arg0: i32, %arg1: memref<256x4xf32, #tpu.memory_space<vmem>>, %arg2: memref<222x1xf32, #tpu.memory_space<vmem>>, %arg3: memref<36x4xf32, #tpu.memory_space<vmem>>, %arg4: memref<36x4xf32, #tpu.memory_space<vmem>>, %arg5: memref<36x16xf32, #tpu.memory_space<vmem>>, %arg6: memref<256x16xf32, #tpu.memory_space<vmem>>, %arg7: memref<280x4xf32, #tpu.memory_space<vmem>>, %arg8: memref<222x36xf32, #tpu.memory_space<vmem>>) attributes {dimension_semantics = [#tpu.dimension_semantics<parallel>], iteration_bounds = array<i64: 2>, scalar_prefetch = 0 : i64, scratch_operands = 2 : i64, tpu.core_type = #tpu.core_type<tc>, window_params = [{transform_indices = @transform_0, window_bounds = array<i64: 256, 4>}, {pipeline_mode = #tpu.pipeline_mode<synchronous>, transform_indices = @transform_1, window_bounds = array<i64: 222, 1>}, {pipeline_mode = #tpu.pipeline_mode<synchronous>, transform_indices = @transform_2, window_bounds = array<i64: 36, 4>}, {pipeline_mode = #tpu.pipeline_mode<synchronous>, transform_indices = @transform_3, window_bounds = array<i64: 36, 4>}, {pipeline_mode = #tpu.pipeline_mode<synchronous>, transform_indices = @transform_4, window_bounds = array<i64: 36, 16>}, {transform_indices = @transform_5, window_bounds = array<i64: 256, 16>}]} {
    %c0 = arith.constant 0 : index
    %c0_0 = arith.constant 0 : index
    %0 = vector.load %arg2[%c0, %c0_0] : memref<222x1xf32, #tpu.memory_space<vmem>>, vector<222x1xf32>
    %cst = arith.constant 0.000000e+00 : f32
    %1 = vector.broadcast %cst : f32 to vector<17x4xf32>
    %c0_1 = arith.constant 0 : index
    %c0_2 = arith.constant 0 : index
    %2 = vector.load %arg7[%c0_1, %c0_2] : memref<280x4xf32, #tpu.memory_space<vmem>>, vector<17x4xf32>
    tpu.vector_store %arg7[%c0_1, %c0_2], %1 {strides = array<i32>} : memref<280x4xf32, #tpu.memory_space<vmem>>, vector<17x4xf32>,
    %cst_3 = arith.constant 0.000000e+00 : f32
    %3 = vector.broadcast %cst_3 : f32 to vector<41x4xf32>
    %c239 = arith.constant 239 : index
    %c0_4 = arith.constant 0 : index
    %4 = vector.load %arg7[%c239, %c0_4] : memref<280x4xf32, #tpu.memory_space<vmem>>, vector<41x4xf32>
    tpu.vector_store %arg7[%c239, %c0_4], %3 {strides = array<i32>} : memref<280x4xf32, #tpu.memory_space<vmem>>, vector<41x4xf32>,
    %c0_5 = arith.constant 0 : index
    %c0_6 = arith.constant 0 : index
    %5 = vector.load %arg1[%c0_5, %c0_6] : memref<256x4xf32, #tpu.memory_space<vmem>>, vector<222x4xf32>
    %c0_7 = arith.constant 0 : index
    %c0_8 = arith.constant 0 : index
    %6 = vector.load %arg8[%c0_7, %c0_8] : memref<222x36xf32, #tpu.memory_space<vmem>>, vector<222x4xf32>
    tpu.vector_store %arg8[%c0_7, %c0_8], %5 {strides = array<i32>} : memref<222x36xf32, #tpu.memory_space<vmem>>, vector<222x4xf32>,
    %c1 = arith.constant 1 : index
    %c0_9 = arith.constant 0 : index
    %7 = vector.load %arg1[%c1, %c0_9] : memref<256x4xf32, #tpu.memory_space<vmem>>, vector<222x4xf32>
    %c0_10 = arith.constant 0 : index
    %c4 = arith.constant 4 : index
    %8 = vector.load %arg8[%c0_10, %c4] : memref<222x36xf32, #tpu.memory_space<vmem>>, vector<222x4xf32>
    tpu.vector_store %arg8[%c0_10, %c4], %7 {strides = array<i32>} : memref<222x36xf32, #tpu.memory_space<vmem>>, vector<222x4xf32>,
    %c2 = arith.constant 2 : index
    %c0_11 = arith.constant 0 : index
    %9 = vector.load %arg1[%c2, %c0_11] : memref<256x4xf32, #tpu.memory_space<vmem>>, vector<222x4xf32>
    %c0_12 = arith.constant 0 : index
    %c8 = arith.constant 8 : index
    %10 = vector.load %arg8[%c0_12, %c8] : memref<222x36xf32, #tpu.memory_space<vmem>>, vector<222x4xf32>
    tpu.vector_store %arg8[%c0_12, %c8], %9 {strides = array<i32>} : memref<222x36xf32, #tpu.memory_space<vmem>>, vector<222x4xf32>,
    %c16 = arith.constant 16 : index
    %c0_13 = arith.constant 0 : index
    %11 = vector.load %arg1[%c16, %c0_13] : memref<256x4xf32, #tpu.memory_space<vmem>>, vector<222x4xf32>
    %c0_14 = arith.constant 0 : index
    %c12 = arith.constant 12 : index
    %12 = vector.load %arg8[%c0_14, %c12] : memref<222x36xf32, #tpu.memory_space<vmem>>, vector<222x4xf32>
    tpu.vector_store %arg8[%c0_14, %c12], %11 {strides = array<i32>} : memref<222x36xf32, #tpu.memory_space<vmem>>, vector<222x4xf32>,
    %c17 = arith.constant 17 : index
    %c0_15 = arith.constant 0 : index
    %13 = vector.load %arg1[%c17, %c0_15] : memref<256x4xf32, #tpu.memory_space<vmem>>, vector<222x4xf32>
    %c0_16 = arith.constant 0 : index
    %c16_17 = arith.constant 16 : index
    %14 = vector.load %arg8[%c0_16, %c16_17] : memref<222x36xf32, #tpu.memory_space<vmem>>, vector<222x4xf32>
    tpu.vector_store %arg8[%c0_16, %c16_17], %13 {strides = array<i32>} : memref<222x36xf32, #tpu.memory_space<vmem>>, vector<222x4xf32>,
    %c18 = arith.constant 18 : index
    %c0_18 = arith.constant 0 : index
    %15 = vector.load %arg1[%c18, %c0_18] : memref<256x4xf32, #tpu.memory_space<vmem>>, vector<222x4xf32>
    %c0_19 = arith.constant 0 : index
    %c20 = arith.constant 20 : index
    %16 = vector.load %arg8[%c0_19, %c20] : memref<222x36xf32, #tpu.memory_space<vmem>>, vector<222x4xf32>
    tpu.vector_store %arg8[%c0_19, %c20], %15 {strides = array<i32>} : memref<222x36xf32, #tpu.memory_space<vmem>>, vector<222x4xf32>,
    %c32 = arith.constant 32 : index
    %c0_20 = arith.constant 0 : index
    %17 = vector.load %arg1[%c32, %c0_20] : memref<256x4xf32, #tpu.memory_space<vmem>>, vector<222x4xf32>
    %c0_21 = arith.constant 0 : index
    %c24 = arith.constant 24 : index
    %18 = vector.load %arg8[%c0_21, %c24] : memref<222x36xf32, #tpu.memory_space<vmem>>, vector<222x4xf32>
    tpu.vector_store %arg8[%c0_21, %c24], %17 {strides = array<i32>} : memref<222x36xf32, #tpu.memory_space<vmem>>, vector<222x4xf32>,
    %c33 = arith.constant 33 : index
    %c0_22 = arith.constant 0 : index
    %19 = vector.load %arg1[%c33, %c0_22] : memref<256x4xf32, #tpu.memory_space<vmem>>, vector<222x4xf32>
    %c0_23 = arith.constant 0 : index
    %c28 = arith.constant 28 : index
    %20 = vector.load %arg8[%c0_23, %c28] : memref<222x36xf32, #tpu.memory_space<vmem>>, vector<222x4xf32>
    tpu.vector_store %arg8[%c0_23, %c28], %19 {strides = array<i32>} : memref<222x36xf32, #tpu.memory_space<vmem>>, vector<222x4xf32>,
    %c34 = arith.constant 34 : index
    %c0_24 = arith.constant 0 : index
    %21 = vector.load %arg1[%c34, %c0_24] : memref<256x4xf32, #tpu.memory_space<vmem>>, vector<222x4xf32>
    %c0_25 = arith.constant 0 : index
    %c32_26 = arith.constant 32 : index
    %22 = vector.load %arg8[%c0_25, %c32_26] : memref<222x36xf32, #tpu.memory_space<vmem>>, vector<222x4xf32>
    tpu.vector_store %arg8[%c0_25, %c32_26], %21 {strides = array<i32>} : memref<222x36xf32, #tpu.memory_space<vmem>>, vector<222x4xf32>,
    %c0_27 = arith.constant 0 : index
    %c0_28 = arith.constant 0 : index
    %23 = vector.load %arg8[%c0_27, %c0_28] : memref<222x36xf32, #tpu.memory_space<vmem>>, vector<222x36xf32>
    %c0_29 = arith.constant 0 : index
    %c0_30 = arith.constant 0 : index
    %24 = vector.load %arg3[%c0_29, %c0_30] : memref<36x4xf32, #tpu.memory_space<vmem>>, vector<36x4xf32>
    %cst_31 = arith.constant dense<0.000000e+00> : vector<222x4xf32>
    %25 = tpu.matmul %23, %24, %cst_31 {dimension_numbers = #tpu.dot_dimension_numbers<[1], [0], [0], [1], [0, 0, 1, 1], [], []>} : vector<222x36xf32>, vector<36x4xf32>, vector<222x4xf32> -> vector<222x4xf32>
    %cst_32 = arith.constant 0.000000e+00 : f32
    %26 = vector.broadcast %cst_32 : f32 to vector<222x4xf32>
    %27 = arith.maximumf %25, %26 : vector<222x4xf32>
    %28 = vector.broadcast %0 : vector<222x1xf32> to vector<222x4xf32>
    %29 = arith.mulf %27, %28 : vector<222x4xf32>
    %c17_33 = arith.constant 17 : index
    %c0_34 = arith.constant 0 : index
    %30 = vector.load %arg7[%c17_33, %c0_34] : memref<280x4xf32, #tpu.memory_space<vmem>>, vector<222x4xf32>
    tpu.vector_store %arg7[%c17_33, %c0_34], %29 {strides = array<i32>} : memref<280x4xf32, #tpu.memory_space<vmem>>, vector<222x4xf32>,
    %c0_35 = arith.constant 0 : index
    %c0_36 = arith.constant 0 : index
    %31 = vector.load %arg7[%c0_35, %c0_36] : memref<280x4xf32, #tpu.memory_space<vmem>>, vector<222x4xf32>
    %c0_37 = arith.constant 0 : index
    %c0_38 = arith.constant 0 : index
    %32 = vector.load %arg8[%c0_37, %c0_38] : memref<222x36xf32, #tpu.memory_space<vmem>>, vector<222x4xf32>
    tpu.vector_store %arg8[%c0_37, %c0_38], %31 {strides = array<i32>} : memref<222x36xf32, #tpu.memory_space<vmem>>, vector<222x4xf32>,
    %c1_39 = arith.constant 1 : index
    %c0_40 = arith.constant 0 : index
    %33 = vector.load %arg7[%c1_39, %c0_40] : memref<280x4xf32, #tpu.memory_space<vmem>>, vector<222x4xf32>
    %c0_41 = arith.constant 0 : index
    %c4_42 = arith.constant 4 : index
    %34 = vector.load %arg8[%c0_41, %c4_42] : memref<222x36xf32, #tpu.memory_space<vmem>>, vector<222x4xf32>
    tpu.vector_store %arg8[%c0_41, %c4_42], %33 {strides = array<i32>} : memref<222x36xf32, #tpu.memory_space<vmem>>, vector<222x4xf32>,
    %c2_43 = arith.constant 2 : index
    %c0_44 = arith.constant 0 : index
    %35 = vector.load %arg7[%c2_43, %c0_44] : memref<280x4xf32, #tpu.memory_space<vmem>>, vector<222x4xf32>
    %c0_45 = arith.constant 0 : index
    %c8_46 = arith.constant 8 : index
    %36 = vector.load %arg8[%c0_45, %c8_46] : memref<222x36xf32, #tpu.memory_space<vmem>>, vector<222x4xf32>
    tpu.vector_store %arg8[%c0_45, %c8_46], %35 {strides = array<i32>} : memref<222x36xf32, #tpu.memory_space<vmem>>, vector<222x4xf32>,
    %c16_47 = arith.constant 16 : index
    %c0_48 = arith.constant 0 : index
    %37 = vector.load %arg7[%c16_47, %c0_48] : memref<280x4xf32, #tpu.memory_space<vmem>>, vector<222x4xf32>
    %c0_49 = arith.constant 0 : index
    %c12_50 = arith.constant 12 : index
    %38 = vector.load %arg8[%c0_49, %c12_50] : memref<222x36xf32, #tpu.memory_space<vmem>>, vector<222x4xf32>
    tpu.vector_store %arg8[%c0_49, %c12_50], %37 {strides = array<i32>} : memref<222x36xf32, #tpu.memory_space<vmem>>, vector<222x4xf32>,
    %c17_51 = arith.constant 17 : index
    %c0_52 = arith.constant 0 : index
    %39 = vector.load %arg7[%c17_51, %c0_52] : memref<280x4xf32, #tpu.memory_space<vmem>>, vector<222x4xf32>
    %c0_53 = arith.constant 0 : index
    %c16_54 = arith.constant 16 : index
    %40 = vector.load %arg8[%c0_53, %c16_54] : memref<222x36xf32, #tpu.memory_space<vmem>>, vector<222x4xf32>
    tpu.vector_store %arg8[%c0_53, %c16_54], %39 {strides = array<i32>} : memref<222x36xf32, #tpu.memory_space<vmem>>, vector<222x4xf32>,
    %c18_55 = arith.constant 18 : index
    %c0_56 = arith.constant 0 : index
    %41 = vector.load %arg7[%c18_55, %c0_56] : memref<280x4xf32, #tpu.memory_space<vmem>>, vector<222x4xf32>
    %c0_57 = arith.constant 0 : index
    %c20_58 = arith.constant 20 : index
    %42 = vector.load %arg8[%c0_57, %c20_58] : memref<222x36xf32, #tpu.memory_space<vmem>>, vector<222x4xf32>
    tpu.vector_store %arg8[%c0_57, %c20_58], %41 {strides = array<i32>} : memref<222x36xf32, #tpu.memory_space<vmem>>, vector<222x4xf32>,
    %c32_59 = arith.constant 32 : index
    %c0_60 = arith.constant 0 : index
    %43 = vector.load %arg7[%c32_59, %c0_60] : memref<280x4xf32, #tpu.memory_space<vmem>>, vector<222x4xf32>
    %c0_61 = arith.constant 0 : index
    %c24_62 = arith.constant 24 : index
    %44 = vector.load %arg8[%c0_61, %c24_62] : memref<222x36xf32, #tpu.memory_space<vmem>>, vector<222x4xf32>
    tpu.vector_store %arg8[%c0_61, %c24_62], %43 {strides = array<i32>} : memref<222x36xf32, #tpu.memory_space<vmem>>, vector<222x4xf32>,
    %c33_63 = arith.constant 33 : index
    %c0_64 = arith.constant 0 : index
    %45 = vector.load %arg7[%c33_63, %c0_64] : memref<280x4xf32, #tpu.memory_space<vmem>>, vector<222x4xf32>
    %c0_65 = arith.constant 0 : index
    %c28_66 = arith.constant 28 : index
    %46 = vector.load %arg8[%c0_65, %c28_66] : memref<222x36xf32, #tpu.memory_space<vmem>>, vector<222x4xf32>
    tpu.vector_store %arg8[%c0_65, %c28_66], %45 {strides = array<i32>} : memref<222x36xf32, #tpu.memory_space<vmem>>, vector<222x4xf32>,
    %c34_67 = arith.constant 34 : index
    %c0_68 = arith.constant 0 : index
    %47 = vector.load %arg7[%c34_67, %c0_68] : memref<280x4xf32, #tpu.memory_space<vmem>>, vector<222x4xf32>
    %c0_69 = arith.constant 0 : index
    %c32_70 = arith.constant 32 : index
    %48 = vector.load %arg8[%c0_69, %c32_70] : memref<222x36xf32, #tpu.memory_space<vmem>>, vector<222x4xf32>
    tpu.vector_store %arg8[%c0_69, %c32_70], %47 {strides = array<i32>} : memref<222x36xf32, #tpu.memory_space<vmem>>, vector<222x4xf32>,
    %c0_71 = arith.constant 0 : index
    %c0_72 = arith.constant 0 : index
    %49 = vector.load %arg8[%c0_71, %c0_72] : memref<222x36xf32, #tpu.memory_space<vmem>>, vector<222x36xf32>
    %c0_73 = arith.constant 0 : index
    %c0_74 = arith.constant 0 : index
    %50 = vector.load %arg4[%c0_73, %c0_74] : memref<36x4xf32, #tpu.memory_space<vmem>>, vector<36x4xf32>
    %cst_75 = arith.constant dense<0.000000e+00> : vector<222x4xf32>
    %51 = tpu.matmul %49, %50, %cst_75 {dimension_numbers = #tpu.dot_dimension_numbers<[1], [0], [0], [1], [0, 0, 1, 1], [], []>} : vector<222x36xf32>, vector<36x4xf32>, vector<222x4xf32> -> vector<222x4xf32>
    %cst_76 = arith.constant 0.000000e+00 : f32
    %52 = vector.broadcast %cst_76 : f32 to vector<222x4xf32>
    %53 = arith.maximumf %51, %52 : vector<222x4xf32>
    %54 = vector.broadcast %0 : vector<222x1xf32> to vector<222x4xf32>
    %55 = arith.mulf %53, %54 : vector<222x4xf32>
    %c17_77 = arith.constant 17 : index
    %c0_78 = arith.constant 0 : index
    %56 = vector.load %arg7[%c17_77, %c0_78] : memref<280x4xf32, #tpu.memory_space<vmem>>, vector<222x4xf32>
    tpu.vector_store %arg7[%c17_77, %c0_78], %55 {strides = array<i32>} : memref<280x4xf32, #tpu.memory_space<vmem>>, vector<222x4xf32>,
    %c17_79 = arith.constant 17 : index
    %c0_80 = arith.constant 0 : index
    %57 = vector.load %arg7[%c17_79, %c0_80] : memref<280x4xf32, #tpu.memory_space<vmem>>, vector<222x4xf32>
    %c0_81 = arith.constant 0 : index
    %c0_82 = arith.constant 0 : index
    %58 = vector.load %arg8[%c0_81, %c0_82] : memref<222x36xf32, #tpu.memory_space<vmem>>, vector<222x4xf32>
    tpu.vector_store %arg8[%c0_81, %c0_82], %57 {strides = array<i32>} : memref<222x36xf32, #tpu.memory_space<vmem>>, vector<222x4xf32>,
    %c18_83 = arith.constant 18 : index
    %c0_84 = arith.constant 0 : index
    %59 = vector.load %arg7[%c18_83, %c0_84] : memref<280x4xf32, #tpu.memory_space<vmem>>, vector<222x4xf32>
    %c0_85 = arith.constant 0 : index
    %c4_86 = arith.constant 4 : index
    %60 = vector.load %arg8[%c0_85, %c4_86] : memref<222x36xf32, #tpu.memory_space<vmem>>, vector<222x4xf32>
    tpu.vector_store %arg8[%c0_85, %c4_86], %59 {strides = array<i32>} : memref<222x36xf32, #tpu.memory_space<vmem>>, vector<222x4xf32>,
    %c19 = arith.constant 19 : index
    %c0_87 = arith.constant 0 : index
    %61 = vector.load %arg7[%c19, %c0_87] : memref<280x4xf32, #tpu.memory_space<vmem>>, vector<222x4xf32>
    %c0_88 = arith.constant 0 : index
    %c8_89 = arith.constant 8 : index
    %62 = vector.load %arg8[%c0_88, %c8_89] : memref<222x36xf32, #tpu.memory_space<vmem>>, vector<222x4xf32>
    tpu.vector_store %arg8[%c0_88, %c8_89], %61 {strides = array<i32>} : memref<222x36xf32, #tpu.memory_space<vmem>>, vector<222x4xf32>,
    %c33_90 = arith.constant 33 : index
    %c0_91 = arith.constant 0 : index
    %63 = vector.load %arg7[%c33_90, %c0_91] : memref<280x4xf32, #tpu.memory_space<vmem>>, vector<222x4xf32>
    %c0_92 = arith.constant 0 : index
    %c12_93 = arith.constant 12 : index
    %64 = vector.load %arg8[%c0_92, %c12_93] : memref<222x36xf32, #tpu.memory_space<vmem>>, vector<222x4xf32>
    tpu.vector_store %arg8[%c0_92, %c12_93], %63 {strides = array<i32>} : memref<222x36xf32, #tpu.memory_space<vmem>>, vector<222x4xf32>,
    %c34_94 = arith.constant 34 : index
    %c0_95 = arith.constant 0 : index
    %65 = vector.load %arg7[%c34_94, %c0_95] : memref<280x4xf32, #tpu.memory_space<vmem>>, vector<222x4xf32>
    %c0_96 = arith.constant 0 : index
    %c16_97 = arith.constant 16 : index
    %66 = vector.load %arg8[%c0_96, %c16_97] : memref<222x36xf32, #tpu.memory_space<vmem>>, vector<222x4xf32>
    tpu.vector_store %arg8[%c0_96, %c16_97], %65 {strides = array<i32>} : memref<222x36xf32, #tpu.memory_space<vmem>>, vector<222x4xf32>,
    %c35 = arith.constant 35 : index
    %c0_98 = arith.constant 0 : index
    %67 = vector.load %arg7[%c35, %c0_98] : memref<280x4xf32, #tpu.memory_space<vmem>>, vector<222x4xf32>
    %c0_99 = arith.constant 0 : index
    %c20_100 = arith.constant 20 : index
    %68 = vector.load %arg8[%c0_99, %c20_100] : memref<222x36xf32, #tpu.memory_space<vmem>>, vector<222x4xf32>
    tpu.vector_store %arg8[%c0_99, %c20_100], %67 {strides = array<i32>} : memref<222x36xf32, #tpu.memory_space<vmem>>, vector<222x4xf32>,
    %c49 = arith.constant 49 : index
    %c0_101 = arith.constant 0 : index
    %69 = vector.load %arg7[%c49, %c0_101] : memref<280x4xf32, #tpu.memory_space<vmem>>, vector<222x4xf32>
    %c0_102 = arith.constant 0 : index
    %c24_103 = arith.constant 24 : index
    %70 = vector.load %arg8[%c0_102, %c24_103] : memref<222x36xf32, #tpu.memory_space<vmem>>, vector<222x4xf32>
    tpu.vector_store %arg8[%c0_102, %c24_103], %69 {strides = array<i32>} : memref<222x36xf32, #tpu.memory_space<vmem>>, vector<222x4xf32>,
    %c50 = arith.constant 50 : index
    %c0_104 = arith.constant 0 : index
    %71 = vector.load %arg7[%c50, %c0_104] : memref<280x4xf32, #tpu.memory_space<vmem>>, vector<222x4xf32>
    %c0_105 = arith.constant 0 : index
    %c28_106 = arith.constant 28 : index
    %72 = vector.load %arg8[%c0_105, %c28_106] : memref<222x36xf32, #tpu.memory_space<vmem>>, vector<222x4xf32>
    tpu.vector_store %arg8[%c0_105, %c28_106], %71 {strides = array<i32>} : memref<222x36xf32, #tpu.memory_space<vmem>>, vector<222x4xf32>,
    %c51 = arith.constant 51 : index
    %c0_107 = arith.constant 0 : index
    %73 = vector.load %arg7[%c51, %c0_107] : memref<280x4xf32, #tpu.memory_space<vmem>>, vector<222x4xf32>
    %c0_108 = arith.constant 0 : index
    %c32_109 = arith.constant 32 : index
    %74 = vector.load %arg8[%c0_108, %c32_109] : memref<222x36xf32, #tpu.memory_space<vmem>>, vector<222x4xf32>
    tpu.vector_store %arg8[%c0_108, %c32_109], %73 {strides = array<i32>} : memref<222x36xf32, #tpu.memory_space<vmem>>, vector<222x4xf32>,
    %c0_110 = arith.constant 0 : index
    %c0_111 = arith.constant 0 : index
    %75 = vector.load %arg8[%c0_110, %c0_111] : memref<222x36xf32, #tpu.memory_space<vmem>>, vector<222x36xf32>
    %c0_112 = arith.constant 0 : index
    %c0_113 = arith.constant 0 : index
    %76 = vector.load %arg5[%c0_112, %c0_113] : memref<36x16xf32, #tpu.memory_space<vmem>>, vector<36x16xf32>
    %cst_114 = arith.constant dense<0.000000e+00> : vector<222x16xf32>
    %77 = tpu.matmul %75, %76, %cst_114 {dimension_numbers = #tpu.dot_dimension_numbers<[1], [0], [0], [1], [0, 0, 1, 1], [], []>} : vector<222x36xf32>, vector<36x16xf32>, vector<222x16xf32> -> vector<222x16xf32>
    %cst_115 = arith.constant 0.000000e+00 : f32
    %78 = vector.broadcast %cst_115 : f32 to vector<222x16xf32>
    %79 = arith.maximumf %77, %78 : vector<222x16xf32>
    %c0_116 = arith.constant 0 : index
    %c0_117 = arith.constant 0 : index
    %80 = vector.load %arg6[%c0_116, %c0_117] : memref<256x16xf32, #tpu.memory_space<vmem>>, vector<222x16xf32>
    tpu.vector_store %arg6[%c0_116, %c0_117], %79 {strides = array<i32>} : memref<256x16xf32, #tpu.memory_space<vmem>>, vector<222x16xf32>,
    %cst_118 = arith.constant 0.000000e+00 : f32
    %81 = vector.broadcast %cst_118 : f32 to vector<34x16xf32>
    %c222 = arith.constant 222 : index
    %c0_119 = arith.constant 0 : index
    %82 = vector.load %arg6[%c222, %c0_119] : memref<256x16xf32, #tpu.memory_space<vmem>>, vector<34x16xf32>
    tpu.vector_store %arg6[%c222, %c0_119], %81 {strides = array<i32>} : memref<256x16xf32, #tpu.memory_space<vmem>>, vector<34x16xf32>,
    return
  }
  func.func @transform_0(%arg0: i32) -> (i32, i32) {
    %c0_i32 = arith.constant 0 : i32
    %c0_i32_0 = arith.constant 0 : i32
    return %arg0, %c0_i32 : i32, i32
  }
  func.func @transform_1(%arg0: i32) -> (i32, i32) {
    %c0_i32 = arith.constant 0 : i32
    %c0_i32_0 = arith.constant 0 : i32
    %c0_i32_1 = arith.constant 0 : i32
    return %c0_i32, %c0_i32_0 : i32, i32
  }
  func.func @transform_2(%arg0: i32) -> (i32, i32) {
    %c0_i32 = arith.constant 0 : i32
    %c0_i32_0 = arith.constant 0 : i32
    %c0_i32_1 = arith.constant 0 : i32
    return %c0_i32, %c0_i32_0 : i32, i32
  }
  func.func @transform_3(%arg0: i32) -> (i32, i32) {
    %c0_i32 = arith.constant 0 : i32
    %c0_i32_0 = arith.constant 0 : i32
    %c0_i32_1 = arith.constant 0 : i32
    return %c0_i32, %c0_i32_0 : i32, i32
  }
  func.func @transform_4(%arg0: i32) -> (i32, i32) {
    %c0_i32 = arith.constant 0 : i32
    %c0_i32_0 = arith.constant 0 : i32
    %c0_i32_1 = arith.constant 0 : i32
    return %c0_i32, %c0_i32_0 : i32, i32
  }
  func.func @transform_5(%arg0: i32) -> (i32, i32) {
    %c0_i32 = arith.constant 0 : i32
    %c0_i32_0 = arith.constant 0 : i32
    return %arg0, %c0_i32 : i32, i32
  }
}

</mosaic_0001>

<llo_original>
// kernel: bottleneck_forward.1
$region0: #{bottleneck_forward.1}
  #allocation0 [shape = 'u32[]', space=smem, size = 0x4, offset = 0x4, fixed_abs, tag = 'smem constant byte address 0x4 - core index']
  #allocation1 [shape = 'u32[144,128]{1,0:T(1,128)}', space=vmem, size = 0x12000, scoped, tag = 'internal scratch']
  #allocation2 [shape = 'f32[280,4]{1,0:T(8,128)}', space=vmem, size = 0x23000, scoped, tag = 'scratch operand']
  #allocation3 [shape = 'f32[222,36]{1,0:T(8,128)}', space=vmem, size = 0x1c000, scoped, tag = 'scratch operand']
  %s0 = inlined_call_operand.vmem [shape: f32[512,4], index: 0, kind: input, shape index: {}]
  %s1 = inlined_call_operand.vmem [shape: f32[222,1], index: 1, kind: input, shape index: {}]
  %s2 = inlined_call_operand.vmem [shape: f32[36,4], index: 2, kind: input, shape index: {}]
  %s3 = inlined_call_operand.vmem [shape: f32[36,4], index: 3, kind: input, shape index: {}]
  %s4 = inlined_call_operand.vmem [shape: f32[36,16], index: 4, kind: input, shape index: {}]
  %s5 = inlined_call_operand.vmem [shape: f32[512,16], index: 5, kind: output, shape index: {}]
  %s6 = sld [smem:[#allocation0]]
  $region53: #{bottleneck_forward.1} parent=0
    _
  %s8 = ssub.s32 1, %s6
  %s9 = scalar_select 0, %s8, %s6
  loop: start=0, step=1, limit=4
  $region2: #{bottleneck_forward.1} parent=0 // loop_pre_header
    _
  $region3: #{bottleneck_forward.1} parent=0 // loop_header
    %s11 = sphi 0, %s15
    %p12 = scmp.ge.s32.totalorder %s11, 4
    %s21 = sphi 0, %s23
    %s24 = sphi 0, %s21
    %s25 = sphi 0, %s24
    %s41 = sphi 0, %s25
    %s45 = sphi 0, %s45
    %s47 = sphi 0, %s45
    %s48 = sphi 0, %s47
    %s62 = sphi 0, %s48
    %s66 = sphi 0, %s66
    %s68 = sphi 0, %s66
    %s69 = sphi 0, %s68
    %s83 = sphi 0, %s69
    %s87 = sphi 0, %s87
    %s89 = sphi 0, %s87
    %s90 = sphi 0, %s89
    %s104 = sphi 0, %s90
    %s108 = sphi 0, %s108
    %s110 = sphi 0, %s108
    %s111 = sphi 0, %s110
    %s125 = sphi 0, %s111
    %s131 = sphi 0, %s133
    %s134 = sphi 0, %s131
    %s135 = sphi 0, %s134
    %s151 = sphi 0, %s135
  $region4: #{bottleneck_forward.1} parent=0 // loop_header_branch
    %14 = sbr.rel (%p12) target = $region8
  $region5: #{bottleneck_forward.1} parent=0 // loop_body
    %s16 = ssub.s32 %s11, 1
    %s17 = ssub.s32 %s11, 2
    %s18 = sadd.s32 %s11, 1
    %s19 = ssub.s32 %s11, %s18
    %p20 = scmp.eq.s32.totalorder %s19, 0
    %s22 = sadd.s32 %s21, 1
    %s23 = scalar_select %p20, %s21, %s22
    %p26 = pneg %p20
    %p27 = scmp.eq.s32.totalorder %s11, 1
    %p28 = por %p26, %p27
    %p29 = scmp.ne.s32.totalorder %s21, %s24
    %p30 = scmp.eq.s32.totalorder %s11, 0
    %p31 = por %p29, %p30
    %p32 = scmp.ne.s32.totalorder %s21, %s24
    %p33 = scmp.eq.s32.totalorder %s16, 1
    %p34 = por %p32, %p33
    %p35 = scmp.ne.s32.totalorder %s24, %s25
    %p36 = scmp.eq.s32.totalorder %s16, 0
    %p37 = por %p35, %p36
    %p38 = scmp.ne.s32.totalorder %s24, %s25
    %p39 = scmp.eq.s32.totalorder %s17, 1
    %p40 = por %p38, %p39
    %p42 = scmp.ne.s32.totalorder %s25, %s41
    %p43 = scmp.eq.s32.totalorder %s17, 0
    %p44 = por %p42, %p43
    %s46 = sadd.s32 %s45, 1
    %p49 = scmp.eq.s32.totalorder %s11, 1
    %p50 = scmp.ne.s32.totalorder %s45, %s47
    %p51 = scmp.eq.s32.totalorder %s11, 0
    %p52 = por %p50, %p51
    %p53 = scmp.ne.s32.totalorder %s45, %s47
    %p54 = scmp.eq.s32.totalorder %s16, 1
    %p55 = por %p53, %p54
    %p56 = scmp.ne.s32.totalorder %s47, %s48
    %p57 = scmp.eq.s32.totalorder %s16, 0
    %p58 = por %p56, %p57
    %p59 = scmp.ne.s32.totalorder %s47, %s48
    %p60 = scmp.eq.s32.totalorder %s17, 1
    %p61 = por %p59, %p60
    %p63 = scmp.ne.s32.totalorder %s48, %s62
    %p64 = scmp.eq.s32.totalorder %s17, 0
    %p65 = por %p63, %p64
    %s67 = sadd.s32 %s66, 1
    %p70 = scmp.eq.s32.totalorder %s11, 1
    %p71 = scmp.ne.s32.totalorder %s66, %s68
    %p72 = scmp.eq.s32.totalorder %s11, 0
    %p73 = por %p71, %p72
    %p74 = scmp.ne.s32.totalorder %s66, %s68
    %p75 = scmp.eq.s32.totalorder %s16, 1
    %p76 = por %p74, %p75
    %p77 = scmp.ne.s32.totalorder %s68, %s69
    %p78 = scmp.eq.s32.totalorder %s16, 0
    %p79 = por %p77, %p78
    %p80 = scmp.ne.s32.totalorder %s68, %s69
    %p81 = scmp.eq.s32.totalorder %s17, 1
    %p82 = por %p80, %p81
    %p84 = scmp.ne.s32.totalorder %s69, %s83
    %p85 = scmp.eq.s32.totalorder %s17, 0
    %p86 = por %p84, %p85
    %s88 = sadd.s32 %s87, 1
    %p91 = scmp.eq.s32.totalorder %s11, 1
    %p92 = scmp.ne.s32.totalorder %s87, %s89
    %p93 = scmp.eq.s32.totalorder %s11, 0
    %p94 = por %p92, %p93
    %p95 = scmp.ne.s32.totalorder %s87, %s89
    %p96 = scmp.eq.s32.totalorder %s16, 1
    %p97 = por %p95, %p96
    %p98 = scmp.ne.s32.totalorder %s89, %s90
    %p99 = scmp.eq.s32.totalorder %s16, 0
    %p100 = por %p98, %p99
    %p101 = scmp.ne.s32.totalorder %s89, %s90
    %p102 = scmp.eq.s32.totalorder %s17, 1
    %p103 = por %p101, %p102
    %p105 = scmp.ne.s32.totalorder %s90, %s104
    %p106 = scmp.eq.s32.totalorder %s17, 0
    %p107 = por %p105, %p106
    %s109 = sadd.s32 %s108, 1
    %p112 = scmp.eq.s32.totalorder %s11, 1
    %p113 = scmp.ne.s32.totalorder %s108, %s110
    %p114 = scmp.eq.s32.totalorder %s11, 0
    %p115 = por %p113, %p114
    %p116 = scmp.ne.s32.totalorder %s108, %s110
    %p117 = scmp.eq.s32.totalorder %s16, 1
    %p118 = por %p116, %p117
    %p119 = scmp.ne.s32.totalorder %s110, %s111
    %p120 = scmp.eq.s32.totalorder %s16, 0
    %p121 = por %p119, %p120
    %p122 = scmp.ne.s32.totalorder %s110, %s111
    %p123 = scmp.eq.s32.totalorder %s17, 1
    %p124 = por %p122, %p123
    %p126 = scmp.ne.s32.totalorder %s111, %s125
    %p127 = scmp.eq.s32.totalorder %s17, 0
    %p128 = por %p126, %p127
    %s129 = ssub.s32 %s11, %s18
    %p130 = scmp.eq.s32.totalorder %s129, 0
    %s132 = sadd.s32 %s131, 1
    %s133 = scalar_select %p130, %s131, %s132
    %p136 = pneg %p130
    %p137 = scmp.eq.s32.totalorder %s11, 1
    %p138 = por %p136, %p137
    %p139 = scmp.ne.s32.totalorder %s131, %s134
    %p140 = scmp.eq.s32.totalorder %s11, 0
    %p141 = por %p139, %p140
    %p142 = scmp.ne.s32.totalorder %s131, %s134
    %p143 = scmp.eq.s32.totalorder %s16, 1
    %p144 = por %p142, %p143
    %p145 = scmp.ne.s32.totalorder %s134, %s135
    %p146 = scmp.eq.s32.totalorder %s16, 0
    %p147 = por %p145, %p146
    %p148 = scmp.ne.s32.totalorder %s134, %s135
    %p149 = scmp.eq.s32.totalorder %s17, 1
    %p150 = por %p148, %p149
    %p152 = scmp.ne.s32.totalorder %s135, %s151
    %p153 = scmp.eq.s32.totalorder %s17, 0
    %p154 = por %p152, %p153
    %p155 = scmp.le.s32.totalorder 1, %s11
    %p156 = scmp.lt.s32.totalorder %s11, 3
    %p157 = pnand %p155, %p156
    %p158 = pneg %p157
    // Predicated region
    $region9: #{bottleneck_forward.1} parent=5 // pred_check
      _
    $region10: #{bottleneck_forward.1} parent=5 // pred_check_branch
      %160 = sbr.rel (%p157) target = $region12
    $region11: #{bottleneck_forward.1} parent=5 // pred_region
      %s161 = ssub.s32 %s11, 1
      // Predicated region
      $region13: #{bottleneck_forward.1} parent=11 // pred_check
        %p162 = pneg %p58
      $region14: #{bottleneck_forward.1} parent=11 // pred_check_branch
        %164 = sbr.rel (%p162) target = $region16
      $region15: #{bottleneck_forward.1} parent=11 // pred_region
        _
      $region16: #{bottleneck_forward.1} parent=11 // pred_fallthru
        _
      // Predicated region
      $region17: #{bottleneck_forward.1} parent=11 // pred_check
        %p165 = pneg %p79
      $region18: #{bottleneck_forward.1} parent=11 // pred_check_branch
        %167 = sbr.rel (%p165) target = $region20
      $region19: #{bottleneck_forward.1} parent=11 // pred_region
        _
      $region20: #{bottleneck_forward.1} parent=11 // pred_fallthru
        _
      // Predicated region
      $region21: #{bottleneck_forward.1} parent=11 // pred_check
        %p168 = pneg %p100
      $region22: #{bottleneck_forward.1} parent=11 // pred_check_branch
        %170 = sbr.rel (%p168) target = $region24
      $region23: #{bottleneck_forward.1} parent=11 // pred_region
        _
      $region24: #{bottleneck_forward.1} parent=11 // pred_fallthru
        _
      // Predicated region
      $region25: #{bottleneck_forward.1} parent=11 // pred_check
        %p171 = pneg %p121
      $region26: #{bottleneck_forward.1} parent=11 // pred_check_branch
        %173 = sbr.rel (%p171) target = $region28
      $region27: #{bottleneck_forward.1} parent=11 // pred_region
        _
      $region28: #{bottleneck_forward.1} parent=11 // pred_fallthru
        _
    $region12: #{bottleneck_forward.1} parent=5 // pred_fallthru
      _
    %p174 = scmp.lt.s32.totalorder %s11, 2
    // Predicated region
    $region29: #{bottleneck_forward.1} parent=5 // pred_check
      %p175 = pneg %p174
    $region30: #{bottleneck_forward.1} parent=5 // pred_check_branch
      %177 = sbr.rel (%p175) target = $region32
    $region31: #{bottleneck_forward.1} parent=5 // pred_region
      // Predicated region
      $region33: #{bottleneck_forward.1} parent=31 // pred_check
        %p178 = pneg %p31
      $region34: #{bottleneck_forward.1} parent=31 // pred_check_branch
        %180 = sbr.rel (%p178) target = $region36
      $region35: #{bottleneck_forward.1} parent=31 // pred_region
        %s181 = smul.u32 32, %s11
        %p182 = scmp.lt.s32.totalorder %s181, 63
        %s183 = scalar_select %p182, %s181, 63
        %s184 = smul.addr %s183, 8
        %s185 = scalar_lea.vmem %s0, %s184
        %s186 = smul.u32 32, %s11
      $region36: #{bottleneck_forward.1} parent=31 // pred_fallthru
        _
    $region32: #{bottleneck_forward.1} parent=5 // pred_fallthru
      _
    %p187 = scmp.le.s32.totalorder 1, %s11
    %p188 = scmp.lt.s32.totalorder %s11, 3
    %p189 = pnand %p187, %p188
    %p190 = pneg %p189
    // Predicated region
    $region37: #{bottleneck_forward.1} parent=5 // pred_check
      _
    $region38: #{bottleneck_forward.1} parent=5 // pred_check_branch
      %192 = sbr.rel (%p189) target = $region40
    $region39: #{bottleneck_forward.1} parent=5 // pred_region
      %s193 = ssub.s32 %s11, 1
      %s194 = smul.u32 32, %s16
      %p195 = scmp.lt.s32.totalorder %s194, 63
      %s196 = scalar_select %p195, %s194, 63
      %s197 = smul.addr %s196, 8
      %s198 = scalar_lea.vmem %s0, %s197
      %p199 = pneg %p37
      %p200 = pneg %p34
      %p201 = pneg %p58
      %p202 = pneg %p55
      %p203 = pneg %p79
      %p204 = pneg %p76
      %p205 = pneg %p100
      %p206 = pneg %p97
      %p207 = pneg %p121
      %p208 = pneg %p118
      %p209 = pneg %p147
      %p210 = pneg %p144
      %s211 = smul.u32 32, %s16
      %p212 = scmp.lt.s32.totalorder %s211, 63
      %s213 = scalar_select %p212, %s211, 63
      %s214 = smul.addr %s213, 8
      %s215 = scalar_lea.vmem %s5, %s214
      %s216 = smul.u32 32, %s16
      %p217 = scmp.lt.s32.totalorder %s216, 63
      %s218 = scalar_select %p217, %s216, 63
      %s219 = smul.addr %s218, 8
      %s220 = scalar_lea.vmem %s0, %s219
      %s221 = smul.u32 32, %s16
      %s222 = smul.u32 32, %s16
      %p223 = scmp.lt.s32.totalorder %s222, 63
      %s224 = scalar_select %p223, %s222, 63
      %s225 = smul.addr %s224, 8
      %s226 = scalar_lea.vmem %s5, %s225
      %s227 = smul.u32 32, %s16
      %v228 = vld [vmem:[%s1] sm:$0xff]
      %v229 = vld [vmem:[%s1 + $0x8] sm:$0xff]
      %v230 = vld [vmem:[%s1 + $0x10] sm:$0xff]
      %v231 = vld [vmem:[%s1 + $0x18] sm:$0xff]
      %v232 = vld [vmem:[%s1 + $0x20] sm:$0xff]
      %v233 = vld [vmem:[%s1 + $0x28] sm:$0xff]
      %v234 = vld [vmem:[%s1 + $0x30] sm:$0xff]
      %v235 = vld [vmem:[%s1 + $0x38] sm:$0xff]
      %v236 = vld [vmem:[%s1 + $0x40] sm:$0xff]
      %v237 = vld [vmem:[%s1 + $0x48] sm:$0xff]
      %v238 = vld [vmem:[%s1 + $0x50] sm:$0xff]
      %v239 = vld [vmem:[%s1 + $0x58] sm:$0xff]
      %v240 = vld [vmem:[%s1 + $0x60] sm:$0xff]
      %v241 = vld [vmem:[%s1 + $0x68] sm:$0xff]
      %v242 = vld [vmem:[%s1 + $0x70] sm:$0xff]
      %v243 = vld [vmem:[%s1 + $0x78] sm:$0xff]
      %v244 = vld [vmem:[%s1 + $0x80] sm:$0xff]
      %v245 = vld [vmem:[%s1 + $0x88] sm:$0xff]
      %v246 = vld [vmem:[%s1 + $0x90] sm:$0xff]
      %v247 = vld [vmem:[%s1 + $0x98] sm:$0xff]
      %v248 = vld [vmem:[%s1 + $0xa0] sm:$0xff]
      %v249 = vld [vmem:[%s1 + $0xa8] sm:$0xff]
      %v250 = vld [vmem:[%s1 + $0xb0] sm:$0xff]
      %v251 = vld [vmem:[%s1 + $0xb8] sm:$0xff]
      %v252 = vld [vmem:[%s1 + $0xc0] sm:$0xff]
      %v253 = vld [vmem:[%s1 + $0xc8] sm:$0xff]
      %v254 = vld [vmem:[%s1 + $0xd0] sm:$0xff]
      %v255 = vld [vmem:[%s1 + $0xd8] sm:$0x3f]
      %vm256 = vcmask 31744
      %257 = vst.msk [vmem:[#allocation2] sm:$0xff] %vm256, 0.0
      %258 = vst.msk [vmem:[#allocation2 + $0x8] sm:$0xff] %vm256, 0.0
      %vm259 = vcmask 24576
      %260 = vst.msk [vmem:[#allocation2 + $0x10] sm:$0x1] %vm259, 0.0
      %261 = vst.msk [vmem:[#allocation2 + $0xef] sm:$0xff] %vm256, 0.0
      %262 = vst.msk [vmem:[#allocation2 + $0xf7] sm:$0xff] %vm256, 0.0
      %263 = vst.msk [vmem:[#allocation2 + $0xff] sm:$0xff] %vm256, 0.0
      %264 = vst.msk [vmem:[#allocation2 + $0x107] sm:$0xff] %vm256, 0.0
      %265 = vst.msk [vmem:[#allocation2 + $0x10f] sm:$0xff] %vm256, 0.0
      %266 = vst.msk [vmem:[#allocation2 + $0x117] sm:$0x1] %vm259, 0.0
      %v267 = vld [vmem:[%s220] sm:$0xff]
      %v268 = vld [vmem:[%s220 + $0x8] sm:$0xff]
      %v269 = vld [vmem:[%s220 + $0x10] sm:$0xff]
      %v270 = vld [vmem:[%s220 + $0x18] sm:$0xff]
      %v271 = vld [vmem:[%s220 + $0x20] sm:$0xff]
      %v272 = vld [vmem:[%s220 + $0x28] sm:$0xff]
      %v273 = vld [vmem:[%s220 + $0x30] sm:$0xff]
      %v274 = vld [vmem:[%s220 + $0x38] sm:$0xff]
      %v275 = vld [vmem:[%s220 + $0x40] sm:$0xff]
      %v276 = vld [vmem:[%s220 + $0x48] sm:$0xff]
      %v277 = vld [vmem:[%s220 + $0x50] sm:$0xff]
      %v278 = vld [vmem:[%s220 + $0x58] sm:$0xff]
      %v279 = vld [vmem:[%s220 + $0x60] sm:$0xff]
      %v280 = vld [vmem:[%s220 + $0x68] sm:$0xff]
      %v281 = vld [vmem:[%s220 + $0x70] sm:$0xff]
      %v282 = vld [vmem:[%s220 + $0x78] sm:$0xff]
      %v283 = vld [vmem:[%s220 + $0x80] sm:$0xff]
      %v284 = vld [vmem:[%s220 + $0x88] sm:$0xff]
      %v285 = vld [vmem:[%s220 + $0x90] sm:$0xff]
      %v286 = vld [vmem:[%s220 + $0x98] sm:$0xff]
      %v287 = vld [vmem:[%s220 + $0xa0] sm:$0xff]
      %v288 = vld [vmem:[%s220 + $0xa8] sm:$0xff]
      %v289 = vld [vmem:[%s220 + $0xb0] sm:$0xff]
      %v290 = vld [vmem:[%s220 + $0xb8] sm:$0xff]
      %v291 = vld [vmem:[%s220 + $0xc0] sm:$0xff]
      %v292 = vld [vmem:[%s220 + $0xc8] sm:$0xff]
      %v293 = vld [vmem:[%s220 + $0xd0] sm:$0xff]
      %v294 = vld [vmem:[%s220 + $0xd8] sm:$0x3f]
      %295 = vst.msk [vmem:[#allocation3] sm:$0xff] %vm256, %v267
      %296 = vst.msk [vmem:[#allocation3 + $0x8] sm:$0xff] %vm256, %v268
      %297 = vst.msk [vmem:[#allocation3 + $0x10] sm:$0xff] %vm256, %v269
      %298 = vst.msk [vmem:[#allocation3 + $0x18] sm:$0xff] %vm256, %v270
      %299 = vst.msk [vmem:[#allocation3 + $0x20] sm:$0xff] %vm256, %v271
      %300 = vst.msk [vmem:[#allocation3 + $0x28] sm:$0xff] %vm256, %v272
      %301 = vst.msk [vmem:[#allocation3 + $0x30] sm:$0xff] %vm256, %v273
      %302 = vst.msk [vmem:[#allocation3 + $0x38] sm:$0xff] %vm256, %v274
      %303 = vst.msk [vmem:[#allocation3 + $0x40] sm:$0xff] %vm256, %v275
      %304 = vst.msk [vmem:[#allocation3 + $0x48] sm:$0xff] %vm256, %v276
      %305 = vst.msk [vmem:[#allocation3 + $0x50] sm:$0xff] %vm256, %v277
      %306 = vst.msk [vmem:[#allocation3 + $0x58] sm:$0xff] %vm256, %v278
      %307 = vst.msk [vmem:[#allocation3 + $0x60] sm:$0xff] %vm256, %v279
      %308 = vst.msk [vmem:[#allocation3 + $0x68] sm:$0xff] %vm256, %v280
      %309 = vst.msk [vmem:[#allocation3 + $0x70] sm:$0xff] %vm256, %v281
      %310 = vst.msk [vmem:[#allocation3 + $0x78] sm:$0xff] %vm256, %v282
      %311 = vst.msk [vmem:[#allocation3 + $0x80] sm:$0xff] %vm256, %v283
      %312 = vst.msk [vmem:[#allocation3 + $0x88] sm:$0xff] %vm256, %v284
      %313 = vst.msk [vmem:[#allocation3 + $0x90] sm:$0xff] %vm256, %v285
      %314 = vst.msk [vmem:[#allocation3 + $0x98] sm:$0xff] %vm256, %v286
      %315 = vst.msk [vmem:[#allocation3 + $0xa0] sm:$0xff] %vm256, %v287
      %316 = vst.msk [vmem:[#allocation3 + $0xa8] sm:$0xff] %vm256, %v288
      %317 = vst.msk [vmem:[#allocation3 + $0xb0] sm:$0xff] %vm256, %v289
      %318 = vst.msk [vmem:[#allocation3 + $0xb8] sm:$0xff] %vm256, %v290
      %319 = vst.msk [vmem:[#allocation3 + $0xc0] sm:$0xff] %vm256, %v291
      %320 = vst.msk [vmem:[#allocation3 + $0xc8] sm:$0xff] %vm256, %v292
      %321 = vst.msk [vmem:[#allocation3 + $0xd0] sm:$0xff] %vm256, %v293
      %vm322 = vcmask 29696
      %323 = vst.msk [vmem:[#allocation3 + $0xd8] sm:$0x3f] %vm322, %v294
      %v324 = vld [vmem:[%s220 + $0x1] sm:$0xff]
      %v325 = vld [vmem:[%s220 + $0x9] sm:$0xff]
      %v326 = vld [vmem:[%s220 + $0x11] sm:$0xff]
      %v327 = vld [vmem:[%s220 + $0x19] sm:$0xff]
      %v328 = vld [vmem:[%s220 + $0x21] sm:$0xff]
      %v329 = vld [vmem:[%s220 + $0x29] sm:$0xff]
      %v330 = vld [vmem:[%s220 + $0x31] sm:$0xff]
      %v331 = vld [vmem:[%s220 + $0x39] sm:$0xff]
      %v332 = vld [vmem:[%s220 + $0x41] sm:$0xff]
      %v333 = vld [vmem:[%s220 + $0x49] sm:$0xff]
      %v334 = vld [vmem:[%s220 + $0x51] sm:$0xff]
      %v335 = vld [vmem:[%s220 + $0x59] sm:$0xff]
      %v336 = vld [vmem:[%s220 + $0x61] sm:$0xff]
      %v337 = vld [vmem:[%s220 + $0x69] sm:$0xff]
      %v338 = vld [vmem:[%s220 + $0x71] sm:$0xff]
      %v339 = vld [vmem:[%s220 + $0x79] sm:$0xff]
      %v340 = vld [vmem:[%s220 + $0x81] sm:$0xff]
      %v341 = vld [vmem:[%s220 + $0x89] sm:$0xff]
      %v342 = vld [vmem:[%s220 + $0x91] sm:$0xff]
      %v343 = vld [vmem:[%s220 + $0x99] sm:$0xff]
      %v344 = vld [vmem:[%s220 + $0xa1] sm:$0xff]
      %v345 = vld [vmem:[%s220 + $0xa9] sm:$0xff]
      %v346 = vld [vmem:[%s220 + $0xb1] sm:$0xff]
      %v347 = vld [vmem:[%s220 + $0xb9] sm:$0xff]
      %v348 = vld [vmem:[%s220 + $0xc1] sm:$0xff]
      %v349 = vld [vmem:[%s220 + $0xc9] sm:$0xff]
      %v350 = vld [vmem:[%s220 + $0xd1] sm:$0xff]
      %v351 = vld [vmem:[%s220 + $0xd9] sm:$0x3f]
      %380 = vrot.lane.b32.xlu0 %v324, 4
      %v381 = vpop.permute.xlu0 %380
      %382 = vrot.lane.b32.xlu0 %v325, 4
      %v383 = vpop.permute.xlu0 %382
      %384 = vrot.lane.b32.xlu0 %v326, 4
      %v385 = vpop.permute.xlu0 %384
      %386 = vrot.lane.b32.xlu0 %v327, 4
      %v387 = vpop.permute.xlu0 %386
      %388 = vrot.lane.b32.xlu0 %v328, 4
      %v389 = vpop.permute.xlu0 %388
      %390 = vrot.lane.b32.xlu0 %v329, 4
      %v391 = vpop.permute.xlu0 %390
      %392 = vrot.lane.b32.xlu0 %v330, 4
      %v393 = vpop.permute.xlu0 %392
      %394 = vrot.lane.b32.xlu0 %v331, 4
      %v395 = vpop.permute.xlu0 %394
      %396 = vrot.lane.b32.xlu0 %v332, 4
      %v397 = vpop.permute.xlu0 %396
      %398 = vrot.lane.b32.xlu0 %v333, 4
      %v399 = vpop.permute.xlu0 %398
      %400 = vrot.lane.b32.xlu0 %v334, 4
      %v401 = vpop.permute.xlu0 %400
      %402 = vrot.lane.b32.xlu0 %v335, 4
      %v403 = vpop.permute.xlu0 %402
      %404 = vrot.lane.b32.xlu0 %v336, 4
      %v405 = vpop.permute.xlu0 %404
      %406 = vrot.lane.b32.xlu0 %v337, 4
      %v407 = vpop.permute.xlu0 %406
      %408 = vrot.lane.b32.xlu0 %v338, 4
      %v409 = vpop.permute.xlu0 %408
      %410 = vrot.lane.b32.xlu0 %v339, 4
      %v411 = vpop.permute.xlu0 %410
      %412 = vrot.lane.b32.xlu0 %v340, 4
      %v413 = vpop.permute.xlu0 %412
      %414 = vrot.lane.b32.xlu0 %v341, 4
      %v415 = vpop.permute.xlu0 %414
      %416 = vrot.lane.b32.xlu0 %v342, 4
      %v417 = vpop.permute.xlu0 %416
      %418 = vrot.lane.b32.xlu0 %v343, 4
      %v419 = vpop.permute.xlu0 %418
      %420 = vrot.lane.b32.xlu0 %v344, 4
      %v421 = vpop.permute.xlu0 %420
      %422 = vrot.lane.b32.xlu0 %v345, 4
      %v423 = vpop.permute.xlu0 %422
      %424 = vrot.lane.b32.xlu0 %v346, 4
      %v425 = vpop.permute.xlu0 %424
      %426 = vrot.lane.b32.xlu0 %v347, 4
      %v427 = vpop.permute.xlu0 %426
      %428 = vrot.lane.b32.xlu0 %v348, 4
      %v429 = vpop.permute.xlu0 %428
      %430 = vrot.lane.b32.xlu0 %v349, 4
      %v431 = vpop.permute.xlu0 %430
      %432 = vrot.lane.b32.xlu0 %v350, 4
      %v433 = vpop.permute.xlu0 %432
      %434 = vrot.lane.b32.xlu0 %v351, 4
      %v435 = vpop.permute.xlu0 %434
      %vm464 = vcmask 64544
      %465 = vst.msk [vmem:[#allocation3] sm:$0xff] %vm464, %v381
      %466 = vst.msk [vmem:[#allocation3 + $0x8] sm:$0xff] %vm464, %v383
      %467 = vst.msk [vmem:[#allocation3 + $0x10] sm:$0xff] %vm464, %v385
      %468 = vst.msk [vmem:[#allocation3 + $0x18] sm:$0xff] %vm464, %v387
      %469 = vst.msk [vmem:[#allocation3 + $0x20] sm:$0xff] %vm464, %v389
      %470 = vst.msk [vmem:[#allocation3 + $0x28] sm:$0xff] %vm464, %v391
      %471 = vst.msk [vmem:[#allocation3 + $0x30] sm:$0xff] %vm464, %v393
      %472 = vst.msk [vmem:[#allocation3 + $0x38] sm:$0xff] %vm464, %v395
      %473 = vst.msk [vmem:[#allocation3 + $0x40] sm:$0xff] %vm464, %v397
      %474 = vst.msk [vmem:[#allocation3 + $0x48] sm:$0xff] %vm464, %v399
      %475 = vst.msk [vmem:[#allocation3 + $0x50] sm:$0xff] %vm464, %v401
      %476 = vst.msk [vmem:[#allocation3 + $0x58] sm:$0xff] %vm464, %v403
      %477 = vst.msk [vmem:[#allocation3 + $0x60] sm:$0xff] %vm464, %v405
      %478 = vst.msk [vmem:[#allocation3 + $0x68] sm:$0xff] %vm464, %v407
      %479 = vst.msk [vmem:[#allocation3 + $0x70] sm:$0xff] %vm464, %v409
      %480 = vst.msk [vmem:[#allocation3 + $0x78] sm:$0xff] %vm464, %v411
      %481 = vst.msk [vmem:[#allocation3 + $0x80] sm:$0xff] %vm464, %v413
      %482 = vst.msk [vmem:[#allocation3 + $0x88] sm:$0xff] %vm464, %v415
      %483 = vst.msk [vmem:[#allocation3 + $0x90] sm:$0xff] %vm464, %v417
      %484 = vst.msk [vmem:[#allocation3 + $0x98] sm:$0xff] %vm464, %v419
      %485 = vst.msk [vmem:[#allocation3 + $0xa0] sm:$0xff] %vm464, %v421
      %486 = vst.msk [vmem:[#allocation3 + $0xa8] sm:$0xff] %vm464, %v423
      %487 = vst.msk [vmem:[#allocation3 + $0xb0] sm:$0xff] %vm464, %v425
      %488 = vst.msk [vmem:[#allocation3 + $0xb8] sm:$0xff] %vm464, %v427
      %489 = vst.msk [vmem:[#allocation3 + $0xc0] sm:$0xff] %vm464, %v429
      %490 = vst.msk [vmem:[#allocation3 + $0xc8] sm:$0xff] %vm464, %v431
      %491 = vst.msk [vmem:[#allocation3 + $0xd0] sm:$0xff] %vm464, %v433
      %vm492 = vcmask 62496
      %493 = vst.msk [vmem:[#allocation3 + $0xd8] sm:$0x3f] %vm492, %v435
      %v494 = vld [vmem:[%s220 + $0x2] sm:$0xff]
      %v495 = vld [vmem:[%s220 + $0xa] sm:$0xff]
      %v496 = vld [vmem:[%s220 + $0x12] sm:$0xff]
      %v497 = vld [vmem:[%s220 + $0x1a] sm:$0xff]
      %v498 = vld [vmem:[%s220 + $0x22] sm:$0xff]
      %v499 = vld [vmem:[%s220 + $0x2a] sm:$0xff]
      %v500 = vld [vmem:[%s220 + $0x32] sm:$0xff]
      %v501 = vld [vmem:[%s220 + $0x3a] sm:$0xff]
      %v502 = vld [vmem:[%s220 + $0x42] sm:$0xff]
      %v503 = vld [vmem:[%s220 + $0x4a] sm:$0xff]
      %v504 = vld [vmem:[%s220 + $0x52] sm:$0xff]
      %v505 = vld [vmem:[%s220 + $0x5a] sm:$0xff]
      %v506 = vld [vmem:[%s220 + $0x62] sm:$0xff]
      %v507 = vld [vmem:[%s220 + $0x6a] sm:$0xff]
      %v508 = vld [vmem:[%s220 + $0x72] sm:$0xff]
      %v509 = vld [vmem:[%s220 + $0x7a] sm:$0xff]
      %v510 = vld [vmem:[%s220 + $0x82] sm:$0xff]
      %v511 = vld [vmem:[%s220 + $0x8a] sm:$0xff]
      %v512 = vld [vmem:[%s220 + $0x92] sm:$0xff]
      %v513 = vld [vmem:[%s220 + $0x9a] sm:$0xff]
      %v514 = vld [vmem:[%s220 + $0xa2] sm:$0xff]
      %v515 = vld [vmem:[%s220 + $0xaa] sm:$0xff]
      %v516 = vld [vmem:[%s220 + $0xb2] sm:$0xff]
      %v517 = vld [vmem:[%s220 + $0xba] sm:$0xff]
      %v518 = vld [vmem:[%s220 + $0xc2] sm:$0xff]
      %v519 = vld [vmem:[%s220 + $0xca] sm:$0xff]
      %v520 = vld [vmem:[%s220 + $0xd2] sm:$0xff]
      %v521 = vld [vmem:[%s220 + $0xda] sm:$0x3f]
      %550 = vrot.lane.b32.xlu0 %v494, 8
      %v551 = vpop.permute.xlu0 %550
      %552 = vrot.lane.b32.xlu0 %v495, 8
      %v553 = vpop.permute.xlu0 %552
      %554 = vrot.lane.b32.xlu0 %v496, 8
      %v555 = vpop.permute.xlu0 %554
      %556 = vrot.lane.b32.xlu0 %v497, 8
      %v557 = vpop.permute.xlu0 %556
      %558 = vrot.lane.b32.xlu0 %v498, 8
      %v559 = vpop.permute.xlu0 %558
      %560 = vrot.lane.b32.xlu0 %v499, 8
      %v561 = vpop.permute.xlu0 %560
      %562 = vrot.lane.b32.xlu0 %v500, 8
      %v563 = vpop.permute.xlu0 %562
      %564 = vrot.lane.b32.xlu0 %v501, 8
      %v565 = vpop.permute.xlu0 %564
      %566 = vrot.lane.b32.xlu0 %v502, 8
      %v567 = vpop.permute.xlu0 %566
      %568 = vrot.lane.b32.xlu0 %v503, 8
      %v569 = vpop.permute.xlu0 %568
      %570 = vrot.lane.b32.xlu0 %v504, 8
      %v571 = vpop.permute.xlu0 %570
      %572 = vrot.lane.b32.xlu0 %v505, 8
      %v573 = vpop.permute.xlu0 %572
      %574 = vrot.lane.b32.xlu0 %v506, 8
      %v575 = vpop.permute.xlu0 %574
      %576 = vrot.lane.b32.xlu0 %v507, 8
      %v577 = vpop.permute.xlu0 %576
      %578 = vrot.lane.b32.xlu0 %v508, 8
      %v579 = vpop.permute.xlu0 %578
      %580 = vrot.lane.b32.xlu0 %v509, 8
      %v581 = vpop.permute.xlu0 %580
      %582 = vrot.lane.b32.xlu0 %v510, 8
      %v583 = vpop.permute.xlu0 %582
      %584 = vrot.lane.b32.xlu0 %v511, 8
      %v585 = vpop.permute.xlu0 %584
      %586 = vrot.lane.b32.xlu0 %v512, 8
      %v587 = vpop.permute.xlu0 %586
      %588 = vrot.lane.b32.xlu0 %v513, 8
      %v589 = vpop.permute.xlu0 %588
      %590 = vrot.lane.b32.xlu0 %v514, 8
      %v591 = vpop.permute.xlu0 %590
      %592 = vrot.lane.b32.xlu0 %v515, 8
      %v593 = vpop.permute.xlu0 %592
      %594 = vrot.lane.b32.xlu0 %v516, 8
      %v595 = vpop.permute.xlu0 %594
      %596 = vrot.lane.b32.xlu0 %v517, 8
      %v597 = vpop.permute.xlu0 %596
      %598 = vrot.lane.b32.xlu0 %v518, 8
      %v599 = vpop.permute.xlu0 %598
      %600 = vrot.lane.b32.xlu0 %v519, 8
      %v601 = vpop.permute.xlu0 %600
      %602 = vrot.lane.b32.xlu0 %v520, 8
      %v603 = vpop.permute.xlu0 %602
      %604 = vrot.lane.b32.xlu0 %v521, 8
      %v605 = vpop.permute.xlu0 %604
      %vm634 = vcmask 97344
      %635 = vst.msk [vmem:[#allocation3] sm:$0xff] %vm634, %v551
      %636 = vst.msk [vmem:[#allocation3 + $0x8] sm:$0xff] %vm634, %v553
      %637 = vst.msk [vmem:[#allocation3 + $0x10] sm:$0xff] %vm634, %v555
      %638 = vst.msk [vmem:[#allocation3 + $0x18] sm:$0xff] %vm634, %v557
      %639 = vst.msk [vmem:[#allocation3 + $0x20] sm:$0xff] %vm634, %v559
      %640 = vst.msk [vmem:[#allocation3 + $0x28] sm:$0xff] %vm634, %v561
      %641 = vst.msk [vmem:[#allocation3 + $0x30] sm:$0xff] %vm634, %v563
      %642 = vst.msk [vmem:[#allocation3 + $0x38] sm:$0xff] %vm634, %v565
      %643 = vst.msk [vmem:[#allocation3 + $0x40] sm:$0xff] %vm634, %v567
      %644 = vst.msk [vmem:[#allocation3 + $0x48] sm:$0xff] %vm634, %v569
      %645 = vst.msk [vmem:[#allocation3 + $0x50] sm:$0xff] %vm634, %v571
      %646 = vst.msk [vmem:[#allocation3 + $0x58] sm:$0xff] %vm634, %v573
      %647 = vst.msk [vmem:[#allocation3 + $0x60] sm:$0xff] %vm634, %v575
      %648 = vst.msk [vmem:[#allocation3 + $0x68] sm:$0xff] %vm634, %v577
      %649 = vst.msk [vmem:[#allocation3 + $0x70] sm:$0xff] %vm634, %v579
      %650 = vst.msk [vmem:[#allocation3 + $0x78] sm:$0xff] %vm634, %v581
      %651 = vst.msk [vmem:[#allocation3 + $0x80] sm:$0xff] %vm634, %v583
      %652 = vst.msk [vmem:[#allocation3 + $0x88] sm:$0xff] %vm634, %v585
      %653 = vst.msk [vmem:[#allocation3 + $0x90] sm:$0xff] %vm634, %v587
      %654 = vst.msk [vmem:[#allocation3 + $0x98] sm:$0xff] %vm634, %v589
      %655 = vst.msk [vmem:[#allocation3 + $0xa0] sm:$0xff] %vm634, %v591
      %656 = vst.msk [vmem:[#allocation3 + $0xa8] sm:$0xff] %vm634, %v593
      %657 = vst.msk [vmem:[#allocation3 + $0xb0] sm:$0xff] %vm634, %v595
      %658 = vst.msk [vmem:[#allocation3 + $0xb8] sm:$0xff] %vm634, %v597
      %659 = vst.msk [vmem:[#allocation3 + $0xc0] sm:$0xff] %vm634, %v599
      %660 = vst.msk [vmem:[#allocation3 + $0xc8] sm:$0xff] %vm634, %v601
      %661 = vst.msk [vmem:[#allocation3 + $0xd0] sm:$0xff] %vm634, %v603
      %vm662 = vcmask 95296
      %663 = vst.msk [vmem:[#allocation3 + $0xd8] sm:$0x3f] %vm662, %v605
      %v664 = vld [vmem:[%s220 + $0x10] sm:$0xff]
      %v665 = vld [vmem:[%s220 + $0x18] sm:$0xff]
      %v666 = vld [vmem:[%s220 + $0x20] sm:$0xff]
      %v667 = vld [vmem:[%s220 + $0x28] sm:$0xff]
      %v668 = vld [vmem:[%s220 + $0x30] sm:$0xff]
      %v669 = vld [vmem:[%s220 + $0x38] sm:$0xff]
      %v670 = vld [vmem:[%s220 + $0x40] sm:$0xff]
      %v671 = vld [vmem:[%s220 + $0x48] sm:$0xff]
      %v672 = vld [vmem:[%s220 + $0x50] sm:$0xff]
      %v673 = vld [vmem:[%s220 + $0x58] sm:$0xff]
      %v674 = vld [vmem:[%s220 + $0x60] sm:$0xff]
      %v675 = vld [vmem:[%s220 + $0x68] sm:$0xff]
      %v676 = vld [vmem:[%s220 + $0x70] sm:$0xff]
      %v677 = vld [vmem:[%s220 + $0x78] sm:$0xff]
      %v678 = vld [vmem:[%s220 + $0x80] sm:$0xff]
      %v679 = vld [vmem:[%s220 + $0x88] sm:$0xff]
      %v680 = vld [vmem:[%s220 + $0x90] sm:$0xff]
      %v681 = vld [vmem:[%s220 + $0x98] sm:$0xff]
      %v682 = vld [vmem:[%s220 + $0xa0] sm:$0xff]
      %v683 = vld [vmem:[%s220 + $0xa8] sm:$0xff]
      %v684 = vld [vmem:[%s220 + $0xb0] sm:$0xff]
      %v685 = vld [vmem:[%s220 + $0xb8] sm:$0xff]
      %v686 = vld [vmem:[%s220 + $0xc0] sm:$0xff]
      %v687 = vld [vmem:[%s220 + $0xc8] sm:$0xff]
      %v688 = vld [vmem:[%s220 + $0xd0] sm:$0xff]
      %v689 = vld [vmem:[%s220 + $0xd8] sm:$0xff]
      %v690 = vld [vmem:[%s220 + $0xe0] sm:$0xff]
      %v691 = vld [vmem:[%s220 + $0xe8] sm:$0x3f]
      %720 = vrot.lane.b32.xlu0 %v664, 12
      %v721 = vpop.permute.xlu0 %720
      %722 = vrot.lane.b32.xlu0 %v665, 12
      %v723 = vpop.permute.xlu0 %722
      %724 = vrot.lane.b32.xlu0 %v666, 12
      %v725 = vpop.permute.xlu0 %724
      %726 = vrot.lane.b32.xlu0 %v667, 12
      %v727 = vpop.permute.xlu0 %726
      %728 = vrot.lane.b32.xlu0 %v668, 12
      %v729 = vpop.permute.xlu0 %728
      %730 = vrot.lane.b32.xlu0 %v669, 12
      %v731 = vpop.permute.xlu0 %730
      %732 = vrot.lane.b32.xlu0 %v670, 12
      %v733 = vpop.permute.xlu0 %732
      %734 = vrot.lane.b32.xlu0 %v671, 12
      %v735 = vpop.permute.xlu0 %734
      %736 = vrot.lane.b32.xlu0 %v672, 12
      %v737 = vpop.permute.xlu0 %736
      %738 = vrot.lane.b32.xlu0 %v673, 12
      %v739 = vpop.permute.xlu0 %738
      %740 = vrot.lane.b32.xlu0 %v674, 12
      %v741 = vpop.permute.xlu0 %740
      %742 = vrot.lane.b32.xlu0 %v675, 12
      %v743 = vpop.permute.xlu0 %742
      %744 = vrot.lane.b32.xlu0 %v676, 12
      %v745 = vpop.permute.xlu0 %744
      %746 = vrot.lane.b32.xlu0 %v677, 12
      %v747 = vpop.permute.xlu0 %746
      %748 = vrot.lane.b32.xlu0 %v678, 12
      %v749 = vpop.permute.xlu0 %748
      %750 = vrot.lane.b32.xlu0 %v679, 12
      %v751 = vpop.permute.xlu0 %750
      %752 = vrot.lane.b32.xlu0 %v680, 12
      %v753 = vpop.permute.xlu0 %752
      %754 = vrot.lane.b32.xlu0 %v681, 12
      %v755 = vpop.permute.xlu0 %754
      %756 = vrot.lane.b32.xlu0 %v682, 12
      %v757 = vpop.permute.xlu0 %756
      %758 = vrot.lane.b32.xlu0 %v683, 12
      %v759 = vpop.permute.xlu0 %758
      %760 = vrot.lane.b32.xlu0 %v684, 12
      %v761 = vpop.permute.xlu0 %760
      %762 = vrot.lane.b32.xlu0 %v685, 12
      %v763 = vpop.permute.xlu0 %762
      %764 = vrot.lane.b32.xlu0 %v686, 12
      %v765 = vpop.permute.xlu0 %764
      %766 = vrot.lane.b32.xlu0 %v687, 12
      %v767 = vpop.permute.xlu0 %766
      %768 = vrot.lane.b32.xlu0 %v688, 12
      %v769 = vpop.permute.xlu0 %768
      %770 = vrot.lane.b32.xlu0 %v689, 12
      %v771 = vpop.permute.xlu0 %770
      %772 = vrot.lane.b32.xlu0 %v690, 12
      %v773 = vpop.permute.xlu0 %772
      %774 = vrot.lane.b32.xlu0 %v691, 12
      %v775 = vpop.permute.xlu0 %774
      %vm804 = vcmask 130144
      %805 = vst.msk [vmem:[#allocation3] sm:$0xff] %vm804, %v721
      %806 = vst.msk [vmem:[#allocation3 + $0x8] sm:$0xff] %vm804, %v723
      %807 = vst.msk [vmem:[#allocation3 + $0x10] sm:$0xff] %vm804, %v725
      %808 = vst.msk [vmem:[#allocation3 + $0x18] sm:$0xff] %vm804, %v727
      %809 = vst.msk [vmem:[#allocation3 + $0x20] sm:$0xff] %vm804, %v729
      %810 = vst.msk [vmem:[#allocation3 + $0x28] sm:$0xff] %vm804, %v731
      %811 = vst.msk [vmem:[#allocation3 + $0x30] sm:$0xff] %vm804, %v733
      %812 = vst.msk [vmem:[#allocation3 + $0x38] sm:$0xff] %vm804, %v735
      %813 = vst.msk [vmem:[#allocation3 + $0x40] sm:$0xff] %vm804, %v737
      %814 = vst.msk [vmem:[#allocation3 + $0x48] sm:$0xff] %vm804, %v739
      %815 = vst.msk [vmem:[#allocation3 + $0x50] sm:$0xff] %vm804, %v741
      %816 = vst.msk [vmem:[#allocation3 + $0x58] sm:$0xff] %vm804, %v743
      %817 = vst.msk [vmem:[#allocation3 + $0x60] sm:$0xff] %vm804, %v745
      %818 = vst.msk [vmem:[#allocation3 + $0x68] sm:$0xff] %vm804, %v747
      %819 = vst.msk [vmem:[#allocation3 + $0x70] sm:$0xff] %vm804, %v749
      %820 = vst.msk [vmem:[#allocation3 + $0x78] sm:$0xff] %vm804, %v751
      %821 = vst.msk [vmem:[#allocation3 + $0x80] sm:$0xff] %vm804, %v753
      %822 = vst.msk [vmem:[#allocation3 + $0x88] sm:$0xff] %vm804, %v755
      %823 = vst.msk [vmem:[#allocation3 + $0x90] sm:$0xff] %vm804, %v757
      %824 = vst.msk [vmem:[#allocation3 + $0x98] sm:$0xff] %vm804, %v759
      %825 = vst.msk [vmem:[#allocation3 + $0xa0] sm:$0xff] %vm804, %v761
      %826 = vst.msk [vmem:[#allocation3 + $0xa8] sm:$0xff] %vm804, %v763
      %827 = vst.msk [vmem:[#allocation3 + $0xb0] sm:$0xff] %vm804, %v765
      %828 = vst.msk [vmem:[#allocation3 + $0xb8] sm:$0xff] %vm804, %v767
      %829 = vst.msk [vmem:[#allocation3 + $0xc0] sm:$0xff] %vm804, %v769
      %830 = vst.msk [vmem:[#allocation3 + $0xc8] sm:$0xff] %vm804, %v771
      %831 = vst.msk [vmem:[#allocation3 + $0xd0] sm:$0xff] %vm804, %v773
      %vm832 = vcmask 128096
      %833 = vst.msk [vmem:[#allocation3 + $0xd8] sm:$0x3f] %vm832, %v775
      %v834 = vld [vmem:[%s220 + $0x11] sm:$0xff]
      %v835 = vld [vmem:[%s220 + $0x19] sm:$0xff]
      %v836 = vld [vmem:[%s220 + $0x21] sm:$0xff]
      %v837 = vld [vmem:[%s220 + $0x29] sm:$0xff]
      %v838 = vld [vmem:[%s220 + $0x31] sm:$0xff]
      %v839 = vld [vmem:[%s220 + $0x39] sm:$0xff]
      %v840 = vld [vmem:[%s220 + $0x41] sm:$0xff]
      %v841 = vld [vmem:[%s220 + $0x49] sm:$0xff]
      %v842 = vld [vmem:[%s220 + $0x51] sm:$0xff]
      %v843 = vld [vmem:[%s220 + $0x59] sm:$0xff]
      %v844 = vld [vmem:[%s220 + $0x61] sm:$0xff]
      %v845 = vld [vmem:[%s220 + $0x69] sm:$0xff]
      %v846 = vld [vmem:[%s220 + $0x71] sm:$0xff]
      %v847 = vld [vmem:[%s220 + $0x79] sm:$0xff]
      %v848 = vld [vmem:[%s220 + $0x81] sm:$0xff]
      %v849 = vld [vmem:[%s220 + $0x89] sm:$0xff]
      %v850 = vld [vmem:[%s220 + $0x91] sm:$0xff]
      %v851 = vld [vmem:[%s220 + $0x99] sm:$0xff]
      %v852 = vld [vmem:[%s220 + $0xa1] sm:$0xff]
      %v853 = vld [vmem:[%s220 + $0xa9] sm:$0xff]
      %v854 = vld [vmem:[%s220 + $0xb1] sm:$0xff]
      %v855 = vld [vmem:[%s220 + $0xb9] sm:$0xff]
      %v856 = vld [vmem:[%s220 + $0xc1] sm:$0xff]
      %v857 = vld [vmem:[%s220 + $0xc9] sm:$0xff]
      %v858 = vld [vmem:[%s220 + $0xd1] sm:$0xff]
      %v859 = vld [vmem:[%s220 + $0xd9] sm:$0xff]
      %v860 = vld [vmem:[%s220 + $0xe1] sm:$0xff]
      %v861 = vld [vmem:[%s220 + $0xe9] sm:$0x3f]
      %890 = vrot.lane.b32.xlu0 %v834, 16
      %v891 = vpop.permute.xlu0 %890
      %892 = vrot.lane.b32.xlu0 %v835, 16
      %v893 = vpop.permute.xlu0 %892
      %894 = vrot.lane.b32.xlu0 %v836, 16
      %v895 = vpop.permute.xlu0 %894
      %896 = vrot.lane.b32.xlu0 %v837, 16
      %v897 = vpop.permute.xlu0 %896
      %898 = vrot.lane.b32.xlu0 %v838, 16
      %v899 = vpop.permute.xlu0 %898
      %900 = vrot.lane.b32.xlu0 %v839, 16
      %v901 = vpop.permute.xlu0 %900
      %902 = vrot.lane.b32.xlu0 %v840, 16
      %v903 = vpop.permute.xlu0 %902
      %904 = vrot.lane.b32.xlu0 %v841, 16
      %v905 = vpop.permute.xlu0 %904
      %906 = vrot.lane.b32.xlu0 %v842, 16
      %v907 = vpop.permute.xlu0 %906
      %908 = vrot.lane.b32.xlu0 %v843, 16
      %v909 = vpop.permute.xlu0 %908
      %910 = vrot.lane.b32.xlu0 %v844, 16
      %v911 = vpop.permute.xlu0 %910
      %912 = vrot.lane.b32.xlu0 %v845, 16
      %v913 = vpop.permute.xlu0 %912
      %914 = vrot.lane.b32.xlu0 %v846, 16
      %v915 = vpop.permute.xlu0 %914
      %916 = vrot.lane.b32.xlu0 %v847, 16
      %v917 = vpop.permute.xlu0 %916
      %918 = vrot.lane.b32.xlu0 %v848, 16
      %v919 = vpop.permute.xlu0 %918
      %920 = vrot.lane.b32.xlu0 %v849, 16
      %v921 = vpop.permute.xlu0 %920
      %922 = vrot.lane.b32.xlu0 %v850, 16
      %v923 = vpop.permute.xlu0 %922
      %924 = vrot.lane.b32.xlu0 %v851, 16
      %v925 = vpop.permute.xlu0 %924
      %926 = vrot.lane.b32.xlu0 %v852, 16
      %v927 = vpop.permute.xlu0 %926
      %928 = vrot.lane.b32.xlu0 %v853, 16
      %v929 = vpop.permute.xlu0 %928
      %930 = vrot.lane.b32.xlu0 %v854, 16
      %v931 = vpop.permute.xlu0 %930
      %932 = vrot.lane.b32.xlu0 %v855, 16
      %v933 = vpop.permute.xlu0 %932
      %934 = vrot.lane.b32.xlu0 %v856, 16
      %v935 = vpop.permute.xlu0 %934
      %936 = vrot.lane.b32.xlu0 %v857, 16
      %v937 = vpop.permute.xlu0 %936
      %938 = vrot.lane.b32.xlu0 %v858, 16
      %v939 = vpop.permute.xlu0 %938
      %940 = vrot.lane.b32.xlu0 %v859, 16
      %v941 = vpop.permute.xlu0 %940
      %942 = vrot.lane.b32.xlu0 %v860, 16
      %v943 = vpop.permute.xlu0 %942
      %944 = vrot.lane.b32.xlu0 %v861, 16
      %v945 = vpop.permute.xlu0 %944
      %vm974 = vcmask 162944
      %975 = vst.msk [vmem:[#allocation3] sm:$0xff] %vm974, %v891
      %976 = vst.msk [vmem:[#allocation3 + $0x8] sm:$0xff] %vm974, %v893
      %977 = vst.msk [vmem:[#allocation3 + $0x10] sm:$0xff] %vm974, %v895
      %978 = vst.msk [vmem:[#allocation3 + $0x18] sm:$0xff] %vm974, %v897
      %979 = vst.msk [vmem:[#allocation3 + $0x20] sm:$0xff] %vm974, %v899
      %980 = vst.msk [vmem:[#allocation3 + $0x28] sm:$0xff] %vm974, %v901
      %981 = vst.msk [vmem:[#allocation3 + $0x30] sm:$0xff] %vm974, %v903
      %982 = vst.msk [vmem:[#allocation3 + $0x38] sm:$0xff] %vm974, %v905
      %983 = vst.msk [vmem:[#allocation3 + $0x40] sm:$0xff] %vm974, %v907
      %984 = vst.msk [vmem:[#allocation3 + $0x48] sm:$0xff] %vm974, %v909
      %985 = vst.msk [vmem:[#allocation3 + $0x50] sm:$0xff] %vm974, %v911
      %986 = vst.msk [vmem:[#allocation3 + $0x58] sm:$0xff] %vm974, %v913
      %987 = vst.msk [vmem:[#allocation3 + $0x60] sm:$0xff] %vm974, %v915
      %988 = vst.msk [vmem:[#allocation3 + $0x68] sm:$0xff] %vm974, %v917
      %989 = vst.msk [vmem:[#allocation3 + $0x70] sm:$0xff] %vm974, %v919
      %990 = vst.msk [vmem:[#allocation3 + $0x78] sm:$0xff] %vm974, %v921
      %991 = vst.msk [vmem:[#allocation3 + $0x80] sm:$0xff] %vm974, %v923
      %992 = vst.msk [vmem:[#allocation3 + $0x88] sm:$0xff] %vm974, %v925
      %993 = vst.msk [vmem:[#allocation3 + $0x90] sm:$0xff] %vm974, %v927
      %994 = vst.msk [vmem:[#allocation3 + $0x98] sm:$0xff] %vm974, %v929
      %995 = vst.msk [vmem:[#allocation3 + $0xa0] sm:$0xff] %vm974, %v931
      %996 = vst.msk [vmem:[#allocation3 + $0xa8] sm:$0xff] %vm974, %v933
      %997 = vst.msk [vmem:[#allocation3 + $0xb0] sm:$0xff] %vm974, %v935
      %998 = vst.msk [vmem:[#allocation3 + $0xb8] sm:$0xff] %vm974, %v937
      %999 = vst.msk [vmem:[#allocation3 + $0xc0] sm:$0xff] %vm974, %v939
      %1000 = vst.msk [vmem:[#allocation3 + $0xc8] sm:$0xff] %vm974, %v941
      %1001 = vst.msk [vmem:[#allocation3 + $0xd0] sm:$0xff] %vm974, %v943
      %vm1002 = vcmask 160896
      %1003 = vst.msk [vmem:[#allocation3 + $0xd8] sm:$0x3f] %vm1002, %v945
      %v1004 = vld [vmem:[%s220 + $0x12] sm:$0xff]
      %v1005 = vld [vmem:[%s220 + $0x1a] sm:$0xff]
      %v1006 = vld [vmem:[%s220 + $0x22] sm:$0xff]
      %v1007 = vld [vmem:[%s220 + $0x2a] sm:$0xff]
      %v1008 = vld [vmem:[%s220 + $0x32] sm:$0xff]
      %v1009 = vld [vmem:[%s220 + $0x3a] sm:$0xff]
      %v1010 = vld [vmem:[%s220 + $0x42] sm:$0xff]
      %v1011 = vld [vmem:[%s220 + $0x4a] sm:$0xff]
      %v1012 = vld [vmem:[%s220 + $0x52] sm:$0xff]
      %v1013 = vld [vmem:[%s220 + $0x5a] sm:$0xff]
      %v1014 = vld [vmem:[%s220 + $0x62] sm:$0xff]
      %v1015 = vld [vmem:[%s220 + $0x6a] sm:$0xff]
      %v1016 = vld [vmem:[%s220 + $0x72] sm:$0xff]
      %v1017 = vld [vmem:[%s220 + $0x7a] sm:$0xff]
      %v1018 = vld [vmem:[%s220 + $0x82] sm:$0xff]
      %v1019 = vld [vmem:[%s220 + $0x8a] sm:$0xff]
      %v1020 = vld [vmem:[%s220 + $0x92] sm:$0xff]
      %v1021 = vld [vmem:[%s220 + $0x9a] sm:$0xff]
      %v1022 = vld [vmem:[%s220 + $0xa2] sm:$0xff]
      %v1023 = vld [vmem:[%s220 + $0xaa] sm:$0xff]
      %v1024 = vld [vmem:[%s220 + $0xb2] sm:$0xff]
      %v1025 = vld [vmem:[%s220 + $0xba] sm:$0xff]
      %v1026 = vld [vmem:[%s220 + $0xc2] sm:$0xff]
      %v1027 = vld [vmem:[%s220 + $0xca] sm:$0xff]
      %v1028 = vld [vmem:[%s220 + $0xd2] sm:$0xff]
      %v1029 = vld [vmem:[%s220 + $0xda] sm:$0xff]
      %v1030 = vld [vmem:[%s220 + $0xe2] sm:$0xff]
      %v1031 = vld [vmem:[%s220 + $0xea] sm:$0x3f]
      %1060 = vrot.lane.b32.xlu0 %v1004, 20
      %v1061 = vpop.permute.xlu0 %1060
      %1062 = vrot.lane.b32.xlu0 %v1005, 20
      %v1063 = vpop.permute.xlu0 %1062
      %1064 = vrot.lane.b32.xlu0 %v1006, 20
      %v1065 = vpop.permute.xlu0 %1064
      %1066 = vrot.lane.b32.xlu0 %v1007, 20
      %v1067 = vpop.permute.xlu0 %1066
      %1068 = vrot.lane.b32.xlu0 %v1008, 20
      %v1069 = vpop.permute.xlu0 %1068
      %1070 = vrot.lane.b32.xlu0 %v1009, 20
      %v1071 = vpop.permute.xlu0 %1070
      %1072 = vrot.lane.b32.xlu0 %v1010, 20
      %v1073 = vpop.permute.xlu0 %1072
      %1074 = vrot.lane.b32.xlu0 %v1011, 20
      %v1075 = vpop.permute.xlu0 %1074
      %1076 = vrot.lane.b32.xlu0 %v1012, 20
      %v1077 = vpop.permute.xlu0 %1076
      %1078 = vrot.lane.b32.xlu0 %v1013, 20
      %v1079 = vpop.permute.xlu0 %1078
      %1080 = vrot.lane.b32.xlu0 %v1014, 20
      %v1081 = vpop.permute.xlu0 %1080
      %1082 = vrot.lane.b32.xlu0 %v1015, 20
      %v1083 = vpop.permute.xlu0 %1082
      %1084 = vrot.lane.b32.xlu0 %v1016, 20
      %v1085 = vpop.permute.xlu0 %1084
      %1086 = vrot.lane.b32.xlu0 %v1017, 20
      %v1087 = vpop.permute.xlu0 %1086
      %1088 = vrot.lane.b32.xlu0 %v1018, 20
      %v1089 = vpop.permute.xlu0 %1088
      %1090 = vrot.lane.b32.xlu0 %v1019, 20
      %v1091 = vpop.permute.xlu0 %1090
      %1092 = vrot.lane.b32.xlu0 %v1020, 20
      %v1093 = vpop.permute.xlu0 %1092
      %1094 = vrot.lane.b32.xlu0 %v1021, 20
      %v1095 = vpop.permute.xlu0 %1094
      %1096 = vrot.lane.b32.xlu0 %v1022, 20
      %v1097 = vpop.permute.xlu0 %1096
      %1098 = vrot.lane.b32.xlu0 %v1023, 20
      %v1099 = vpop.permute.xlu0 %1098
      %1100 = vrot.lane.b32.xlu0 %v1024, 20
      %v1101 = vpop.permute.xlu0 %1100
      %1102 = vrot.lane.b32.xlu0 %v1025, 20
      %v1103 = vpop.permute.xlu0 %1102
      %1104 = vrot.lane.b32.xlu0 %v1026, 20
      %v1105 = vpop.permute.xlu0 %1104
      %1106 = vrot.lane.b32.xlu0 %v1027, 20
      %v1107 = vpop.permute.xlu0 %1106
      %1108 = vrot.lane.b32.xlu0 %v1028, 20
      %v1109 = vpop.permute.xlu0 %1108
      %1110 = vrot.lane.b32.xlu0 %v1029, 20
      %v1111 = vpop.permute.xlu0 %1110
      %1112 = vrot.lane.b32.xlu0 %v1030, 20
      %v1113 = vpop.permute.xlu0 %1112
      %1114 = vrot.lane.b32.xlu0 %v1031, 20
      %v1115 = vpop.permute.xlu0 %1114
      %vm1144 = vcmask 195744
      %1145 = vst.msk [vmem:[#allocation3] sm:$0xff] %vm1144, %v1061
      %1146 = vst.msk [vmem:[#allocation3 + $0x8] sm:$0xff] %vm1144, %v1063
      %1147 = vst.msk [vmem:[#allocation3 + $0x10] sm:$0xff] %vm1144, %v1065
      %1148 = vst.msk [vmem:[#allocation3 + $0x18] sm:$0xff] %vm1144, %v1067
      %1149 = vst.msk [vmem:[#allocation3 + $0x20] sm:$0xff] %vm1144, %v1069
      %1150 = vst.msk [vmem:[#allocation3 + $0x28] sm:$0xff] %vm1144, %v1071
      %1151 = vst.msk [vmem:[#allocation3 + $0x30] sm:$0xff] %vm1144, %v1073
      %1152 = vst.msk [vmem:[#allocation3 + $0x38] sm:$0xff] %vm1144, %v1075
      %1153 = vst.msk [vmem:[#allocation3 + $0x40] sm:$0xff] %vm1144, %v1077
      %1154 = vst.msk [vmem:[#allocation3 + $0x48] sm:$0xff] %vm1144, %v1079
      %1155 = vst.msk [vmem:[#allocation3 + $0x50] sm:$0xff] %vm1144, %v1081
      %1156 = vst.msk [vmem:[#allocation3 + $0x58] sm:$0xff] %vm1144, %v1083
      %1157 = vst.msk [vmem:[#allocation3 + $0x60] sm:$0xff] %vm1144, %v1085
      %1158 = vst.msk [vmem:[#allocation3 + $0x68] sm:$0xff] %vm1144, %v1087
      %1159 = vst.msk [vmem:[#allocation3 + $0x70] sm:$0xff] %vm1144, %v1089
      %1160 = vst.msk [vmem:[#allocation3 + $0x78] sm:$0xff] %vm1144, %v1091
      %1161 = vst.msk [vmem:[#allocation3 + $0x80] sm:$0xff] %vm1144, %v1093
      %1162 = vst.msk [vmem:[#allocation3 + $0x88] sm:$0xff] %vm1144, %v1095
      %1163 = vst.msk [vmem:[#allocation3 + $0x90] sm:$0xff] %vm1144, %v1097
      %1164 = vst.msk [vmem:[#allocation3 + $0x98] sm:$0xff] %vm1144, %v1099
      %1165 = vst.msk [vmem:[#allocation3 + $0xa0] sm:$0xff] %vm1144, %v1101
      %1166 = vst.msk [vmem:[#allocation3 + $0xa8] sm:$0xff] %vm1144, %v1103
      %1167 = vst.msk [vmem:[#allocation3 + $0xb0] sm:$0xff] %vm1144, %v1105
      %1168 = vst.msk [vmem:[#allocation3 + $0xb8] sm:$0xff] %vm1144, %v1107
      %1169 = vst.msk [vmem:[#allocation3 + $0xc0] sm:$0xff] %vm1144, %v1109
      %1170 = vst.msk [vmem:[#allocation3 + $0xc8] sm:$0xff] %vm1144, %v1111
      %1171 = vst.msk [vmem:[#allocation3 + $0xd0] sm:$0xff] %vm1144, %v1113
      %vm1172 = vcmask 193696
      %1173 = vst.msk [vmem:[#allocation3 + $0xd8] sm:$0x3f] %vm1172, %v1115
      %v1174 = vld [vmem:[%s220 + $0x20] sm:$0xff]
      %v1175 = vld [vmem:[%s220 + $0x28] sm:$0xff]
      %v1176 = vld [vmem:[%s220 + $0x30] sm:$0xff]
      %v1177 = vld [vmem:[%s220 + $0x38] sm:$0xff]
      %v1178 = vld [vmem:[%s220 + $0x40] sm:$0xff]
      %v1179 = vld [vmem:[%s220 + $0x48] sm:$0xff]
      %v1180 = vld [vmem:[%s220 + $0x50] sm:$0xff]
      %v1181 = vld [vmem:[%s220 + $0x58] sm:$0xff]
      %v1182 = vld [vmem:[%s220 + $0x60] sm:$0xff]
      %v1183 = vld [vmem:[%s220 + $0x68] sm:$0xff]
      %v1184 = vld [vmem:[%s220 + $0x70] sm:$0xff]
      %v1185 = vld [vmem:[%s220 + $0x78] sm:$0xff]
      %v1186 = vld [vmem:[%s220 + $0x80] sm:$0xff]
      %v1187 = vld [vmem:[%s220 + $0x88] sm:$0xff]
      %v1188 = vld [vmem:[%s220 + $0x90] sm:$0xff]
      %v1189 = vld [vmem:[%s220 + $0x98] sm:$0xff]
      %v1190 = vld [vmem:[%s220 + $0xa0] sm:$0xff]
      %v1191 = vld [vmem:[%s220 + $0xa8] sm:$0xff]
      %v1192 = vld [vmem:[%s220 + $0xb0] sm:$0xff]
      %v1193 = vld [vmem:[%s220 + $0xb8] sm:$0xff]
      %v1194 = vld [vmem:[%s220 + $0xc0] sm:$0xff]
      %v1195 = vld [vmem:[%s220 + $0xc8] sm:$0xff]
      %v1196 = vld [vmem:[%s220 + $0xd0] sm:$0xff]
      %v1197 = vld [vmem:[%s220 + $0xd8] sm:$0xff]
      %v1198 = vld [vmem:[%s220 + $0xe0] sm:$0xff]
      %v1199 = vld [vmem:[%s220 + $0xe8] sm:$0xff]
      %v1200 = vld [vmem:[%s220 + $0xf0] sm:$0xff]
      %v1201 = vld [vmem:[%s220 + $0xf8] sm:$0x3f]
      %1230 = vrot.lane.b32.xlu0 %v1174, 24
      %v1231 = vpop.permute.xlu0 %1230
      %1232 = vrot.lane.b32.xlu0 %v1175, 24
      %v1233 = vpop.permute.xlu0 %1232
      %1234 = vrot.lane.b32.xlu0 %v1176, 24
      %v1235 = vpop.permute.xlu0 %1234
      %1236 = vrot.lane.b32.xlu0 %v1177, 24
      %v1237 = vpop.permute.xlu0 %1236
      %1238 = vrot.lane.b32.xlu0 %v1178, 24
      %v1239 = vpop.permute.xlu0 %1238
      %1240 = vrot.lane.b32.xlu0 %v1179, 24
      %v1241 = vpop.permute.xlu0 %1240
      %1242 = vrot.lane.b32.xlu0 %v1180, 24
      %v1243 = vpop.permute.xlu0 %1242
      %1244 = vrot.lane.b32.xlu0 %v1181, 24
      %v1245 = vpop.permute.xlu0 %1244
      %1246 = vrot.lane.b32.xlu0 %v1182, 24
      %v1247 = vpop.permute.xlu0 %1246
      %1248 = vrot.lane.b32.xlu0 %v1183, 24
      %v1249 = vpop.permute.xlu0 %1248
      %1250 = vrot.lane.b32.xlu0 %v1184, 24
      %v1251 = vpop.permute.xlu0 %1250
      %1252 = vrot.lane.b32.xlu0 %v1185, 24
      %v1253 = vpop.permute.xlu0 %1252
      %1254 = vrot.lane.b32.xlu0 %v1186, 24
      %v1255 = vpop.permute.xlu0 %1254
      %1256 = vrot.lane.b32.xlu0 %v1187, 24
      %v1257 = vpop.permute.xlu0 %1256
      %1258 = vrot.lane.b32.xlu0 %v1188, 24
      %v1259 = vpop.permute.xlu0 %1258
      %1260 = vrot.lane.b32.xlu0 %v1189, 24
      %v1261 = vpop.permute.xlu0 %1260
      %1262 = vrot.lane.b32.xlu0 %v1190, 24
      %v1263 = vpop.permute.xlu0 %1262
      %1264 = vrot.lane.b32.xlu0 %v1191, 24
      %v1265 = vpop.permute.xlu0 %1264
      %1266 = vrot.lane.b32.xlu0 %v1192, 24
      %v1267 = vpop.permute.xlu0 %1266
      %1268 = vrot.lane.b32.xlu0 %v1193, 24
      %v1269 = vpop.permute.xlu0 %1268
      %1270 = vrot.lane.b32.xlu0 %v1194, 24
      %v1271 = vpop.permute.xlu0 %1270
      %1272 = vrot.lane.b32.xlu0 %v1195, 24
      %v1273 = vpop.permute.xlu0 %1272
      %1274 = vrot.lane.b32.xlu0 %v1196, 24
      %v1275 = vpop.permute.xlu0 %1274
      %1276 = vrot.lane.b32.xlu0 %v1197, 24
      %v1277 = vpop.permute.xlu0 %1276
      %1278 = vrot.lane.b32.xlu0 %v1198, 24
      %v1279 = vpop.permute.xlu0 %1278
      %1280 = vrot.lane.b32.xlu0 %v1199, 24
      %v1281 = vpop.permute.xlu0 %1280
      %1282 = vrot.lane.b32.xlu0 %v1200, 24
      %v1283 = vpop.permute.xlu0 %1282
      %1284 = vrot.lane.b32.xlu0 %v1201, 24
      %v1285 = vpop.permute.xlu0 %1284
      %vm1314 = vcmask 228544
      %1315 = vst.msk [vmem:[#allocation3] sm:$0xff] %vm1314, %v1231
      %1316 = vst.msk [vmem:[#allocation3 + $0x8] sm:$0xff] %vm1314, %v1233
      %1317 = vst.msk [vmem:[#allocation3 + $0x10] sm:$0xff] %vm1314, %v1235
      %1318 = vst.msk [vmem:[#allocation3 + $0x18] sm:$0xff] %vm1314, %v1237
      %1319 = vst.msk [vmem:[#allocation3 + $0x20] sm:$0xff] %vm1314, %v1239
      %1320 = vst.msk [vmem:[#allocation3 + $0x28] sm:$0xff] %vm1314, %v1241
      %1321 = vst.msk [vmem:[#allocation3 + $0x30] sm:$0xff] %vm1314, %v1243
      %1322 = vst.msk [vmem:[#allocation3 + $0x38] sm:$0xff] %vm1314, %v1245
      %1323 = vst.msk [vmem:[#allocation3 + $0x40] sm:$0xff] %vm1314, %v1247
      %1324 = vst.msk [vmem:[#allocation3 + $0x48] sm:$0xff] %vm1314, %v1249
      %1325 = vst.msk [vmem:[#allocation3 + $0x50] sm:$0xff] %vm1314, %v1251
      %1326 = vst.msk [vmem:[#allocation3 + $0x58] sm:$0xff] %vm1314, %v1253
      %1327 = vst.msk [vmem:[#allocation3 + $0x60] sm:$0xff] %vm1314, %v1255
      %1328 = vst.msk [vmem:[#allocation3 + $0x68] sm:$0xff] %vm1314, %v1257
      %1329 = vst.msk [vmem:[#allocation3 + $0x70] sm:$0xff] %vm1314, %v1259
      %1330 = vst.msk [vmem:[#allocation3 + $0x78] sm:$0xff] %vm1314, %v1261
      %1331 = vst.msk [vmem:[#allocation3 + $0x80] sm:$0xff] %vm1314, %v1263
      %1332 = vst.msk [vmem:[#allocation3 + $0x88] sm:$0xff] %vm1314, %v1265
      %1333 = vst.msk [vmem:[#allocation3 + $0x90] sm:$0xff] %vm1314, %v1267
      %1334 = vst.msk [vmem:[#allocation3 + $0x98] sm:$0xff] %vm1314, %v1269
      %1335 = vst.msk [vmem:[#allocation3 + $0xa0] sm:$0xff] %vm1314, %v1271
      %1336 = vst.msk [vmem:[#allocation3 + $0xa8] sm:$0xff] %vm1314, %v1273
      %1337 = vst.msk [vmem:[#allocation3 + $0xb0] sm:$0xff] %vm1314, %v1275
      %1338 = vst.msk [vmem:[#allocation3 + $0xb8] sm:$0xff] %vm1314, %v1277
      %1339 = vst.msk [vmem:[#allocation3 + $0xc0] sm:$0xff] %vm1314, %v1279
      %1340 = vst.msk [vmem:[#allocation3 + $0xc8] sm:$0xff] %vm1314, %v1281
      %1341 = vst.msk [vmem:[#allocation3 + $0xd0] sm:$0xff] %vm1314, %v1283
      %vm1342 = vcmask 226496
      %1343 = vst.msk [vmem:[#allocation3 + $0xd8] sm:$0x3f] %vm1342, %v1285
      %v1344 = vld [vmem:[%s220 + $0x21] sm:$0xff]
      %v1345 = vld [vmem:[%s220 + $0x29] sm:$0xff]
      %v1346 = vld [vmem:[%s220 + $0x31] sm:$0xff]
      %v1347 = vld [vmem:[%s220 + $0x39] sm:$0xff]
      %v1348 = vld [vmem:[%s220 + $0x41] sm:$0xff]
      %v1349 = vld [vmem:[%s220 + $0x49] sm:$0xff]
      %v1350 = vld [vmem:[%s220 + $0x51] sm:$0xff]
      %v1351 = vld [vmem:[%s220 + $0x59] sm:$0xff]
      %v1352 = vld [vmem:[%s220 + $0x61] sm:$0xff]
      %v1353 = vld [vmem:[%s220 + $0x69] sm:$0xff]
      %v1354 = vld [vmem:[%s220 + $0x71] sm:$0xff]
      %v1355 = vld [vmem:[%s220 + $0x79] sm:$0xff]
      %v1356 = vld [vmem:[%s220 + $0x81] sm:$0xff]
      %v1357 = vld [vmem:[%s220 + $0x89] sm:$0xff]
      %v1358 = vld [vmem:[%s220 + $0x91] sm:$0xff]
      %v1359 = vld [vmem:[%s220 + $0x99] sm:$0xff]
      %v1360 = vld [vmem:[%s220 + $0xa1] sm:$0xff]
      %v1361 = vld [vmem:[%s220 + $0xa9] sm:$0xff]
      %v1362 = vld [vmem:[%s220 + $0xb1] sm:$0xff]
      %v1363 = vld [vmem:[%s220 + $0xb9] sm:$0xff]
      %v1364 = vld [vmem:[%s220 + $0xc1] sm:$0xff]
      %v1365 = vld [vmem:[%s220 + $0xc9] sm:$0xff]
      %v1366 = vld [vmem:[%s220 + $0xd1] sm:$0xff]
      %v1367 = vld [vmem:[%s220 + $0xd9] sm:$0xff]
      %v1368 = vld [vmem:[%s220 + $0xe1] sm:$0xff]
      %v1369 = vld [vmem:[%s220 + $0xe9] sm:$0xff]
      %v1370 = vld [vmem:[%s220 + $0xf1] sm:$0xff]
      %v1371 = vld [vmem:[%s220 + $0xf9] sm:$0x3f]
      %1400 = vrot.lane.b32.xlu0 %v1344, 28
      %v1401 = vpop.permute.xlu0 %1400
      %1402 = vrot.lane.b32.xlu0 %v1345, 28
      %v1403 = vpop.permute.xlu0 %1402
      %1404 = vrot.lane.b32.xlu0 %v1346, 28
      %v1405 = vpop.permute.xlu0 %1404
      %1406 = vrot.lane.b32.xlu0 %v1347, 28
      %v1407 = vpop.permute.xlu0 %1406
      %1408 = vrot.lane.b32.xlu0 %v1348, 28
      %v1409 = vpop.permute.xlu0 %1408
      %1410 = vrot.lane.b32.xlu0 %v1349, 28
      %v1411 = vpop.permute.xlu0 %1410
      %1412 = vrot.lane.b32.xlu0 %v1350, 28
      %v1413 = vpop.permute.xlu0 %1412
      %1414 = vrot.lane.b32.xlu0 %v1351, 28
      %v1415 = vpop.permute.xlu0 %1414
      %1416 = vrot.lane.b32.xlu0 %v1352, 28
      %v1417 = vpop.permute.xlu0 %1416
      %1418 = vrot.lane.b32.xlu0 %v1353, 28
      %v1419 = vpop.permute.xlu0 %1418
      %1420 = vrot.lane.b32.xlu0 %v1354, 28
      %v1421 = vpop.permute.xlu0 %1420
      %1422 = vrot.lane.b32.xlu0 %v1355, 28
      %v1423 = vpop.permute.xlu0 %1422
      %1424 = vrot.lane.b32.xlu0 %v1356, 28
      %v1425 = vpop.permute.xlu0 %1424
      %1426 = vrot.lane.b32.xlu0 %v1357, 28
      %v1427 = vpop.permute.xlu0 %1426
      %1428 = vrot.lane.b32.xlu0 %v1358, 28
      %v1429 = vpop.permute.xlu0 %1428
      %1430 = vrot.lane.b32.xlu0 %v1359, 28
      %v1431 = vpop.permute.xlu0 %1430
      %1432 = vrot.lane.b32.xlu0 %v1360, 28
      %v1433 = vpop.permute.xlu0 %1432
      %1434 = vrot.lane.b32.xlu0 %v1361, 28
      %v1435 = vpop.permute.xlu0 %1434
      %1436 = vrot.lane.b32.xlu0 %v1362, 28
      %v1437 = vpop.permute.xlu0 %1436
      %1438 = vrot.lane.b32.xlu0 %v1363, 28
      %v1439 = vpop.permute.xlu0 %1438
      %1440 = vrot.lane.b32.xlu0 %v1364, 28
      %v1441 = vpop.permute.xlu0 %1440
      %1442 = vrot.lane.b32.xlu0 %v1365, 28
      %v1443 = vpop.permute.xlu0 %1442
      %1444 = vrot.lane.b32.xlu0 %v1366, 28
      %v1445 = vpop.permute.xlu0 %1444
      %1446 = vrot.lane.b32.xlu0 %v1367, 28
      %v1447 = vpop.permute.xlu0 %1446
      %1448 = vrot.lane.b32.xlu0 %v1368, 28
      %v1449 = vpop.permute.xlu0 %1448
      %1450 = vrot.lane.b32.xlu0 %v1369, 28
      %v1451 = vpop.permute.xlu0 %1450
      %1452 = vrot.lane.b32.xlu0 %v1370, 28
      %v1453 = vpop.permute.xlu0 %1452
      %1454 = vrot.lane.b32.xlu0 %v1371, 28
      %v1455 = vpop.permute.xlu0 %1454
      %vm1484 = vcmask 261344
      %1485 = vst.msk [vmem:[#allocation3] sm:$0xff] %vm1484, %v1401
      %1486 = vst.msk [vmem:[#allocation3 + $0x8] sm:$0xff] %vm1484, %v1403
      %1487 = vst.msk [vmem:[#allocation3 + $0x10] sm:$0xff] %vm1484, %v1405
      %1488 = vst.msk [vmem:[#allocation3 + $0x18] sm:$0xff] %vm1484, %v1407
      %1489 = vst.msk [vmem:[#allocation3 + $0x20] sm:$0xff] %vm1484, %v1409
      %1490 = vst.msk [vmem:[#allocation3 + $0x28] sm:$0xff] %vm1484, %v1411
      %1491 = vst.msk [vmem:[#allocation3 + $0x30] sm:$0xff] %vm1484, %v1413
      %1492 = vst.msk [vmem:[#allocation3 + $0x38] sm:$0xff] %vm1484, %v1415
      %1493 = vst.msk [vmem:[#allocation3 + $0x40] sm:$0xff] %vm1484, %v1417
      %1494 = vst.msk [vmem:[#allocation3 + $0x48] sm:$0xff] %vm1484, %v1419
      %1495 = vst.msk [vmem:[#allocation3 + $0x50] sm:$0xff] %vm1484, %v1421
      %1496 = vst.msk [vmem:[#allocation3 + $0x58] sm:$0xff] %vm1484, %v1423
      %1497 = vst.msk [vmem:[#allocation3 + $0x60] sm:$0xff] %vm1484, %v1425
      %1498 = vst.msk [vmem:[#allocation3 + $0x68] sm:$0xff] %vm1484, %v1427
      %1499 = vst.msk [vmem:[#allocation3 + $0x70] sm:$0xff] %vm1484, %v1429
      %1500 = vst.msk [vmem:[#allocation3 + $0x78] sm:$0xff] %vm1484, %v1431
      %1501 = vst.msk [vmem:[#allocation3 + $0x80] sm:$0xff] %vm1484, %v1433
      %1502 = vst.msk [vmem:[#allocation3 + $0x88] sm:$0xff] %vm1484, %v1435
      %1503 = vst.msk [vmem:[#allocation3 + $0x90] sm:$0xff] %vm1484, %v1437
      %1504 = vst.msk [vmem:[#allocation3 + $0x98] sm:$0xff] %vm1484, %v1439
      %1505 = vst.msk [vmem:[#allocation3 + $0xa0] sm:$0xff] %vm1484, %v1441
      %1506 = vst.msk [vmem:[#allocation3 + $0xa8] sm:$0xff] %vm1484, %v1443
      %1507 = vst.msk [vmem:[#allocation3 + $0xb0] sm:$0xff] %vm1484, %v1445
      %1508 = vst.msk [vmem:[#allocation3 + $0xb8] sm:$0xff] %vm1484, %v1447
      %1509 = vst.msk [vmem:[#allocation3 + $0xc0] sm:$0xff] %vm1484, %v1449
      %1510 = vst.msk [vmem:[#allocation3 + $0xc8] sm:$0xff] %vm1484, %v1451
      %1511 = vst.msk [vmem:[#allocation3 + $0xd0] sm:$0xff] %vm1484, %v1453
      %vm1512 = vcmask 259296
      %1513 = vst.msk [vmem:[#allocation3 + $0xd8] sm:$0x3f] %vm1512, %v1455
      %v1514 = vld [vmem:[%s220 + $0x22] sm:$0xff]
      %v1515 = vld [vmem:[%s220 + $0x2a] sm:$0xff]
      %v1516 = vld [vmem:[%s220 + $0x32] sm:$0xff]
      %v1517 = vld [vmem:[%s220 + $0x3a] sm:$0xff]
      %v1518 = vld [vmem:[%s220 + $0x42] sm:$0xff]
      %v1519 = vld [vmem:[%s220 + $0x4a] sm:$0xff]
      %v1520 = vld [vmem:[%s220 + $0x52] sm:$0xff]
      %v1521 = vld [vmem:[%s220 + $0x5a] sm:$0xff]
      %v1522 = vld [vmem:[%s220 + $0x62] sm:$0xff]
      %v1523 = vld [vmem:[%s220 + $0x6a] sm:$0xff]
      %v1524 = vld [vmem:[%s220 + $0x72] sm:$0xff]
      %v1525 = vld [vmem:[%s220 + $0x7a] sm:$0xff]
      %v1526 = vld [vmem:[%s220 + $0x82] sm:$0xff]
      %v1527 = vld [vmem:[%s220 + $0x8a] sm:$0xff]
      %v1528 = vld [vmem:[%s220 + $0x92] sm:$0xff]
      %v1529 = vld [vmem:[%s220 + $0x9a] sm:$0xff]
      %v1530 = vld [vmem:[%s220 + $0xa2] sm:$0xff]
      %v1531 = vld [vmem:[%s220 + $0xaa] sm:$0xff]
      %v1532 = vld [vmem:[%s220 + $0xb2] sm:$0xff]
      %v1533 = vld [vmem:[%s220 + $0xba] sm:$0xff]
      %v1534 = vld [vmem:[%s220 + $0xc2] sm:$0xff]
      %v1535 = vld [vmem:[%s220 + $0xca] sm:$0xff]
      %v1536 = vld [vmem:[%s220 + $0xd2] sm:$0xff]
      %v1537 = vld [vmem:[%s220 + $0xda] sm:$0xff]
      %v1538 = vld [vmem:[%s220 + $0xe2] sm:$0xff]
      %v1539 = vld [vmem:[%s220 + $0xea] sm:$0xff]
      %v1540 = vld [vmem:[%s220 + $0xf2] sm:$0xff]
      %v1541 = vld [vmem:[%s220 + $0xfa] sm:$0x3f]
      %1570 = vrot.lane.b32.xlu0 %v1514, 32
      %v1571 = vpop.permute.xlu0 %1570
      %1572 = vrot.lane.b32.xlu0 %v1515, 32
      %v1573 = vpop.permute.xlu0 %1572
      %1574 = vrot.lane.b32.xlu0 %v1516, 32
      %v1575 = vpop.permute.xlu0 %1574
      %1576 = vrot.lane.b32.xlu0 %v1517, 32
      %v1577 = vpop.permute.xlu0 %1576
      %1578 = vrot.lane.b32.xlu0 %v1518, 32
      %v1579 = vpop.permute.xlu0 %1578
      %1580 = vrot.lane.b32.xlu0 %v1519, 32
      %v1581 = vpop.permute.xlu0 %1580
      %1582 = vrot.lane.b32.xlu0 %v1520, 32
      %v1583 = vpop.permute.xlu0 %1582
      %1584 = vrot.lane.b32.xlu0 %v1521, 32
      %v1585 = vpop.permute.xlu0 %1584
      %1586 = vrot.lane.b32.xlu0 %v1522, 32
      %v1587 = vpop.permute.xlu0 %1586
      %1588 = vrot.lane.b32.xlu0 %v1523, 32
      %v1589 = vpop.permute.xlu0 %1588
      %1590 = vrot.lane.b32.xlu0 %v1524, 32
      %v1591 = vpop.permute.xlu0 %1590
      %1592 = vrot.lane.b32.xlu0 %v1525, 32
      %v1593 = vpop.permute.xlu0 %1592
      %1594 = vrot.lane.b32.xlu0 %v1526, 32
      %v1595 = vpop.permute.xlu0 %1594
      %1596 = vrot.lane.b32.xlu0 %v1527, 32
      %v1597 = vpop.permute.xlu0 %1596
      %1598 = vrot.lane.b32.xlu0 %v1528, 32
      %v1599 = vpop.permute.xlu0 %1598
      %1600 = vrot.lane.b32.xlu0 %v1529, 32
      %v1601 = vpop.permute.xlu0 %1600
      %1602 = vrot.lane.b32.xlu0 %v1530, 32
      %v1603 = vpop.permute.xlu0 %1602
      %1604 = vrot.lane.b32.xlu0 %v1531, 32
      %v1605 = vpop.permute.xlu0 %1604
      %1606 = vrot.lane.b32.xlu0 %v1532, 32
      %v1607 = vpop.permute.xlu0 %1606
      %1608 = vrot.lane.b32.xlu0 %v1533, 32
      %v1609 = vpop.permute.xlu0 %1608
      %1610 = vrot.lane.b32.xlu0 %v1534, 32
      %v1611 = vpop.permute.xlu0 %1610
      %1612 = vrot.lane.b32.xlu0 %v1535, 32
      %v1613 = vpop.permute.xlu0 %1612
      %1614 = vrot.lane.b32.xlu0 %v1536, 32
      %v1615 = vpop.permute.xlu0 %1614
      %1616 = vrot.lane.b32.xlu0 %v1537, 32
      %v1617 = vpop.permute.xlu0 %1616
      %1618 = vrot.lane.b32.xlu0 %v1538, 32
      %v1619 = vpop.permute.xlu0 %1618
      %1620 = vrot.lane.b32.xlu0 %v1539, 32
      %v1621 = vpop.permute.xlu0 %1620
      %1622 = vrot.lane.b32.xlu0 %v1540, 32
      %v1623 = vpop.permute.xlu0 %1622
      %1624 = vrot.lane.b32.xlu0 %v1541, 32
      %v1625 = vpop.permute.xlu0 %1624
      %vm1654 = vcmask 294144
      %1655 = vst.msk [vmem:[#allocation3] sm:$0xff] %vm1654, %v1571
      %1656 = vst.msk [vmem:[#allocation3 + $0x8] sm:$0xff] %vm1654, %v1573
      %1657 = vst.msk [vmem:[#allocation3 + $0x10] sm:$0xff] %vm1654, %v1575
      %1658 = vst.msk [vmem:[#allocation3 + $0x18] sm:$0xff] %vm1654, %v1577
      %1659 = vst.msk [vmem:[#allocation3 + $0x20] sm:$0xff] %vm1654, %v1579
      %1660 = vst.msk [vmem:[#allocation3 + $0x28] sm:$0xff] %vm1654, %v1581
      %1661 = vst.msk [vmem:[#allocation3 + $0x30] sm:$0xff] %vm1654, %v1583
      %1662 = vst.msk [vmem:[#allocation3 + $0x38] sm:$0xff] %vm1654, %v1585
      %1663 = vst.msk [vmem:[#allocation3 + $0x40] sm:$0xff] %vm1654, %v1587
      %1664 = vst.msk [vmem:[#allocation3 + $0x48] sm:$0xff] %vm1654, %v1589
      %1665 = vst.msk [vmem:[#allocation3 + $0x50] sm:$0xff] %vm1654, %v1591
      %1666 = vst.msk [vmem:[#allocation3 + $0x58] sm:$0xff] %vm1654, %v1593
      %1667 = vst.msk [vmem:[#allocation3 + $0x60] sm:$0xff] %vm1654, %v1595
      %1668 = vst.msk [vmem:[#allocation3 + $0x68] sm:$0xff] %vm1654, %v1597
      %1669 = vst.msk [vmem:[#allocation3 + $0x70] sm:$0xff] %vm1654, %v1599
      %1670 = vst.msk [vmem:[#allocation3 + $0x78] sm:$0xff] %vm1654, %v1601
      %1671 = vst.msk [vmem:[#allocation3 + $0x80] sm:$0xff] %vm1654, %v1603
      %1672 = vst.msk [vmem:[#allocation3 + $0x88] sm:$0xff] %vm1654, %v1605
      %1673 = vst.msk [vmem:[#allocation3 + $0x90] sm:$0xff] %vm1654, %v1607
      %1674 = vst.msk [vmem:[#allocation3 + $0x98] sm:$0xff] %vm1654, %v1609
      %1675 = vst.msk [vmem:[#allocation3 + $0xa0] sm:$0xff] %vm1654, %v1611
      %1676 = vst.msk [vmem:[#allocation3 + $0xa8] sm:$0xff] %vm1654, %v1613
      %1677 = vst.msk [vmem:[#allocation3 + $0xb0] sm:$0xff] %vm1654, %v1615
      %1678 = vst.msk [vmem:[#allocation3 + $0xb8] sm:$0xff] %vm1654, %v1617
      %1679 = vst.msk [vmem:[#allocation3 + $0xc0] sm:$0xff] %vm1654, %v1619
      %1680 = vst.msk [vmem:[#allocation3 + $0xc8] sm:$0xff] %vm1654, %v1621
      %1681 = vst.msk [vmem:[#allocation3 + $0xd0] sm:$0xff] %vm1654, %v1623
      %vm1682 = vcmask 292096
      %1683 = vst.msk [vmem:[#allocation3 + $0xd8] sm:$0x3f] %vm1682, %v1625
      %v1684 = vld [vmem:[#allocation3] sm:$0xff]
      %v1685 = vld [vmem:[#allocation3 + $0x8] sm:$0xff]
      %v1686 = vld [vmem:[#allocation3 + $0x10] sm:$0xff]
      %v1687 = vld [vmem:[#allocation3 + $0x18] sm:$0xff]
      %v1688 = vld [vmem:[#allocation3 + $0x20] sm:$0xff]
      %v1689 = vld [vmem:[#allocation3 + $0x28] sm:$0xff]
      %v1690 = vld [vmem:[#allocation3 + $0x30] sm:$0xff]
      %v1691 = vld [vmem:[#allocation3 + $0x38] sm:$0xff]
      %v1692 = vld [vmem:[#allocation3 + $0x40] sm:$0xff]
      %v1693 = vld [vmem:[#allocation3 + $0x48] sm:$0xff]
      %v1694 = vld [vmem:[#allocation3 + $0x50] sm:$0xff]
      %v1695 = vld [vmem:[#allocation3 + $0x58] sm:$0xff]
      %v1696 = vld [vmem:[#allocation3 + $0x60] sm:$0xff]
      %v1697 = vld [vmem:[#allocation3 + $0x68] sm:$0xff]
      %v1698 = vld [vmem:[#allocation3 + $0x70] sm:$0xff]
      %v1699 = vld [vmem:[#allocation3 + $0x78] sm:$0xff]
      %v1700 = vld [vmem:[#allocation3 + $0x80] sm:$0xff]
      %v1701 = vld [vmem:[#allocation3 + $0x88] sm:$0xff]
      %v1702 = vld [vmem:[#allocation3 + $0x90] sm:$0xff]
      %v1703 = vld [vmem:[#allocation3 + $0x98] sm:$0xff]
      %v1704 = vld [vmem:[#allocation3 + $0xa0] sm:$0xff]
      %v1705 = vld [vmem:[#allocation3 + $0xa8] sm:$0xff]
      %v1706 = vld [vmem:[#allocation3 + $0xb0] sm:$0xff]
      %v1707 = vld [vmem:[#allocation3 + $0xb8] sm:$0xff]
      %v1708 = vld [vmem:[#allocation3 + $0xc0] sm:$0xff]
      %v1709 = vld [vmem:[#allocation3 + $0xc8] sm:$0xff]
      %v1710 = vld [vmem:[#allocation3 + $0xd0] sm:$0xff]
      %v1711 = vld [vmem:[#allocation3 + $0xd8] sm:$0x3f]
      %v1712 = vld [vmem:[%s2] sm:$0xff]
      %v1713 = vld [vmem:[%s2 + $0x8] sm:$0xff]
      %v1714 = vld [vmem:[%s2 + $0x10] sm:$0xff]
      %v1715 = vld [vmem:[%s2 + $0x18] sm:$0xff]
      %v1716 = vld [vmem:[%s2 + $0x20] sm:$0xf]
      %vm1717 = vcmask 293888
      %v1719 = vsel %vm1717, %v1684, 0
      %v1722 = vsel %vm1717, %v1685, 0
      %v1725 = vsel %vm1717, %v1686, 0
      %v1728 = vsel %vm1717, %v1687, 0
      %v1731 = vsel %vm1717, %v1688, 0
      %v1734 = vsel %vm1717, %v1689, 0
      %v1737 = vsel %vm1717, %v1690, 0
      %v1740 = vsel %vm1717, %v1691, 0
      %v1743 = vsel %vm1717, %v1692, 0
      %v1746 = vsel %vm1717, %v1693, 0
      %v1749 = vsel %vm1717, %v1694, 0
      %v1752 = vsel %vm1717, %v1695, 0
      %v1755 = vsel %vm1717, %v1696, 0
      %v1758 = vsel %vm1717, %v1697, 0
      %v1761 = vsel %vm1717, %v1698, 0
      %v1764 = vsel %vm1717, %v1699, 0
      %v1767 = vsel %vm1717, %v1700, 0
      %v1770 = vsel %vm1717, %v1701, 0
      %v1773 = vsel %vm1717, %v1702, 0
      %v1776 = vsel %vm1717, %v1703, 0
      %v1779 = vsel %vm1717, %v1704, 0
      %v1782 = vsel %vm1717, %v1705, 0
      %v1785 = vsel %vm1717, %v1706, 0
      %v1788 = vsel %vm1717, %v1707, 0
      %v1791 = vsel %vm1717, %v1708, 0
      %v1794 = vsel %vm1717, %v1709, 0
      %v1797 = vsel %vm1717, %v1710, 0
      %v1800 = vsel %vm1717, %v1711, 0
      %vm1802 = vcmask 1043456
      %v1804 = vsel %vm1802, %v1716, 0
      %1806 = vmatprep.subr.mxu0 0.0
      %1807 = vmatpush1.msra.mxu0 %v1712
      %1808 = vmatprep.subr.mxu0 0.0
      %1809 = vmatpush1.msra.mxu0 %v1713
      %1810 = vmatprep.subr.mxu0 0.0
      %1811 = vmatpush1.msra.mxu0 %v1714
      %1812 = vmatprep.subr.mxu0 0.0
      %1813 = vmatpush1.msra.mxu0 %v1715
      %1814 = vmatprep.subr.mxu0 0.0
      %1815 = vmatpush1.msra.mxu0 %v1804
      %1816 = vmatprep.subr.mxu0 0.0
      %1817 = vmatpush1.msra.mxu0 0.0
      %1818 = vmatprep.subr.mxu0 0.0
      %1819 = vmatpush1.msra.mxu0 0.0
      %1820 = vmatprep.subr.mxu0 0.0
      %1821 = vmatpush1.msra.mxu0 0.0
      %1822 = vmatprep.subr.mxu0 0.0
      %1823 = vmatpush1.msra.mxu0 0.0
      %1824 = vmatprep.subr.mxu0 0.0
      %1825 = vmatpush1.msra.mxu0 0.0
      %1826 = vmatprep.subr.mxu0 0.0
      %1827 = vmatpush1.msra.mxu0 0.0
      %1828 = vmatprep.subr.mxu0 0.0
      %1829 = vmatpush1.msra.mxu0 0.0
      %1830 = vmatprep.subr.mxu0 0.0
      %1831 = vmatpush1.msra.mxu0 0.0
      %1832 = vmatprep.subr.mxu0 0.0
      %1833 = vmatpush1.msra.mxu0 0.0
      %1834 = vmatprep.subr.mxu0 0.0
      %1835 = vmatpush1.msra.mxu0 0.0
      %1836 = vmatprep.subr.mxu0 0.0
      %1837 = vmatpush1.msra.mxu0 0.0
      %1838 = vmatprep.subr.mxu0 0.0
      %1839 = vmatpush1.msra.mxu0 0.0
      %1840 = vmatprep.subr.mxu0 0.0
      %1841 = vmatpush1.msra.mxu0 0.0
      %1842 = vmatprep.subr.mxu0 0.0
      %1843 = vmatpush1.msra.mxu0 0.0
      %1844 = vmatprep.subr.mxu0 0.0
      %1845 = vmatpush1.msra.mxu0 0.0
      %1846 = vmatprep.subr.mxu0 0.0
      %1847 = vmatpush1.msra.mxu0 0.0
      %1848 = vmatprep.subr.mxu0 0.0
      %1849 = vmatpush1.msra.mxu0 0.0
      %1850 = vmatprep.subr.mxu0 0.0
      %1851 = vmatpush1.msra.mxu0 0.0
      %1852 = vmatprep.subr.mxu0 0.0
      %1853 = vmatpush1.msra.mxu0 0.0
      %1854 = vmatprep.subr.mxu0 0.0
      %1855 = vmatpush1.msra.mxu0 0.0
      %1856 = vmatprep.subr.mxu0 0.0
      %1857 = vmatpush1.msra.mxu0 0.0
      %1858 = vmatprep.subr.mxu0 0.0
      %1859 = vmatpush1.msra.mxu0 0.0
      %1860 = vmatprep.subr.mxu0 0.0
      %1861 = vmatpush1.msra.mxu0 0.0
      %1862 = vmatprep.subr.mxu0 0.0
      %1863 = vmatpush1.msra.mxu0 0.0
      %1864 = vmatprep.subr.mxu0 0.0
      %1865 = vmatpush1.msra.mxu0 0.0
      %1866 = vmatprep.subr.mxu0 0.0
      %1867 = vmatpush1.msra.mxu0 0.0
      %1868 = vmatprep.subr.mxu0 0.0
      %1869 = vmatpush1.msra.mxu0 0.0
      %1870 = vmatprep.mubr.f32.mxu0 0.0
      %1871 = vmatmul.mubr.f32.gmra.mrb[0].mxu0 %v1719
      %v1872 = vpop.f32.mrb[0].mxu0
      %v1873 = vadd.f32 0.0, %v1872
      %v1874 = vpop.f32.mrb[0].mxu0
      %1875 = vmatprep.mubr.f32.mxu0 0.0
      %1876 = vmatmul.mubr.f32.gmra.mrb[0].mxu0 %v1722
      %v1877 = vpop.f32.mrb[0].mxu0
      %v1878 = vadd.f32 0.0, %v1877
      %v1879 = vpop.f32.mrb[0].mxu0
      %1880 = vmatprep.mubr.f32.mxu0 0.0
      %1881 = vmatmul.mubr.f32.gmra.mrb[0].mxu0 %v1725
      %v1882 = vpop.f32.mrb[0].mxu0
      %v1883 = vadd.f32 0.0, %v1882
      %v1884 = vpop.f32.mrb[0].mxu0
      %1885 = vmatprep.mubr.f32.mxu0 0.0
      %1886 = vmatmul.mubr.f32.gmra.mrb[0].mxu0 %v1728
      %v1887 = vpop.f32.mrb[0].mxu0
      %v1888 = vadd.f32 0.0, %v1887
      %v1889 = vpop.f32.mrb[0].mxu0
      %1890 = vmatprep.mubr.f32.mxu0 0.0
      %1891 = vmatmul.mubr.f32.gmra.mrb[0].mxu0 %v1731
      %v1892 = vpop.f32.mrb[0].mxu0
      %v1893 = vadd.f32 0.0, %v1892
      %v1894 = vpop.f32.mrb[0].mxu0
      %1895 = vmatprep.mubr.f32.mxu0 0.0
      %1896 = vmatmul.mubr.f32.gmra.mrb[0].mxu0 %v1734
      %v1897 = vpop.f32.mrb[0].mxu0
      %v1898 = vadd.f32 0.0, %v1897
      %v1899 = vpop.f32.mrb[0].mxu0
      %1900 = vmatprep.mubr.f32.mxu0 0.0
      %1901 = vmatmul.mubr.f32.gmra.mrb[0].mxu0 %v1737
      %v1902 = vpop.f32.mrb[0].mxu0
      %v1903 = vadd.f32 0.0, %v1902
      %v1904 = vpop.f32.mrb[0].mxu0
      %1905 = vmatprep.mubr.f32.mxu0 0.0
      %1906 = vmatmul.mubr.f32.gmra.mrb[0].mxu0 %v1740
      %v1907 = vpop.f32.mrb[0].mxu0
      %v1908 = vadd.f32 0.0, %v1907
      %v1909 = vpop.f32.mrb[0].mxu0
      %1910 = vmatprep.mubr.f32.mxu0 0.0
      %1911 = vmatmul.mubr.f32.gmra.mrb[0].mxu0 %v1743
      %v1912 = vpop.f32.mrb[0].mxu0
      %v1913 = vadd.f32 0.0, %v1912
      %v1914 = vpop.f32.mrb[0].mxu0
      %1915 = vmatprep.mubr.f32.mxu0 0.0
      %1916 = vmatmul.mubr.f32.gmra.mrb[0].mxu0 %v1746
      %v1917 = vpop.f32.mrb[0].mxu0
      %v1918 = vadd.f32 0.0, %v1917
      %v1919 = vpop.f32.mrb[0].mxu0
      %1920 = vmatprep.mubr.f32.mxu0 0.0
      %1921 = vmatmul.mubr.f32.gmra.mrb[0].mxu0 %v1749
      %v1922 = vpop.f32.mrb[0].mxu0
      %v1923 = vadd.f32 0.0, %v1922
      %v1924 = vpop.f32.mrb[0].mxu0
      %1925 = vmatprep.mubr.f32.mxu0 0.0
      %1926 = vmatmul.mubr.f32.gmra.mrb[0].mxu0 %v1752
      %v1927 = vpop.f32.mrb[0].mxu0
      %v1928 = vadd.f32 0.0, %v1927
      %v1929 = vpop.f32.mrb[0].mxu0
      %1930 = vmatprep.mubr.f32.mxu0 0.0
      %1931 = vmatmul.mubr.f32.gmra.mrb[0].mxu0 %v1755
      %v1932 = vpop.f32.mrb[0].mxu0
      %v1933 = vadd.f32 0.0, %v1932
      %v1934 = vpop.f32.mrb[0].mxu0
      %1935 = vmatprep.mubr.f32.mxu0 0.0
      %1936 = vmatmul.mubr.f32.gmra.mrb[0].mxu0 %v1758
      %v1937 = vpop.f32.mrb[0].mxu0
      %v1938 = vadd.f32 0.0, %v1937
      %v1939 = vpop.f32.mrb[0].mxu0
      %1940 = vmatprep.mubr.f32.mxu0 0.0
      %1941 = vmatmul.mubr.f32.gmra.mrb[0].mxu0 %v1761
      %v1942 = vpop.f32.mrb[0].mxu0
      %v1943 = vadd.f32 0.0, %v1942
      %v1944 = vpop.f32.mrb[0].mxu0
      %1945 = vmatprep.mubr.f32.mxu0 0.0
      %1946 = vmatmul.mubr.f32.gmra.mrb[0].mxu0 %v1764
      %v1947 = vpop.f32.mrb[0].mxu0
      %v1948 = vadd.f32 0.0, %v1947
      %v1949 = vpop.f32.mrb[0].mxu0
      %1950 = vmatprep.mubr.f32.mxu0 0.0
      %1951 = vmatmul.mubr.f32.gmra.mrb[0].mxu0 %v1767
      %v1952 = vpop.f32.mrb[0].mxu0
      %v1953 = vadd.f32 0.0, %v1952
      %v1954 = vpop.f32.mrb[0].mxu0
      %1955 = vmatprep.mubr.f32.mxu0 0.0
      %1956 = vmatmul.mubr.f32.gmra.mrb[0].mxu0 %v1770
      %v1957 = vpop.f32.mrb[0].mxu0
      %v1958 = vadd.f32 0.0, %v1957
      %v1959 = vpop.f32.mrb[0].mxu0
      %1960 = vmatprep.mubr.f32.mxu0 0.0
      %1961 = vmatmul.mubr.f32.gmra.mrb[0].mxu0 %v1773
      %v1962 = vpop.f32.mrb[0].mxu0
      %v1963 = vadd.f32 0.0, %v1962
      %v1964 = vpop.f32.mrb[0].mxu0
      %1965 = vmatprep.mubr.f32.mxu0 0.0
      %1966 = vmatmul.mubr.f32.gmra.mrb[0].mxu0 %v1776
      %v1967 = vpop.f32.mrb[0].mxu0
      %v1968 = vadd.f32 0.0, %v1967
      %v1969 = vpop.f32.mrb[0].mxu0
      %1970 = vmatprep.mubr.f32.mxu0 0.0
      %1971 = vmatmul.mubr.f32.gmra.mrb[0].mxu0 %v1779
      %v1972 = vpop.f32.mrb[0].mxu0
      %v1973 = vadd.f32 0.0, %v1972
      %v1974 = vpop.f32.mrb[0].mxu0
      %1975 = vmatprep.mubr.f32.mxu0 0.0
      %1976 = vmatmul.mubr.f32.gmra.mrb[0].mxu0 %v1782
      %v1977 = vpop.f32.mrb[0].mxu0
      %v1978 = vadd.f32 0.0, %v1977
      %v1979 = vpop.f32.mrb[0].mxu0
      %1980 = vmatprep.mubr.f32.mxu0 0.0
      %1981 = vmatmul.mubr.f32.gmra.mrb[0].mxu0 %v1785
      %v1982 = vpop.f32.mrb[0].mxu0
      %v1983 = vadd.f32 0.0, %v1982
      %v1984 = vpop.f32.mrb[0].mxu0
      %1985 = vmatprep.mubr.f32.mxu0 0.0
      %1986 = vmatmul.mubr.f32.gmra.mrb[0].mxu0 %v1788
      %v1987 = vpop.f32.mrb[0].mxu0
      %v1988 = vadd.f32 0.0, %v1987
      %v1989 = vpop.f32.mrb[0].mxu0
      %1990 = vmatprep.mubr.f32.mxu0 0.0
      %1991 = vmatmul.mubr.f32.gmra.mrb[0].mxu0 %v1791
      %v1992 = vpop.f32.mrb[0].mxu0
      %v1993 = vadd.f32 0.0, %v1992
      %v1994 = vpop.f32.mrb[0].mxu0
      %1995 = vmatprep.mubr.f32.mxu0 0.0
      %1996 = vmatmul.mubr.f32.gmra.mrb[0].mxu0 %v1794
      %v1997 = vpop.f32.mrb[0].mxu0
      %v1998 = vadd.f32 0.0, %v1997
      %v1999 = vpop.f32.mrb[0].mxu0
      %2000 = vmatprep.mubr.f32.mxu0 0.0
      %2001 = vmatmul.mubr.f32.gmra.mrb[0].mxu0 %v1797
      %v2002 = vpop.f32.mrb[0].mxu0
      %v2003 = vadd.f32 0.0, %v2002
      %v2004 = vpop.f32.mrb[0].mxu0
      %2005 = vmatprep.mubr.f32.mxu0 0.0
      %2006 = vmatmul.mubr.f32.gmra.mrb[0].mxu0 %v1800
      %v2007 = vpop.f32.mrb[0].mxu0
      %v2008 = vadd.f32 0.0, %v2007
      %v2009 = vpop.f32.mrb[0].mxu0
      %2010 = vdwg.mxu0
      %v2011 = vmax.f32 %v1873, 0.0
      %v2012 = vmax.f32 %v1878, 0.0
      %v2013 = vmax.f32 %v1883, 0.0
      %v2014 = vmax.f32 %v1888, 0.0
      %v2015 = vmax.f32 %v1893, 0.0
      %v2016 = vmax.f32 %v1898, 0.0
      %v2017 = vmax.f32 %v1903, 0.0
      %v2018 = vmax.f32 %v1908, 0.0
      %v2019 = vmax.f32 %v1913, 0.0
      %v2020 = vmax.f32 %v1918, 0.0
      %v2021 = vmax.f32 %v1923, 0.0
      %v2022 = vmax.f32 %v1928, 0.0
      %v2023 = vmax.f32 %v1933, 0.0
      %v2024 = vmax.f32 %v1938, 0.0
      %v2025 = vmax.f32 %v1943, 0.0
      %v2026 = vmax.f32 %v1948, 0.0
      %v2027 = vmax.f32 %v1953, 0.0
      %v2028 = vmax.f32 %v1958, 0.0
      %v2029 = vmax.f32 %v1963, 0.0
      %v2030 = vmax.f32 %v1968, 0.0
      %v2031 = vmax.f32 %v1973, 0.0
      %v2032 = vmax.f32 %v1978, 0.0
      %v2033 = vmax.f32 %v1983, 0.0
      %v2034 = vmax.f32 %v1988, 0.0
      %v2035 = vmax.f32 %v1993, 0.0
      %v2036 = vmax.f32 %v1998, 0.0
      %v2037 = vmax.f32 %v2003, 0.0
      %v2038 = vmax.f32 %v2008, 0.0
      %2040 = vset.pattern.permute.xlu0 0
      %2041 = vperm.xlu0 %2040, %v228
      %v2042 = vpop.permute.xlu0 %2041
      %2045 = vset.pattern.permute.xlu0 0
      %2046 = vperm.xlu0 %2045, %v229
      %v2047 = vpop.permute.xlu0 %2046
      %2050 = vset.pattern.permute.xlu0 0
      %2051 = vperm.xlu0 %2050, %v230
      %v2052 = vpop.permute.xlu0 %2051
      %2055 = vset.pattern.permute.xlu0 0
      %2056 = vperm.xlu0 %2055, %v231
      %v2057 = vpop.permute.xlu0 %2056
      %2060 = vset.pattern.permute.xlu0 0
      %2061 = vperm.xlu0 %2060, %v232
      %v2062 = vpop.permute.xlu0 %2061
      %2065 = vset.pattern.permute.xlu0 0
      %2066 = vperm.xlu0 %2065, %v233
      %v2067 = vpop.permute.xlu0 %2066
      %2070 = vset.pattern.permute.xlu0 0
      %2071 = vperm.xlu0 %2070, %v234
      %v2072 = vpop.permute.xlu0 %2071
      %2075 = vset.pattern.permute.xlu0 0
      %2076 = vperm.xlu0 %2075, %v235
      %v2077 = vpop.permute.xlu0 %2076
      %2080 = vset.pattern.permute.xlu0 0
      %2081 = vperm.xlu0 %2080, %v236
      %v2082 = vpop.permute.xlu0 %2081
      %2085 = vset.pattern.permute.xlu0 0
      %2086 = vperm.xlu0 %2085, %v237
      %v2087 = vpop.permute.xlu0 %2086
      %2090 = vset.pattern.permute.xlu0 0
      %2091 = vperm.xlu0 %2090, %v238
      %v2092 = vpop.permute.xlu0 %2091
      %2095 = vset.pattern.permute.xlu0 0
      %2096 = vperm.xlu0 %2095, %v239
      %v2097 = vpop.permute.xlu0 %2096
      %2100 = vset.pattern.permute.xlu0 0
      %2101 = vperm.xlu0 %2100, %v240
      %v2102 = vpop.permute.xlu0 %2101
      %2105 = vset.pattern.permute.xlu0 0
      %2106 = vperm.xlu0 %2105, %v241
      %v2107 = vpop.permute.xlu0 %2106
      %2110 = vset.pattern.permute.xlu0 0
      %2111 = vperm.xlu0 %2110, %v242
      %v2112 = vpop.permute.xlu0 %2111
      %2115 = vset.pattern.permute.xlu0 0
      %2116 = vperm.xlu0 %2115, %v243
      %v2117 = vpop.permute.xlu0 %2116
      %2120 = vset.pattern.permute.xlu0 0
      %2121 = vperm.xlu0 %2120, %v244
      %v2122 = vpop.permute.xlu0 %2121
      %2125 = vset.pattern.permute.xlu0 0
      %2126 = vperm.xlu0 %2125, %v245
      %v2127 = vpop.permute.xlu0 %2126
      %2130 = vset.pattern.permute.xlu0 0
      %2131 = vperm.xlu0 %2130, %v246
      %v2132 = vpop.permute.xlu0 %2131
      %2135 = vset.pattern.permute.xlu0 0
      %2136 = vperm.xlu0 %2135, %v247
      %v2137 = vpop.permute.xlu0 %2136
      %2140 = vset.pattern.permute.xlu0 0
      %2141 = vperm.xlu0 %2140, %v248
      %v2142 = vpop.permute.xlu0 %2141
      %2145 = vset.pattern.permute.xlu0 0
      %2146 = vperm.xlu0 %2145, %v249
      %v2147 = vpop.permute.xlu0 %2146
      %2150 = vset.pattern.permute.xlu0 0
      %2151 = vperm.xlu0 %2150, %v250
      %v2152 = vpop.permute.xlu0 %2151
      %2155 = vset.pattern.permute.xlu0 0
      %2156 = vperm.xlu0 %2155, %v251
      %v2157 = vpop.permute.xlu0 %2156
      %2160 = vset.pattern.permute.xlu0 0
      %2161 = vperm.xlu0 %2160, %v252
      %v2162 = vpop.permute.xlu0 %2161
      %2165 = vset.pattern.permute.xlu0 0
      %2166 = vperm.xlu0 %2165, %v253
      %v2167 = vpop.permute.xlu0 %2166
      %2170 = vset.pattern.permute.xlu0 0
      %2171 = vperm.xlu0 %2170, %v254
      %v2172 = vpop.permute.xlu0 %2171
      %2175 = vset.pattern.permute.xlu0 0
      %2176 = vperm.xlu0 %2175, %v255
      %v2177 = vpop.permute.xlu0 %2176
      %v2179 = vmul.f32 %v2011, %v2042
      %v2180 = vmul.f32 %v2012, %v2047
      %v2181 = vmul.f32 %v2013, %v2052
      %v2182 = vmul.f32 %v2014, %v2057
      %v2183 = vmul.f32 %v2015, %v2062
      %v2184 = vmul.f32 %v2016, %v2067
      %v2185 = vmul.f32 %v2017, %v2072
      %v2186 = vmul.f32 %v2018, %v2077
      %v2187 = vmul.f32 %v2019, %v2082
      %v2188 = vmul.f32 %v2020, %v2087
      %v2189 = vmul.f32 %v2021, %v2092
      %v2190 = vmul.f32 %v2022, %v2097
      %v2191 = vmul.f32 %v2023, %v2102
      %v2192 = vmul.f32 %v2024, %v2107
      %v2193 = vmul.f32 %v2025, %v2112
      %v2194 = vmul.f32 %v2026, %v2117
      %v2195 = vmul.f32 %v2027, %v2122
      %v2196 = vmul.f32 %v2028, %v2127
      %v2197 = vmul.f32 %v2029, %v2132
      %v2198 = vmul.f32 %v2030, %v2137
      %v2199 = vmul.f32 %v2031, %v2142
      %v2200 = vmul.f32 %v2032, %v2147
      %v2201 = vmul.f32 %v2033, %v2152
      %v2202 = vmul.f32 %v2034, %v2157
      %v2203 = vmul.f32 %v2035, %v2162
      %v2204 = vmul.f32 %v2036, %v2167
      %v2205 = vmul.f32 %v2037, %v2172
      %v2206 = vmul.f32 %v2038, %v2177
      %2207 = vst.msk [vmem:[#allocation2 + $0x11] sm:$0xff] %vm256, %v2179
      %2208 = vst.msk [vmem:[#allocation2 + $0x19] sm:$0xff] %vm256, %v2180
      %2209 = vst.msk [vmem:[#allocation2 + $0x21] sm:$0xff] %vm256, %v2181
      %2210 = vst.msk [vmem:[#allocation2 + $0x29] sm:$0xff] %vm256, %v2182
      %2211 = vst.msk [vmem:[#allocation2 + $0x31] sm:$0xff] %vm256, %v2183
      %2212 = vst.msk [vmem:[#allocation2 + $0x39] sm:$0xff] %vm256, %v2184
      %2213 = vst.msk [vmem:[#allocation2 + $0x41] sm:$0xff] %vm256, %v2185
      %2214 = vst.msk [vmem:[#allocation2 + $0x49] sm:$0xff] %vm256, %v2186
      %2215 = vst.msk [vmem:[#allocation2 + $0x51] sm:$0xff] %vm256, %v2187
      %2216 = vst.msk [vmem:[#allocation2 + $0x59] sm:$0xff] %vm256, %v2188
      %2217 = vst.msk [vmem:[#allocation2 + $0x61] sm:$0xff] %vm256, %v2189
      %2218 = vst.msk [vmem:[#allocation2 + $0x69] sm:$0xff] %vm256, %v2190
      %2219 = vst.msk [vmem:[#allocation2 + $0x71] sm:$0xff] %vm256, %v2191
      %2220 = vst.msk [vmem:[#allocation2 + $0x79] sm:$0xff] %vm256, %v2192
      %2221 = vst.msk [vmem:[#allocation2 + $0x81] sm:$0xff] %vm256, %v2193
      %2222 = vst.msk [vmem:[#allocation2 + $0x89] sm:$0xff] %vm256, %v2194
      %2223 = vst.msk [vmem:[#allocation2 + $0x91] sm:$0xff] %vm256, %v2195
      %2224 = vst.msk [vmem:[#allocation2 + $0x99] sm:$0xff] %vm256, %v2196
      %2225 = vst.msk [vmem:[#allocation2 + $0xa1] sm:$0xff] %vm256, %v2197
      %2226 = vst.msk [vmem:[#allocation2 + $0xa9] sm:$0xff] %vm256, %v2198
      %2227 = vst.msk [vmem:[#allocation2 + $0xb1] sm:$0xff] %vm256, %v2199
      %2228 = vst.msk [vmem:[#allocation2 + $0xb9] sm:$0xff] %vm256, %v2200
      %2229 = vst.msk [vmem:[#allocation2 + $0xc1] sm:$0xff] %vm256, %v2201
      %2230 = vst.msk [vmem:[#allocation2 + $0xc9] sm:$0xff] %vm256, %v2202
      %2231 = vst.msk [vmem:[#allocation2 + $0xd1] sm:$0xff] %vm256, %v2203
      %2232 = vst.msk [vmem:[#allocation2 + $0xd9] sm:$0xff] %vm256, %v2204
      %2233 = vst.msk [vmem:[#allocation2 + $0xe1] sm:$0xff] %vm256, %v2205
      %2234 = vst.msk [vmem:[#allocation2 + $0xe9] sm:$0x3f] %vm322, %v2206
      %v2235 = vld [vmem:[#allocation2] sm:$0xff]
      %v2236 = vld [vmem:[#allocation2 + $0x8] sm:$0xff]
      %v2237 = vld [vmem:[#allocation2 + $0x10] sm:$0xff]
      %v2238 = vld [vmem:[#allocation2 + $0x18] sm:$0xff]
      %v2239 = vld [vmem:[#allocation2 + $0x20] sm:$0xff]
      %v2240 = vld [vmem:[#allocation2 + $0x28] sm:$0xff]
      %v2241 = vld [vmem:[#allocation2 + $0x30] sm:$0xff]
      %v2242 = vld [vmem:[#allocation2 + $0x38] sm:$0xff]
      %v2243 = vld [vmem:[#allocation2 + $0x40] sm:$0xff]
      %v2244 = vld [vmem:[#allocation2 + $0x48] sm:$0xff]
      %v2245 = vld [vmem:[#allocation2 + $0x50] sm:$0xff]
      %v2246 = vld [vmem:[#allocation2 + $0x58] sm:$0xff]
      %v2247 = vld [vmem:[#allocation2 + $0x60] sm:$0xff]
      %v2248 = vld [vmem:[#allocation2 + $0x68] sm:$0xff]
      %v2249 = vld [vmem:[#allocation2 + $0x70] sm:$0xff]
      %v2250 = vld [vmem:[#allocation2 + $0x78] sm:$0xff]
      %v2251 = vld [vmem:[#allocation2 + $0x80] sm:$0xff]
      %v2252 = vld [vmem:[#allocation2 + $0x88] sm:$0xff]
      %v2253 = vld [vmem:[#allocation2 + $0x90] sm:$0xff]
      %v2254 = vld [vmem:[#allocation2 + $0x98] sm:$0xff]
      %v2255 = vld [vmem:[#allocation2 + $0xa0] sm:$0xff]
      %v2256 = vld [vmem:[#allocation2 + $0xa8] sm:$0xff]
      %v2257 = vld [vmem:[#allocation2 + $0xb0] sm:$0xff]
      %v2258 = vld [vmem:[#allocation2 + $0xb8] sm:$0xff]
      %v2259 = vld [vmem:[#allocation2 + $0xc0] sm:$0xff]
      %v2260 = vld [vmem:[#allocation2 + $0xc8] sm:$0xff]
      %v2261 = vld [vmem:[#allocation2 + $0xd0] sm:$0xff]
      %v2262 = vld [vmem:[#allocation2 + $0xd8] sm:$0x3f]
      %2263 = vst.msk [vmem:[#allocation3] sm:$0xff] %vm256, %v2235
      %2264 = vst.msk [vmem:[#allocation3 + $0x8] sm:$0xff] %vm256, %v2236
      %2265 = vst.msk [vmem:[#allocation3 + $0x10] sm:$0xff] %vm256, %v2237
      %2266 = vst.msk [vmem:[#allocation3 + $0x18] sm:$0xff] %vm256, %v2238
      %2267 = vst.msk [vmem:[#allocation3 + $0x20] sm:$0xff] %vm256, %v2239
      %2268 = vst.msk [vmem:[#allocation3 + $0x28] sm:$0xff] %vm256, %v2240
      %2269 = vst.msk [vmem:[#allocation3 + $0x30] sm:$0xff] %vm256, %v2241
      %2270 = vst.msk [vmem:[#allocation3 + $0x38] sm:$0xff] %vm256, %v2242
      %2271 = vst.msk [vmem:[#allocation3 + $0x40] sm:$0xff] %vm256, %v2243
      %2272 = vst.msk [vmem:[#allocation3 + $0x48] sm:$0xff] %vm256, %v2244
      %2273 = vst.msk [vmem:[#allocation3 + $0x50] sm:$0xff] %vm256, %v2245
      %2274 = vst.msk [vmem:[#allocation3 + $0x58] sm:$0xff] %vm256, %v2246
      %2275 = vst.msk [vmem:[#allocation3 + $0x60] sm:$0xff] %vm256, %v2247
      %2276 = vst.msk [vmem:[#allocation3 + $0x68] sm:$0xff] %vm256, %v2248
      %2277 = vst.msk [vmem:[#allocation3 + $0x70] sm:$0xff] %vm256, %v2249
      %2278 = vst.msk [vmem:[#allocation3 + $0x78] sm:$0xff] %vm256, %v2250
      %2279 = vst.msk [vmem:[#allocation3 + $0x80] sm:$0xff] %vm256, %v2251
      %2280 = vst.msk [vmem:[#allocation3 + $0x88] sm:$0xff] %vm256, %v2252
      %2281 = vst.msk [vmem:[#allocation3 + $0x90] sm:$0xff] %vm256, %v2253
      %2282 = vst.msk [vmem:[#allocation3 + $0x98] sm:$0xff] %vm256, %v2254
      %2283 = vst.msk [vmem:[#allocation3 + $0xa0] sm:$0xff] %vm256, %v2255
      %2284 = vst.msk [vmem:[#allocation3 + $0xa8] sm:$0xff] %vm256, %v2256
      %2285 = vst.msk [vmem:[#allocation3 + $0xb0] sm:$0xff] %vm256, %v2257
      %2286 = vst.msk [vmem:[#allocation3 + $0xb8] sm:$0xff] %vm256, %v2258
      %2287 = vst.msk [vmem:[#allocation3 + $0xc0] sm:$0xff] %vm256, %v2259
      %2288 = vst.msk [vmem:[#allocation3 + $0xc8] sm:$0xff] %vm256, %v2260
      %2289 = vst.msk [vmem:[#allocation3 + $0xd0] sm:$0xff] %vm256, %v2261
      %2290 = vst.msk [vmem:[#allocation3 + $0xd8] sm:$0x3f] %vm322, %v2262
      %v2291 = vld [vmem:[#allocation2 + $0x1] sm:$0xff]
      %v2292 = vld [vmem:[#allocation2 + $0x9] sm:$0xff]
      %v2293 = vld [vmem:[#allocation2 + $0x11] sm:$0xff]
      %v2294 = vld [vmem:[#allocation2 + $0x19] sm:$0xff]
      %v2295 = vld [vmem:[#allocation2 + $0x21] sm:$0xff]
      %v2296 = vld [vmem:[#allocation2 + $0x29] sm:$0xff]
      %v2297 = vld [vmem:[#allocation2 + $0x31] sm:$0xff]
      %v2298 = vld [vmem:[#allocation2 + $0x39] sm:$0xff]
      %v2299 = vld [vmem:[#allocation2 + $0x41] sm:$0xff]
      %v2300 = vld [vmem:[#allocation2 + $0x49] sm:$0xff]
      %v2301 = vld [vmem:[#allocation2 + $0x51] sm:$0xff]
      %v2302 = vld [vmem:[#allocation2 + $0x59] sm:$0xff]
      %v2303 = vld [vmem:[#allocation2 + $0x61] sm:$0xff]
      %v2304 = vld [vmem:[#allocation2 + $0x69] sm:$0xff]
      %v2305 = vld [vmem:[#allocation2 + $0x71] sm:$0xff]
      %v2306 = vld [vmem:[#allocation2 + $0x79] sm:$0xff]
      %v2307 = vld [vmem:[#allocation2 + $0x81] sm:$0xff]
      %v2308 = vld [vmem:[#allocation2 + $0x89] sm:$0xff]
      %v2309 = vld [vmem:[#allocation2 + $0x91] sm:$0xff]
      %v2310 = vld [vmem:[#allocation2 + $0x99] sm:$0xff]
      %v2311 = vld [vmem:[#allocation2 + $0xa1] sm:$0xff]
      %v2312 = vld [vmem:[#allocation2 + $0xa9] sm:$0xff]
      %v2313 = vld [vmem:[#allocation2 + $0xb1] sm:$0xff]
      %v2314 = vld [vmem:[#allocation2 + $0xb9] sm:$0xff]
      %v2315 = vld [vmem:[#allocation2 + $0xc1] sm:$0xff]
      %v2316 = vld [vmem:[#allocation2 + $0xc9] sm:$0xff]
      %v2317 = vld [vmem:[#allocation2 + $0xd1] sm:$0xff]
      %v2318 = vld [vmem:[#allocation2 + $0xd9] sm:$0x3f]
      %2347 = vrot.lane.b32.xlu0 %v2291, 4
      %v2348 = vpop.permute.xlu0 %2347
      %2349 = vrot.lane.b32.xlu0 %v2292, 4
      %v2350 = vpop.permute.xlu0 %2349
      %2351 = vrot.lane.b32.xlu0 %v2293, 4
      %v2352 = vpop.permute.xlu0 %2351
      %2353 = vrot.lane.b32.xlu0 %v2294, 4
      %v2354 = vpop.permute.xlu0 %2353
      %2355 = vrot.lane.b32.xlu0 %v2295, 4
      %v2356 = vpop.permute.xlu0 %2355
      %2357 = vrot.lane.b32.xlu0 %v2296, 4
      %v2358 = vpop.permute.xlu0 %2357
      %2359 = vrot.lane.b32.xlu0 %v2297, 4
      %v2360 = vpop.permute.xlu0 %2359
      %2361 = vrot.lane.b32.xlu0 %v2298, 4
      %v2362 = vpop.permute.xlu0 %2361
      %2363 = vrot.lane.b32.xlu0 %v2299, 4
      %v2364 = vpop.permute.xlu0 %2363
      %2365 = vrot.lane.b32.xlu0 %v2300, 4
      %v2366 = vpop.permute.xlu0 %2365
      %2367 = vrot.lane.b32.xlu0 %v2301, 4
      %v2368 = vpop.permute.xlu0 %2367
      %2369 = vrot.lane.b32.xlu0 %v2302, 4
      %v2370 = vpop.permute.xlu0 %2369
      %2371 = vrot.lane.b32.xlu0 %v2303, 4
      %v2372 = vpop.permute.xlu0 %2371
      %2373 = vrot.lane.b32.xlu0 %v2304, 4
      %v2374 = vpop.permute.xlu0 %2373
      %2375 = vrot.lane.b32.xlu0 %v2305, 4
      %v2376 = vpop.permute.xlu0 %2375
      %2377 = vrot.lane.b32.xlu0 %v2306, 4
      %v2378 = vpop.permute.xlu0 %2377
      %2379 = vrot.lane.b32.xlu0 %v2307, 4
      %v2380 = vpop.permute.xlu0 %2379
      %2381 = vrot.lane.b32.xlu0 %v2308, 4
      %v2382 = vpop.permute.xlu0 %2381
      %2383 = vrot.lane.b32.xlu0 %v2309, 4
      %v2384 = vpop.permute.xlu0 %2383
      %2385 = vrot.lane.b32.xlu0 %v2310, 4
      %v2386 = vpop.permute.xlu0 %2385
      %2387 = vrot.lane.b32.xlu0 %v2311, 4
      %v2388 = vpop.permute.xlu0 %2387
      %2389 = vrot.lane.b32.xlu0 %v2312, 4
      %v2390 = vpop.permute.xlu0 %2389
      %2391 = vrot.lane.b32.xlu0 %v2313, 4
      %v2392 = vpop.permute.xlu0 %2391
      %2393 = vrot.lane.b32.xlu0 %v2314, 4
      %v2394 = vpop.permute.xlu0 %2393
      %2395 = vrot.lane.b32.xlu0 %v2315, 4
      %v2396 = vpop.permute.xlu0 %2395
      %2397 = vrot.lane.b32.xlu0 %v2316, 4
      %v2398 = vpop.permute.xlu0 %2397
      %2399 = vrot.lane.b32.xlu0 %v2317, 4
      %v2400 = vpop.permute.xlu0 %2399
      %2401 = vrot.lane.b32.xlu0 %v2318, 4
      %v2402 = vpop.permute.xlu0 %2401
      %2431 = vst.msk [vmem:[#allocation3] sm:$0xff] %vm464, %v2348
      %2432 = vst.msk [vmem:[#allocation3 + $0x8] sm:$0xff] %vm464, %v2350
      %2433 = vst.msk [vmem:[#allocation3 + $0x10] sm:$0xff] %vm464, %v2352
      %2434 = vst.msk [vmem:[#allocation3 + $0x18] sm:$0xff] %vm464, %v2354
      %2435 = vst.msk [vmem:[#allocation3 + $0x20] sm:$0xff] %vm464, %v2356
      %2436 = vst.msk [vmem:[#allocation3 + $0x28] sm:$0xff] %vm464, %v2358
      %2437 = vst.msk [vmem:[#allocation3 + $0x30] sm:$0xff] %vm464, %v2360
      %2438 = vst.msk [vmem:[#allocation3 + $0x38] sm:$0xff] %vm464, %v2362
      %2439 = vst.msk [vmem:[#allocation3 + $0x40] sm:$0xff] %vm464, %v2364
      %2440 = vst.msk [vmem:[#allocation3 + $0x48] sm:$0xff] %vm464, %v2366
      %2441 = vst.msk [vmem:[#allocation3 + $0x50] sm:$0xff] %vm464, %v2368
      %2442 = vst.msk [vmem:[#allocation3 + $0x58] sm:$0xff] %vm464, %v2370
      %2443 = vst.msk [vmem:[#allocation3 + $0x60] sm:$0xff] %vm464, %v2372
      %2444 = vst.msk [vmem:[#allocation3 + $0x68] sm:$0xff] %vm464, %v2374
      %2445 = vst.msk [vmem:[#allocation3 + $0x70] sm:$0xff] %vm464, %v2376
      %2446 = vst.msk [vmem:[#allocation3 + $0x78] sm:$0xff] %vm464, %v2378
      %2447 = vst.msk [vmem:[#allocation3 + $0x80] sm:$0xff] %vm464, %v2380
      %2448 = vst.msk [vmem:[#allocation3 + $0x88] sm:$0xff] %vm464, %v2382
      %2449 = vst.msk [vmem:[#allocation3 + $0x90] sm:$0xff] %vm464, %v2384
      %2450 = vst.msk [vmem:[#allocation3 + $0x98] sm:$0xff] %vm464, %v2386
      %2451 = vst.msk [vmem:[#allocation3 + $0xa0] sm:$0xff] %vm464, %v2388
      %2452 = vst.msk [vmem:[#allocation3 + $0xa8] sm:$0xff] %vm464, %v2390
      %2453 = vst.msk [vmem:[#allocation3 + $0xb0] sm:$0xff] %vm464, %v2392
      %2454 = vst.msk [vmem:[#allocation3 + $0xb8] sm:$0xff] %vm464, %v2394
      %2455 = vst.msk [vmem:[#allocation3 + $0xc0] sm:$0xff] %vm464, %v2396
      %2456 = vst.msk [vmem:[#allocation3 + $0xc8] sm:$0xff] %vm464, %v2398
      %2457 = vst.msk [vmem:[#allocation3 + $0xd0] sm:$0xff] %vm464, %v2400
      %2458 = vst.msk [vmem:[#allocation3 + $0xd8] sm:$0x3f] %vm492, %v2402
      %v2459 = vld [vmem:[#allocation2 + $0x2] sm:$0xff]
      %v2460 = vld [vmem:[#allocation2 + $0xa] sm:$0xff]
      %v2461 = vld [vmem:[#allocation2 + $0x12] sm:$0xff]
      %v2462 = vld [vmem:[#allocation2 + $0x1a] sm:$0xff]
      %v2463 = vld [vmem:[#allocation2 + $0x22] sm:$0xff]
      %v2464 = vld [vmem:[#allocation2 + $0x2a] sm:$0xff]
      %v2465 = vld [vmem:[#allocation2 + $0x32] sm:$0xff]
      %v2466 = vld [vmem:[#allocation2 + $0x3a] sm:$0xff]
      %v2467 = vld [vmem:[#allocation2 + $0x42] sm:$0xff]
      %v2468 = vld [vmem:[#allocation2 + $0x4a] sm:$0xff]
      %v2469 = vld [vmem:[#allocation2 + $0x52] sm:$0xff]
      %v2470 = vld [vmem:[#allocation2 + $0x5a] sm:$0xff]
      %v2471 = vld [vmem:[#allocation2 + $0x62] sm:$0xff]
      %v2472 = vld [vmem:[#allocation2 + $0x6a] sm:$0xff]
      %v2473 = vld [vmem:[#allocation2 + $0x72] sm:$0xff]
      %v2474 = vld [vmem:[#allocation2 + $0x7a] sm:$0xff]
      %v2475 = vld [vmem:[#allocation2 + $0x82] sm:$0xff]
      %v2476 = vld [vmem:[#allocation2 + $0x8a] sm:$0xff]
      %v2477 = vld [vmem:[#allocation2 + $0x92] sm:$0xff]
      %v2478 = vld [vmem:[#allocation2 + $0x9a] sm:$0xff]
      %v2479 = vld [vmem:[#allocation2 + $0xa2] sm:$0xff]
      %v2480 = vld [vmem:[#allocation2 + $0xaa] sm:$0xff]
      %v2481 = vld [vmem:[#allocation2 + $0xb2] sm:$0xff]
      %v2482 = vld [vmem:[#allocation2 + $0xba] sm:$0xff]
      %v2483 = vld [vmem:[#allocation2 + $0xc2] sm:$0xff]
      %v2484 = vld [vmem:[#allocation2 + $0xca] sm:$0xff]
      %v2485 = vld [vmem:[#allocation2 + $0xd2] sm:$0xff]
      %v2486 = vld [vmem:[#allocation2 + $0xda] sm:$0x3f]
      %2515 = vrot.lane.b32.xlu0 %v2459, 8
      %v2516 = vpop.permute.xlu0 %2515
      %2517 = vrot.lane.b32.xlu0 %v2460, 8
      %v2518 = vpop.permute.xlu0 %2517
      %2519 = vrot.lane.b32.xlu0 %v2461, 8
      %v2520 = vpop.permute.xlu0 %2519
      %2521 = vrot.lane.b32.xlu0 %v2462, 8
      %v2522 = vpop.permute.xlu0 %2521
      %2523 = vrot.lane.b32.xlu0 %v2463, 8
      %v2524 = vpop.permute.xlu0 %2523
      %2525 = vrot.lane.b32.xlu0 %v2464, 8
      %v2526 = vpop.permute.xlu0 %2525
      %2527 = vrot.lane.b32.xlu0 %v2465, 8
      %v2528 = vpop.permute.xlu0 %2527
      %2529 = vrot.lane.b32.xlu0 %v2466, 8
      %v2530 = vpop.permute.xlu0 %2529
      %2531 = vrot.lane.b32.xlu0 %v2467, 8
      %v2532 = vpop.permute.xlu0 %2531
      %2533 = vrot.lane.b32.xlu0 %v2468, 8
      %v2534 = vpop.permute.xlu0 %2533
      %2535 = vrot.lane.b32.xlu0 %v2469, 8
      %v2536 = vpop.permute.xlu0 %2535
      %2537 = vrot.lane.b32.xlu0 %v2470, 8
      %v2538 = vpop.permute.xlu0 %2537
      %2539 = vrot.lane.b32.xlu0 %v2471, 8
      %v2540 = vpop.permute.xlu0 %2539
      %2541 = vrot.lane.b32.xlu0 %v2472, 8
      %v2542 = vpop.permute.xlu0 %2541
      %2543 = vrot.lane.b32.xlu0 %v2473, 8
      %v2544 = vpop.permute.xlu0 %2543
      %2545 = vrot.lane.b32.xlu0 %v2474, 8
      %v2546 = vpop.permute.xlu0 %2545
      %2547 = vrot.lane.b32.xlu0 %v2475, 8
      %v2548 = vpop.permute.xlu0 %2547
      %2549 = vrot.lane.b32.xlu0 %v2476, 8
      %v2550 = vpop.permute.xlu0 %2549
      %2551 = vrot.lane.b32.xlu0 %v2477, 8
      %v2552 = vpop.permute.xlu0 %2551
      %2553 = vrot.lane.b32.xlu0 %v2478, 8
      %v2554 = vpop.permute.xlu0 %2553
      %2555 = vrot.lane.b32.xlu0 %v2479, 8
      %v2556 = vpop.permute.xlu0 %2555
      %2557 = vrot.lane.b32.xlu0 %v2480, 8
      %v2558 = vpop.permute.xlu0 %2557
      %2559 = vrot.lane.b32.xlu0 %v2481, 8
      %v2560 = vpop.permute.xlu0 %2559
      %2561 = vrot.lane.b32.xlu0 %v2482, 8
      %v2562 = vpop.permute.xlu0 %2561
      %2563 = vrot.lane.b32.xlu0 %v2483, 8
      %v2564 = vpop.permute.xlu0 %2563
      %2565 = vrot.lane.b32.xlu0 %v2484, 8
      %v2566 = vpop.permute.xlu0 %2565
      %2567 = vrot.lane.b32.xlu0 %v2485, 8
      %v2568 = vpop.permute.xlu0 %2567
      %2569 = vrot.lane.b32.xlu0 %v2486, 8
      %v2570 = vpop.permute.xlu0 %2569
      %2599 = vst.msk [vmem:[#allocation3] sm:$0xff] %vm634, %v2516
      %2600 = vst.msk [vmem:[#allocation3 + $0x8] sm:$0xff] %vm634, %v2518
      %2601 = vst.msk [vmem:[#allocation3 + $0x10] sm:$0xff] %vm634, %v2520
      %2602 = vst.msk [vmem:[#allocation3 + $0x18] sm:$0xff] %vm634, %v2522
      %2603 = vst.msk [vmem:[#allocation3 + $0x20] sm:$0xff] %vm634, %v2524
      %2604 = vst.msk [vmem:[#allocation3 + $0x28] sm:$0xff] %vm634, %v2526
      %2605 = vst.msk [vmem:[#allocation3 + $0x30] sm:$0xff] %vm634, %v2528
      %2606 = vst.msk [vmem:[#allocation3 + $0x38] sm:$0xff] %vm634, %v2530
      %2607 = vst.msk [vmem:[#allocation3 + $0x40] sm:$0xff] %vm634, %v2532
      %2608 = vst.msk [vmem:[#allocation3 + $0x48] sm:$0xff] %vm634, %v2534
      %2609 = vst.msk [vmem:[#allocation3 + $0x50] sm:$0xff] %vm634, %v2536
      %2610 = vst.msk [vmem:[#allocation3 + $0x58] sm:$0xff] %vm634, %v2538
      %2611 = vst.msk [vmem:[#allocation3 + $0x60] sm:$0xff] %vm634, %v2540
      %2612 = vst.msk [vmem:[#allocation3 + $0x68] sm:$0xff] %vm634, %v2542
      %2613 = vst.msk [vmem:[#allocation3 + $0x70] sm:$0xff] %vm634, %v2544
      %2614 = vst.msk [vmem:[#allocation3 + $0x78] sm:$0xff] %vm634, %v2546
      %2615 = vst.msk [vmem:[#allocation3 + $0x80] sm:$0xff] %vm634, %v2548
      %2616 = vst.msk [vmem:[#allocation3 + $0x88] sm:$0xff] %vm634, %v2550
      %2617 = vst.msk [vmem:[#allocation3 + $0x90] sm:$0xff] %vm634, %v2552
      %2618 = vst.msk [vmem:[#allocation3 + $0x98] sm:$0xff] %vm634, %v2554
      %2619 = vst.msk [vmem:[#allocation3 + $0xa0] sm:$0xff] %vm634, %v2556
      %2620 = vst.msk [vmem:[#allocation3 + $0xa8] sm:$0xff] %vm634, %v2558
      %2621 = vst.msk [vmem:[#allocation3 + $0xb0] sm:$0xff] %vm634, %v2560
      %2622 = vst.msk [vmem:[#allocation3 + $0xb8] sm:$0xff] %vm634, %v2562
      %2623 = vst.msk [vmem:[#allocation3 + $0xc0] sm:$0xff] %vm634, %v2564
      %2624 = vst.msk [vmem:[#allocation3 + $0xc8] sm:$0xff] %vm634, %v2566
      %2625 = vst.msk [vmem:[#allocation3 + $0xd0] sm:$0xff] %vm634, %v2568
      %2626 = vst.msk [vmem:[#allocation3 + $0xd8] sm:$0x3f] %vm662, %v2570
      %v2627 = vld [vmem:[#allocation2 + $0x10] sm:$0xff]
      %v2628 = vld [vmem:[#allocation2 + $0x18] sm:$0xff]
      %v2629 = vld [vmem:[#allocation2 + $0x20] sm:$0xff]
      %v2630 = vld [vmem:[#allocation2 + $0x28] sm:$0xff]
      %v2631 = vld [vmem:[#allocation2 + $0x30] sm:$0xff]
      %v2632 = vld [vmem:[#allocation2 + $0x38] sm:$0xff]
      %v2633 = vld [vmem:[#allocation2 + $0x40] sm:$0xff]
      %v2634 = vld [vmem:[#allocation2 + $0x48] sm:$0xff]
      %v2635 = vld [vmem:[#allocation2 + $0x50] sm:$0xff]
      %v2636 = vld [vmem:[#allocation2 + $0x58] sm:$0xff]
      %v2637 = vld [vmem:[#allocation2 + $0x60] sm:$0xff]
      %v2638 = vld [vmem:[#allocation2 + $0x68] sm:$0xff]
      %v2639 = vld [vmem:[#allocation2 + $0x70] sm:$0xff]
      %v2640 = vld [vmem:[#allocation2 + $0x78] sm:$0xff]
      %v2641 = vld [vmem:[#allocation2 + $0x80] sm:$0xff]
      %v2642 = vld [vmem:[#allocation2 + $0x88] sm:$0xff]
      %v2643 = vld [vmem:[#allocation2 + $0x90] sm:$0xff]
      %v2644 = vld [vmem:[#allocation2 + $0x98] sm:$0xff]
      %v2645 = vld [vmem:[#allocation2 + $0xa0] sm:$0xff]
      %v2646 = vld [vmem:[#allocation2 + $0xa8] sm:$0xff]
      %v2647 = vld [vmem:[#allocation2 + $0xb0] sm:$0xff]
      %v2648 = vld [vmem:[#allocation2 + $0xb8] sm:$0xff]
      %v2649 = vld [vmem:[#allocation2 + $0xc0] sm:$0xff]
      %v2650 = vld [vmem:[#allocation2 + $0xc8] sm:$0xff]
      %v2651 = vld [vmem:[#allocation2 + $0xd0] sm:$0xff]
      %v2652 = vld [vmem:[#allocation2 + $0xd8] sm:$0xff]
      %v2653 = vld [vmem:[#allocation2 + $0xe0] sm:$0xff]
      %v2654 = vld [vmem:[#allocation2 + $0xe8] sm:$0x3f]
      %2683 = vrot.lane.b32.xlu0 %v2627, 12
      %v2684 = vpop.permute.xlu0 %2683
      %2685 = vrot.lane.b32.xlu0 %v2628, 12
      %v2686 = vpop.permute.xlu0 %2685
      %2687 = vrot.lane.b32.xlu0 %v2629, 12
      %v2688 = vpop.permute.xlu0 %2687
      %2689 = vrot.lane.b32.xlu0 %v2630, 12
      %v2690 = vpop.permute.xlu0 %2689
      %2691 = vrot.lane.b32.xlu0 %v2631, 12
      %v2692 = vpop.permute.xlu0 %2691
      %2693 = vrot.lane.b32.xlu0 %v2632, 12
      %v2694 = vpop.permute.xlu0 %2693
      %2695 = vrot.lane.b32.xlu0 %v2633, 12
      %v2696 = vpop.permute.xlu0 %2695
      %2697 = vrot.lane.b32.xlu0 %v2634, 12
      %v2698 = vpop.permute.xlu0 %2697
      %2699 = vrot.lane.b32.xlu0 %v2635, 12
      %v2700 = vpop.permute.xlu0 %2699
      %2701 = vrot.lane.b32.xlu0 %v2636, 12
      %v2702 = vpop.permute.xlu0 %2701
      %2703 = vrot.lane.b32.xlu0 %v2637, 12
      %v2704 = vpop.permute.xlu0 %2703
      %2705 = vrot.lane.b32.xlu0 %v2638, 12
      %v2706 = vpop.permute.xlu0 %2705
      %2707 = vrot.lane.b32.xlu0 %v2639, 12
      %v2708 = vpop.permute.xlu0 %2707
      %2709 = vrot.lane.b32.xlu0 %v2640, 12
      %v2710 = vpop.permute.xlu0 %2709
      %2711 = vrot.lane.b32.xlu0 %v2641, 12
      %v2712 = vpop.permute.xlu0 %2711
      %2713 = vrot.lane.b32.xlu0 %v2642, 12
      %v2714 = vpop.permute.xlu0 %2713
      %2715 = vrot.lane.b32.xlu0 %v2643, 12
      %v2716 = vpop.permute.xlu0 %2715
      %2717 = vrot.lane.b32.xlu0 %v2644, 12
      %v2718 = vpop.permute.xlu0 %2717
      %2719 = vrot.lane.b32.xlu0 %v2645, 12
      %v2720 = vpop.permute.xlu0 %2719
      %2721 = vrot.lane.b32.xlu0 %v2646, 12
      %v2722 = vpop.permute.xlu0 %2721
      %2723 = vrot.lane.b32.xlu0 %v2647, 12
      %v2724 = vpop.permute.xlu0 %2723
      %2725 = vrot.lane.b32.xlu0 %v2648, 12
      %v2726 = vpop.permute.xlu0 %2725
      %2727 = vrot.lane.b32.xlu0 %v2649, 12
      %v2728 = vpop.permute.xlu0 %2727
      %2729 = vrot.lane.b32.xlu0 %v2650, 12
      %v2730 = vpop.permute.xlu0 %2729
      %2731 = vrot.lane.b32.xlu0 %v2651, 12
      %v2732 = vpop.permute.xlu0 %2731
      %2733 = vrot.lane.b32.xlu0 %v2652, 12
      %v2734 = vpop.permute.xlu0 %2733
      %2735 = vrot.lane.b32.xlu0 %v2653, 12
      %v2736 = vpop.permute.xlu0 %2735
      %2737 = vrot.lane.b32.xlu0 %v2654, 12
      %v2738 = vpop.permute.xlu0 %2737
      %2767 = vst.msk [vmem:[#allocation3] sm:$0xff] %vm804, %v2684
      %2768 = vst.msk [vmem:[#allocation3 + $0x8] sm:$0xff] %vm804, %v2686
      %2769 = vst.msk [vmem:[#allocation3 + $0x10] sm:$0xff] %vm804, %v2688
      %2770 = vst.msk [vmem:[#allocation3 + $0x18] sm:$0xff] %vm804, %v2690
      %2771 = vst.msk [vmem:[#allocation3 + $0x20] sm:$0xff] %vm804, %v2692
      %2772 = vst.msk [vmem:[#allocation3 + $0x28] sm:$0xff] %vm804, %v2694
      %2773 = vst.msk [vmem:[#allocation3 + $0x30] sm:$0xff] %vm804, %v2696
      %2774 = vst.msk [vmem:[#allocation3 + $0x38] sm:$0xff] %vm804, %v2698
      %2775 = vst.msk [vmem:[#allocation3 + $0x40] sm:$0xff] %vm804, %v2700
      %2776 = vst.msk [vmem:[#allocation3 + $0x48] sm:$0xff] %vm804, %v2702
      %2777 = vst.msk [vmem:[#allocation3 + $0x50] sm:$0xff] %vm804, %v2704
      %2778 = vst.msk [vmem:[#allocation3 + $0x58] sm:$0xff] %vm804, %v2706
      %2779 = vst.msk [vmem:[#allocation3 + $0x60] sm:$0xff] %vm804, %v2708
      %2780 = vst.msk [vmem:[#allocation3 + $0x68] sm:$0xff] %vm804, %v2710
      %2781 = vst.msk [vmem:[#allocation3 + $0x70] sm:$0xff] %vm804, %v2712
      %2782 = vst.msk [vmem:[#allocation3 + $0x78] sm:$0xff] %vm804, %v2714
      %2783 = vst.msk [vmem:[#allocation3 + $0x80] sm:$0xff] %vm804, %v2716
      %2784 = vst.msk [vmem:[#allocation3 + $0x88] sm:$0xff] %vm804, %v2718
      %2785 = vst.msk [vmem:[#allocation3 + $0x90] sm:$0xff] %vm804, %v2720
      %2786 = vst.msk [vmem:[#allocation3 + $0x98] sm:$0xff] %vm804, %v2722
      %2787 = vst.msk [vmem:[#allocation3 + $0xa0] sm:$0xff] %vm804, %v2724
      %2788 = vst.msk [vmem:[#allocation3 + $0xa8] sm:$0xff] %vm804, %v2726
      %2789 = vst.msk [vmem:[#allocation3 + $0xb0] sm:$0xff] %vm804, %v2728
      %2790 = vst.msk [vmem:[#allocation3 + $0xb8] sm:$0xff] %vm804, %v2730
      %2791 = vst.msk [vmem:[#allocation3 + $0xc0] sm:$0xff] %vm804, %v2732
      %2792 = vst.msk [vmem:[#allocation3 + $0xc8] sm:$0xff] %vm804, %v2734
      %2793 = vst.msk [vmem:[#allocation3 + $0xd0] sm:$0xff] %vm804, %v2736
      %2794 = vst.msk [vmem:[#allocation3 + $0xd8] sm:$0x3f] %vm832, %v2738
      %v2795 = vld [vmem:[#allocation2 + $0x11] sm:$0xff]
      %v2796 = vld [vmem:[#allocation2 + $0x19] sm:$0xff]
      %v2797 = vld [vmem:[#allocation2 + $0x21] sm:$0xff]
      %v2798 = vld [vmem:[#allocation2 + $0x29] sm:$0xff]
      %v2799 = vld [vmem:[#allocation2 + $0x31] sm:$0xff]
      %v2800 = vld [vmem:[#allocation2 + $0x39] sm:$0xff]
      %v2801 = vld [vmem:[#allocation2 + $0x41] sm:$0xff]
      %v2802 = vld [vmem:[#allocation2 + $0x49] sm:$0xff]
      %v2803 = vld [vmem:[#allocation2 + $0x51] sm:$0xff]
      %v2804 = vld [vmem:[#allocation2 + $0x59] sm:$0xff]
      %v2805 = vld [vmem:[#allocation2 + $0x61] sm:$0xff]
      %v2806 = vld [vmem:[#allocation2 + $0x69] sm:$0xff]
      %v2807 = vld [vmem:[#allocation2 + $0x71] sm:$0xff]
      %v2808 = vld [vmem:[#allocation2 + $0x79] sm:$0xff]
      %v2809 = vld [vmem:[#allocation2 + $0x81] sm:$0xff]
      %v2810 = vld [vmem:[#allocation2 + $0x89] sm:$0xff]
      %v2811 = vld [vmem:[#allocation2 + $0x91] sm:$0xff]
      %v2812 = vld [vmem:[#allocation2 + $0x99] sm:$0xff]
      %v2813 = vld [vmem:[#allocation2 + $0xa1] sm:$0xff]
      %v2814 = vld [vmem:[#allocation2 + $0xa9] sm:$0xff]
      %v2815 = vld [vmem:[#allocation2 + $0xb1] sm:$0xff]
      %v2816 = vld [vmem:[#allocation2 + $0xb9] sm:$0xff]
      %v2817 = vld [vmem:[#allocation2 + $0xc1] sm:$0xff]
      %v2818 = vld [vmem:[#allocation2 + $0xc9] sm:$0xff]
      %v2819 = vld [vmem:[#allocation2 + $0xd1] sm:$0xff]
      %v2820 = vld [vmem:[#allocation2 + $0xd9] sm:$0xff]
      %v2821 = vld [vmem:[#allocation2 + $0xe1] sm:$0xff]
      %v2822 = vld [vmem:[#allocation2 + $0xe9] sm:$0x3f]
      %2851 = vrot.lane.b32.xlu0 %v2795, 16
      %v2852 = vpop.permute.xlu0 %2851
      %2853 = vrot.lane.b32.xlu0 %v2796, 16
      %v2854 = vpop.permute.xlu0 %2853
      %2855 = vrot.lane.b32.xlu0 %v2797, 16
      %v2856 = vpop.permute.xlu0 %2855
      %2857 = vrot.lane.b32.xlu0 %v2798, 16
      %v2858 = vpop.permute.xlu0 %2857
      %2859 = vrot.lane.b32.xlu0 %v2799, 16
      %v2860 = vpop.permute.xlu0 %2859
      %2861 = vrot.lane.b32.xlu0 %v2800, 16
      %v2862 = vpop.permute.xlu0 %2861
      %2863 = vrot.lane.b32.xlu0 %v2801, 16
      %v2864 = vpop.permute.xlu0 %2863
      %2865 = vrot.lane.b32.xlu0 %v2802, 16
      %v2866 = vpop.permute.xlu0 %2865
      %2867 = vrot.lane.b32.xlu0 %v2803, 16
      %v2868 = vpop.permute.xlu0 %2867
      %2869 = vrot.lane.b32.xlu0 %v2804, 16
      %v2870 = vpop.permute.xlu0 %2869
      %2871 = vrot.lane.b32.xlu0 %v2805, 16
      %v2872 = vpop.permute.xlu0 %2871
      %2873 = vrot.lane.b32.xlu0 %v2806, 16
      %v2874 = vpop.permute.xlu0 %2873
      %2875 = vrot.lane.b32.xlu0 %v2807, 16
      %v2876 = vpop.permute.xlu0 %2875
      %2877 = vrot.lane.b32.xlu0 %v2808, 16
      %v2878 = vpop.permute.xlu0 %2877
      %2879 = vrot.lane.b32.xlu0 %v2809, 16
      %v2880 = vpop.permute.xlu0 %2879
      %2881 = vrot.lane.b32.xlu0 %v2810, 16
      %v2882 = vpop.permute.xlu0 %2881
      %2883 = vrot.lane.b32.xlu0 %v2811, 16
      %v2884 = vpop.permute.xlu0 %2883
      %2885 = vrot.lane.b32.xlu0 %v2812, 16
      %v2886 = vpop.permute.xlu0 %2885
      %2887 = vrot.lane.b32.xlu0 %v2813, 16
      %v2888 = vpop.permute.xlu0 %2887
      %2889 = vrot.lane.b32.xlu0 %v2814, 16
      %v2890 = vpop.permute.xlu0 %2889
      %2891 = vrot.lane.b32.xlu0 %v2815, 16
      %v2892 = vpop.permute.xlu0 %2891
      %2893 = vrot.lane.b32.xlu0 %v2816, 16
      %v2894 = vpop.permute.xlu0 %2893
      %2895 = vrot.lane.b32.xlu0 %v2817, 16
      %v2896 = vpop.permute.xlu0 %2895
      %2897 = vrot.lane.b32.xlu0 %v2818, 16
      %v2898 = vpop.permute.xlu0 %2897
      %2899 = vrot.lane.b32.xlu0 %v2819, 16
      %v2900 = vpop.permute.xlu0 %2899
      %2901 = vrot.lane.b32.xlu0 %v2820, 16
      %v2902 = vpop.permute.xlu0 %2901
      %2903 = vrot.lane.b32.xlu0 %v2821, 16
      %v2904 = vpop.permute.xlu0 %2903
      %2905 = vrot.lane.b32.xlu0 %v2822, 16
      %v2906 = vpop.permute.xlu0 %2905
      %2935 = vst.msk [vmem:[#allocation3] sm:$0xff] %vm974, %v2852
      %2936 = vst.msk [vmem:[#allocation3 + $0x8] sm:$0xff] %vm974, %v2854
      %2937 = vst.msk [vmem:[#allocation3 + $0x10] sm:$0xff] %vm974, %v2856
      %2938 = vst.msk [vmem:[#allocation3 + $0x18] sm:$0xff] %vm974, %v2858
      %2939 = vst.msk [vmem:[#allocation3 + $0x20] sm:$0xff] %vm974, %v2860
      %2940 = vst.msk [vmem:[#allocation3 + $0x28] sm:$0xff] %vm974, %v2862
      %2941 = vst.msk [vmem:[#allocation3 + $0x30] sm:$0xff] %vm974, %v2864
      %2942 = vst.msk [vmem:[#allocation3 + $0x38] sm:$0xff] %vm974, %v2866
      %2943 = vst.msk [vmem:[#allocation3 + $0x40] sm:$0xff] %vm974, %v2868
      %2944 = vst.msk [vmem:[#allocation3 + $0x48] sm:$0xff] %vm974, %v2870
      %2945 = vst.msk [vmem:[#allocation3 + $0x50] sm:$0xff] %vm974, %v2872
      %2946 = vst.msk [vmem:[#allocation3 + $0x58] sm:$0xff] %vm974, %v2874
      %2947 = vst.msk [vmem:[#allocation3 + $0x60] sm:$0xff] %vm974, %v2876
      %2948 = vst.msk [vmem:[#allocation3 + $0x68] sm:$0xff] %vm974, %v2878
      %2949 = vst.msk [vmem:[#allocation3 + $0x70] sm:$0xff] %vm974, %v2880
      %2950 = vst.msk [vmem:[#allocation3 + $0x78] sm:$0xff] %vm974, %v2882
      %2951 = vst.msk [vmem:[#allocation3 + $0x80] sm:$0xff] %vm974, %v2884
      %2952 = vst.msk [vmem:[#allocation3 + $0x88] sm:$0xff] %vm974, %v2886
      %2953 = vst.msk [vmem:[#allocation3 + $0x90] sm:$0xff] %vm974, %v2888
      %2954 = vst.msk [vmem:[#allocation3 + $0x98] sm:$0xff] %vm974, %v2890
      %2955 = vst.msk [vmem:[#allocation3 + $0xa0] sm:$0xff] %vm974, %v2892
      %2956 = vst.msk [vmem:[#allocation3 + $0xa8] sm:$0xff] %vm974, %v2894
      %2957 = vst.msk [vmem:[#allocation3 + $0xb0] sm:$0xff] %vm974, %v2896
      %2958 = vst.msk [vmem:[#allocation3 + $0xb8] sm:$0xff] %vm974, %v2898
      %2959 = vst.msk [vmem:[#allocation3 + $0xc0] sm:$0xff] %vm974, %v2900
      %2960 = vst.msk [vmem:[#allocation3 + $0xc8] sm:$0xff] %vm974, %v2902
      %2961 = vst.msk [vmem:[#allocation3 + $0xd0] sm:$0xff] %vm974, %v2904
      %2962 = vst.msk [vmem:[#allocation3 + $0xd8] sm:$0x3f] %vm1002, %v2906
      %v2963 = vld [vmem:[#allocation2 + $0x12] sm:$0xff]
      %v2964 = vld [vmem:[#allocation2 + $0x1a] sm:$0xff]
      %v2965 = vld [vmem:[#allocation2 + $0x22] sm:$0xff]
      %v2966 = vld [vmem:[#allocation2 + $0x2a] sm:$0xff]
      %v2967 = vld [vmem:[#allocation2 + $0x32] sm:$0xff]
      %v2968 = vld [vmem:[#allocation2 + $0x3a] sm:$0xff]
      %v2969 = vld [vmem:[#allocation2 + $0x42] sm:$0xff]
      %v2970 = vld [vmem:[#allocation2 + $0x4a] sm:$0xff]
      %v2971 = vld [vmem:[#allocation2 + $0x52] sm:$0xff]
      %v2972 = vld [vmem:[#allocation2 + $0x5a] sm:$0xff]
      %v2973 = vld [vmem:[#allocation2 + $0x62] sm:$0xff]
      %v2974 = vld [vmem:[#allocation2 + $0x6a] sm:$0xff]
      %v2975 = vld [vmem:[#allocation2 + $0x72] sm:$0xff]
      %v2976 = vld [vmem:[#allocation2 + $0x7a] sm:$0xff]
      %v2977 = vld [vmem:[#allocation2 + $0x82] sm:$0xff]
      %v2978 = vld [vmem:[#allocation2 + $0x8a] sm:$0xff]
      %v2979 = vld [vmem:[#allocation2 + $0x92] sm:$0xff]
      %v2980 = vld [vmem:[#allocation2 + $0x9a] sm:$0xff]
      %v2981 = vld [vmem:[#allocation2 + $0xa2] sm:$0xff]
      %v2982 = vld [vmem:[#allocation2 + $0xaa] sm:$0xff]
      %v2983 = vld [vmem:[#allocation2 + $0xb2] sm:$0xff]
      %v2984 = vld [vmem:[#allocation2 + $0xba] sm:$0xff]
      %v2985 = vld [vmem:[#allocation2 + $0xc2] sm:$0xff]
      %v2986 = vld [vmem:[#allocation2 + $0xca] sm:$0xff]
      %v2987 = vld [vmem:[#allocation2 + $0xd2] sm:$0xff]
      %v2988 = vld [vmem:[#allocation2 + $0xda] sm:$0xff]
      %v2989 = vld [vmem:[#allocation2 + $0xe2] sm:$0xff]
      %v2990 = vld [vmem:[#allocation2 + $0xea] sm:$0x3f]
      %3019 = vrot.lane.b32.xlu0 %v2963, 20
      %v3020 = vpop.permute.xlu0 %3019
      %3021 = vrot.lane.b32.xlu0 %v2964, 20
      %v3022 = vpop.permute.xlu0 %3021
      %3023 = vrot.lane.b32.xlu0 %v2965, 20
      %v3024 = vpop.permute.xlu0 %3023
      %3025 = vrot.lane.b32.xlu0 %v2966, 20
      %v3026 = vpop.permute.xlu0 %3025
      %3027 = vrot.lane.b32.xlu0 %v2967, 20
      %v3028 = vpop.permute.xlu0 %3027
      %3029 = vrot.lane.b32.xlu0 %v2968, 20
      %v3030 = vpop.permute.xlu0 %3029
      %3031 = vrot.lane.b32.xlu0 %v2969, 20
      %v3032 = vpop.permute.xlu0 %3031
      %3033 = vrot.lane.b32.xlu0 %v2970, 20
      %v3034 = vpop.permute.xlu0 %3033
      %3035 = vrot.lane.b32.xlu0 %v2971, 20
      %v3036 = vpop.permute.xlu0 %3035
      %3037 = vrot.lane.b32.xlu0 %v2972, 20
      %v3038 = vpop.permute.xlu0 %3037
      %3039 = vrot.lane.b32.xlu0 %v2973, 20
      %v3040 = vpop.permute.xlu0 %3039
      %3041 = vrot.lane.b32.xlu0 %v2974, 20
      %v3042 = vpop.permute.xlu0 %3041
      %3043 = vrot.lane.b32.xlu0 %v2975, 20
      %v3044 = vpop.permute.xlu0 %3043
      %3045 = vrot.lane.b32.xlu0 %v2976, 20
      %v3046 = vpop.permute.xlu0 %3045
      %3047 = vrot.lane.b32.xlu0 %v2977, 20
      %v3048 = vpop.permute.xlu0 %3047
      %3049 = vrot.lane.b32.xlu0 %v2978, 20
      %v3050 = vpop.permute.xlu0 %3049
      %3051 = vrot.lane.b32.xlu0 %v2979, 20
      %v3052 = vpop.permute.xlu0 %3051
      %3053 = vrot.lane.b32.xlu0 %v2980, 20
      %v3054 = vpop.permute.xlu0 %3053
      %3055 = vrot.lane.b32.xlu0 %v2981, 20
      %v3056 = vpop.permute.xlu0 %3055
      %3057 = vrot.lane.b32.xlu0 %v2982, 20
      %v3058 = vpop.permute.xlu0 %3057
      %3059 = vrot.lane.b32.xlu0 %v2983, 20
      %v3060 = vpop.permute.xlu0 %3059
      %3061 = vrot.lane.b32.xlu0 %v2984, 20
      %v3062 = vpop.permute.xlu0 %3061
      %3063 = vrot.lane.b32.xlu0 %v2985, 20
      %v3064 = vpop.permute.xlu0 %3063
      %3065 = vrot.lane.b32.xlu0 %v2986, 20
      %v3066 = vpop.permute.xlu0 %3065
      %3067 = vrot.lane.b32.xlu0 %v2987, 20
      %v3068 = vpop.permute.xlu0 %3067
      %3069 = vrot.lane.b32.xlu0 %v2988, 20
      %v3070 = vpop.permute.xlu0 %3069
      %3071 = vrot.lane.b32.xlu0 %v2989, 20
      %v3072 = vpop.permute.xlu0 %3071
      %3073 = vrot.lane.b32.xlu0 %v2990, 20
      %v3074 = vpop.permute.xlu0 %3073
      %3103 = vst.msk [vmem:[#allocation3] sm:$0xff] %vm1144, %v3020
      %3104 = vst.msk [vmem:[#allocation3 + $0x8] sm:$0xff] %vm1144, %v3022
      %3105 = vst.msk [vmem:[#allocation3 + $0x10] sm:$0xff] %vm1144, %v3024
      %3106 = vst.msk [vmem:[#allocation3 + $0x18] sm:$0xff] %vm1144, %v3026
      %3107 = vst.msk [vmem:[#allocation3 + $0x20] sm:$0xff] %vm1144, %v3028
      %3108 = vst.msk [vmem:[#allocation3 + $0x28] sm:$0xff] %vm1144, %v3030
      %3109 = vst.msk [vmem:[#allocation3 + $0x30] sm:$0xff] %vm1144, %v3032
      %3110 = vst.msk [vmem:[#allocation3 + $0x38] sm:$0xff] %vm1144, %v3034
      %3111 = vst.msk [vmem:[#allocation3 + $0x40] sm:$0xff] %vm1144, %v3036
      %3112 = vst.msk [vmem:[#allocation3 + $0x48] sm:$0xff] %vm1144, %v3038
      %3113 = vst.msk [vmem:[#allocation3 + $0x50] sm:$0xff] %vm1144, %v3040
      %3114 = vst.msk [vmem:[#allocation3 + $0x58] sm:$0xff] %vm1144, %v3042
      %3115 = vst.msk [vmem:[#allocation3 + $0x60] sm:$0xff] %vm1144, %v3044
      %3116 = vst.msk [vmem:[#allocation3 + $0x68] sm:$0xff] %vm1144, %v3046
      %3117 = vst.msk [vmem:[#allocation3 + $0x70] sm:$0xff] %vm1144, %v3048
      %3118 = vst.msk [vmem:[#allocation3 + $0x78] sm:$0xff] %vm1144, %v3050
      %3119 = vst.msk [vmem:[#allocation3 + $0x80] sm:$0xff] %vm1144, %v3052
      %3120 = vst.msk [vmem:[#allocation3 + $0x88] sm:$0xff] %vm1144, %v3054
      %3121 = vst.msk [vmem:[#allocation3 + $0x90] sm:$0xff] %vm1144, %v3056
      %3122 = vst.msk [vmem:[#allocation3 + $0x98] sm:$0xff] %vm1144, %v3058
      %3123 = vst.msk [vmem:[#allocation3 + $0xa0] sm:$0xff] %vm1144, %v3060
      %3124 = vst.msk [vmem:[#allocation3 + $0xa8] sm:$0xff] %vm1144, %v3062
      %3125 = vst.msk [vmem:[#allocation3 + $0xb0] sm:$0xff] %vm1144, %v3064
      %3126 = vst.msk [vmem:[#allocation3 + $0xb8] sm:$0xff] %vm1144, %v3066
      %3127 = vst.msk [vmem:[#allocation3 + $0xc0] sm:$0xff] %vm1144, %v3068
      %3128 = vst.msk [vmem:[#allocation3 + $0xc8] sm:$0xff] %vm1144, %v3070
      %3129 = vst.msk [vmem:[#allocation3 + $0xd0] sm:$0xff] %vm1144, %v3072
      %3130 = vst.msk [vmem:[#allocation3 + $0xd8] sm:$0x3f] %vm1172, %v3074
      %v3131 = vld [vmem:[#allocation2 + $0x20] sm:$0xff]
      %v3132 = vld [vmem:[#allocation2 + $0x28] sm:$0xff]
      %v3133 = vld [vmem:[#allocation2 + $0x30] sm:$0xff]
      %v3134 = vld [vmem:[#allocation2 + $0x38] sm:$0xff]
      %v3135 = vld [vmem:[#allocation2 + $0x40] sm:$0xff]
      %v3136 = vld [vmem:[#allocation2 + $0x48] sm:$0xff]
      %v3137 = vld [vmem:[#allocation2 + $0x50] sm:$0xff]
      %v3138 = vld [vmem:[#allocation2 + $0x58] sm:$0xff]
      %v3139 = vld [vmem:[#allocation2 + $0x60] sm:$0xff]
      %v3140 = vld [vmem:[#allocation2 + $0x68] sm:$0xff]
      %v3141 = vld [vmem:[#allocation2 + $0x70] sm:$0xff]
      %v3142 = vld [vmem:[#allocation2 + $0x78] sm:$0xff]
      %v3143 = vld [vmem:[#allocation2 + $0x80] sm:$0xff]
      %v3144 = vld [vmem:[#allocation2 + $0x88] sm:$0xff]
      %v3145 = vld [vmem:[#allocation2 + $0x90] sm:$0xff]
      %v3146 = vld [vmem:[#allocation2 + $0x98] sm:$0xff]
      %v3147 = vld [vmem:[#allocation2 + $0xa0] sm:$0xff]
      %v3148 = vld [vmem:[#allocation2 + $0xa8] sm:$0xff]
      %v3149 = vld [vmem:[#allocation2 + $0xb0] sm:$0xff]
      %v3150 = vld [vmem:[#allocation2 + $0xb8] sm:$0xff]
      %v3151 = vld [vmem:[#allocation2 + $0xc0] sm:$0xff]
      %v3152 = vld [vmem:[#allocation2 + $0xc8] sm:$0xff]
      %v3153 = vld [vmem:[#allocation2 + $0xd0] sm:$0xff]
      %v3154 = vld [vmem:[#allocation2 + $0xd8] sm:$0xff]
      %v3155 = vld [vmem:[#allocation2 + $0xe0] sm:$0xff]
      %v3156 = vld [vmem:[#allocation2 + $0xe8] sm:$0xff]
      %v3157 = vld [vmem:[#allocation2 + $0xf0] sm:$0xff]
      %v3158 = vld [vmem:[#allocation2 + $0xf8] sm:$0x3f]
      %3187 = vrot.lane.b32.xlu0 %v3131, 24
      %v3188 = vpop.permute.xlu0 %3187
      %3189 = vrot.lane.b32.xlu0 %v3132, 24
      %v3190 = vpop.permute.xlu0 %3189
      %3191 = vrot.lane.b32.xlu0 %v3133, 24
      %v3192 = vpop.permute.xlu0 %3191
      %3193 = vrot.lane.b32.xlu0 %v3134, 24
      %v3194 = vpop.permute.xlu0 %3193
      %3195 = vrot.lane.b32.xlu0 %v3135, 24
      %v3196 = vpop.permute.xlu0 %3195
      %3197 = vrot.lane.b32.xlu0 %v3136, 24
      %v3198 = vpop.permute.xlu0 %3197
      %3199 = vrot.lane.b32.xlu0 %v3137, 24
      %v3200 = vpop.permute.xlu0 %3199
      %3201 = vrot.lane.b32.xlu0 %v3138, 24
      %v3202 = vpop.permute.xlu0 %3201
      %3203 = vrot.lane.b32.xlu0 %v3139, 24
      %v3204 = vpop.permute.xlu0 %3203
      %3205 = vrot.lane.b32.xlu0 %v3140, 24
      %v3206 = vpop.permute.xlu0 %3205
      %3207 = vrot.lane.b32.xlu0 %v3141, 24
      %v3208 = vpop.permute.xlu0 %3207
      %3209 = vrot.lane.b32.xlu0 %v3142, 24
      %v3210 = vpop.permute.xlu0 %3209
      %3211 = vrot.lane.b32.xlu0 %v3143, 24
      %v3212 = vpop.permute.xlu0 %3211
      %3213 = vrot.lane.b32.xlu0 %v3144, 24
      %v3214 = vpop.permute.xlu0 %3213
      %3215 = vrot.lane.b32.xlu0 %v3145, 24
      %v3216 = vpop.permute.xlu0 %3215
      %3217 = vrot.lane.b32.xlu0 %v3146, 24
      %v3218 = vpop.permute.xlu0 %3217
      %3219 = vrot.lane.b32.xlu0 %v3147, 24
      %v3220 = vpop.permute.xlu0 %3219
      %3221 = vrot.lane.b32.xlu0 %v3148, 24
      %v3222 = vpop.permute.xlu0 %3221
      %3223 = vrot.lane.b32.xlu0 %v3149, 24
      %v3224 = vpop.permute.xlu0 %3223
      %3225 = vrot.lane.b32.xlu0 %v3150, 24
      %v3226 = vpop.permute.xlu0 %3225
      %3227 = vrot.lane.b32.xlu0 %v3151, 24
      %v3228 = vpop.permute.xlu0 %3227
      %3229 = vrot.lane.b32.xlu0 %v3152, 24
      %v3230 = vpop.permute.xlu0 %3229
      %3231 = vrot.lane.b32.xlu0 %v3153, 24
      %v3232 = vpop.permute.xlu0 %3231
      %3233 = vrot.lane.b32.xlu0 %v3154, 24
      %v3234 = vpop.permute.xlu0 %3233
      %3235 = vrot.lane.b32.xlu0 %v3155, 24
      %v3236 = vpop.permute.xlu0 %3235
      %3237 = vrot.lane.b32.xlu0 %v3156, 24
      %v3238 = vpop.permute.xlu0 %3237
      %3239 = vrot.lane.b32.xlu0 %v3157, 24
      %v3240 = vpop.permute.xlu0 %3239
      %3241 = vrot.lane.b32.xlu0 %v3158, 24
      %v3242 = vpop.permute.xlu0 %3241
      %3271 = vst.msk [vmem:[#allocation3] sm:$0xff] %vm1314, %v3188
      %3272 = vst.msk [vmem:[#allocation3 + $0x8] sm:$0xff] %vm1314, %v3190
      %3273 = vst.msk [vmem:[#allocation3 + $0x10] sm:$0xff] %vm1314, %v3192
      %3274 = vst.msk [vmem:[#allocation3 + $0x18] sm:$0xff] %vm1314, %v3194
      %3275 = vst.msk [vmem:[#allocation3 + $0x20] sm:$0xff] %vm1314, %v3196
      %3276 = vst.msk [vmem:[#allocation3 + $0x28] sm:$0xff] %vm1314, %v3198
      %3277 = vst.msk [vmem:[#allocation3 + $0x30] sm:$0xff] %vm1314, %v3200
      %3278 = vst.msk [vmem:[#allocation3 + $0x38] sm:$0xff] %vm1314, %v3202
      %3279 = vst.msk [vmem:[#allocation3 + $0x40] sm:$0xff] %vm1314, %v3204
      %3280 = vst.msk [vmem:[#allocation3 + $0x48] sm:$0xff] %vm1314, %v3206
      %3281 = vst.msk [vmem:[#allocation3 + $0x50] sm:$0xff] %vm1314, %v3208
      %3282 = vst.msk [vmem:[#allocation3 + $0x58] sm:$0xff] %vm1314, %v3210
      %3283 = vst.msk [vmem:[#allocation3 + $0x60] sm:$0xff] %vm1314, %v3212
      %3284 = vst.msk [vmem:[#allocation3 + $0x68] sm:$0xff] %vm1314, %v3214
      %3285 = vst.msk [vmem:[#allocation3 + $0x70] sm:$0xff] %vm1314, %v3216
      %3286 = vst.msk [vmem:[#allocation3 + $0x78] sm:$0xff] %vm1314, %v3218
      %3287 = vst.msk [vmem:[#allocation3 + $0x80] sm:$0xff] %vm1314, %v3220
      %3288 = vst.msk [vmem:[#allocation3 + $0x88] sm:$0xff] %vm1314, %v3222
      %3289 = vst.msk [vmem:[#allocation3 + $0x90] sm:$0xff] %vm1314, %v3224
      %3290 = vst.msk [vmem:[#allocation3 + $0x98] sm:$0xff] %vm1314, %v3226
      %3291 = vst.msk [vmem:[#allocation3 + $0xa0] sm:$0xff] %vm1314, %v3228
      %3292 = vst.msk [vmem:[#allocation3 + $0xa8] sm:$0xff] %vm1314, %v3230
      %3293 = vst.msk [vmem:[#allocation3 + $0xb0] sm:$0xff] %vm1314, %v3232
      %3294 = vst.msk [vmem:[#allocation3 + $0xb8] sm:$0xff] %vm1314, %v3234
      %3295 = vst.msk [vmem:[#allocation3 + $0xc0] sm:$0xff] %vm1314, %v3236
      %3296 = vst.msk [vmem:[#allocation3 + $0xc8] sm:$0xff] %vm1314, %v3238
      %3297 = vst.msk [vmem:[#allocation3 + $0xd0] sm:$0xff] %vm1314, %v3240
      %3298 = vst.msk [vmem:[#allocation3 + $0xd8] sm:$0x3f] %vm1342, %v3242
      %v3299 = vld [vmem:[#allocation2 + $0x21] sm:$0xff]
      %v3300 = vld [vmem:[#allocation2 + $0x29] sm:$0xff]
      %v3301 = vld [vmem:[#allocation2 + $0x31] sm:$0xff]
      %v3302 = vld [vmem:[#allocation2 + $0x39] sm:$0xff]
      %v3303 = vld [vmem:[#allocation2 + $0x41] sm:$0xff]
      %v3304 = vld [vmem:[#allocation2 + $0x49] sm:$0xff]
      %v3305 = vld [vmem:[#allocation2 + $0x51] sm:$0xff]
      %v3306 = vld [vmem:[#allocation2 + $0x59] sm:$0xff]
      %v3307 = vld [vmem:[#allocation2 + $0x61] sm:$0xff]
      %v3308 = vld [vmem:[#allocation2 + $0x69] sm:$0xff]
      %v3309 = vld [vmem:[#allocation2 + $0x71] sm:$0xff]
      %v3310 = vld [vmem:[#allocation2 + $0x79] sm:$0xff]
      %v3311 = vld [vmem:[#allocation2 + $0x81] sm:$0xff]
      %v3312 = vld [vmem:[#allocation2 + $0x89] sm:$0xff]
      %v3313 = vld [vmem:[#allocation2 + $0x91] sm:$0xff]
      %v3314 = vld [vmem:[#allocation2 + $0x99] sm:$0xff]
      %v3315 = vld [vmem:[#allocation2 + $0xa1] sm:$0xff]
      %v3316 = vld [vmem:[#allocation2 + $0xa9] sm:$0xff]
      %v3317 = vld [vmem:[#allocation2 + $0xb1] sm:$0xff]
      %v3318 = vld [vmem:[#allocation2 + $0xb9] sm:$0xff]
      %v3319 = vld [vmem:[#allocation2 + $0xc1] sm:$0xff]
      %v3320 = vld [vmem:[#allocation2 + $0xc9] sm:$0xff]
      %v3321 = vld [vmem:[#allocation2 + $0xd1] sm:$0xff]
      %v3322 = vld [vmem:[#allocation2 + $0xd9] sm:$0xff]
      %v3323 = vld [vmem:[#allocation2 + $0xe1] sm:$0xff]
      %v3324 = vld [vmem:[#allocation2 + $0xe9] sm:$0xff]
      %v3325 = vld [vmem:[#allocation2 + $0xf1] sm:$0xff]
      %v3326 = vld [vmem:[#allocation2 + $0xf9] sm:$0x3f]
      %3355 = vrot.lane.b32.xlu0 %v3299, 28
      %v3356 = vpop.permute.xlu0 %3355
      %3357 = vrot.lane.b32.xlu0 %v3300, 28
      %v3358 = vpop.permute.xlu0 %3357
      %3359 = vrot.lane.b32.xlu0 %v3301, 28
      %v3360 = vpop.permute.xlu0 %3359
      %3361 = vrot.lane.b32.xlu0 %v3302, 28
      %v3362 = vpop.permute.xlu0 %3361
      %3363 = vrot.lane.b32.xlu0 %v3303, 28
      %v3364 = vpop.permute.xlu0 %3363
      %3365 = vrot.lane.b32.xlu0 %v3304, 28
      %v3366 = vpop.permute.xlu0 %3365
      %3367 = vrot.lane.b32.xlu0 %v3305, 28
      %v3368 = vpop.permute.xlu0 %3367
      %3369 = vrot.lane.b32.xlu0 %v3306, 28
      %v3370 = vpop.permute.xlu0 %3369
      %3371 = vrot.lane.b32.xlu0 %v3307, 28
      %v3372 = vpop.permute.xlu0 %3371
      %3373 = vrot.lane.b32.xlu0 %v3308, 28
      %v3374 = vpop.permute.xlu0 %3373
      %3375 = vrot.lane.b32.xlu0 %v3309, 28
      %v3376 = vpop.permute.xlu0 %3375
      %3377 = vrot.lane.b32.xlu0 %v3310, 28
      %v3378 = vpop.permute.xlu0 %3377
      %3379 = vrot.lane.b32.xlu0 %v3311, 28
      %v3380 = vpop.permute.xlu0 %3379
      %3381 = vrot.lane.b32.xlu0 %v3312, 28
      %v3382 = vpop.permute.xlu0 %3381
      %3383 = vrot.lane.b32.xlu0 %v3313, 28
      %v3384 = vpop.permute.xlu0 %3383
      %3385 = vrot.lane.b32.xlu0 %v3314, 28
      %v3386 = vpop.permute.xlu0 %3385
      %3387 = vrot.lane.b32.xlu0 %v3315, 28
      %v3388 = vpop.permute.xlu0 %3387
      %3389 = vrot.lane.b32.xlu0 %v3316, 28
      %v3390 = vpop.permute.xlu0 %3389
      %3391 = vrot.lane.b32.xlu0 %v3317, 28
      %v3392 = vpop.permute.xlu0 %3391
      %3393 = vrot.lane.b32.xlu0 %v3318, 28
      %v3394 = vpop.permute.xlu0 %3393
      %3395 = vrot.lane.b32.xlu0 %v3319, 28
      %v3396 = vpop.permute.xlu0 %3395
      %3397 = vrot.lane.b32.xlu0 %v3320, 28
      %v3398 = vpop.permute.xlu0 %3397
      %3399 = vrot.lane.b32.xlu0 %v3321, 28
      %v3400 = vpop.permute.xlu0 %3399
      %3401 = vrot.lane.b32.xlu0 %v3322, 28
      %v3402 = vpop.permute.xlu0 %3401
      %3403 = vrot.lane.b32.xlu0 %v3323, 28
      %v3404 = vpop.permute.xlu0 %3403
      %3405 = vrot.lane.b32.xlu0 %v3324, 28
      %v3406 = vpop.permute.xlu0 %3405
      %3407 = vrot.lane.b32.xlu0 %v3325, 28
      %v3408 = vpop.permute.xlu0 %3407
      %3409 = vrot.lane.b32.xlu0 %v3326, 28
      %v3410 = vpop.permute.xlu0 %3409
      %3439 = vst.msk [vmem:[#allocation3] sm:$0xff] %vm1484, %v3356
      %3440 = vst.msk [vmem:[#allocation3 + $0x8] sm:$0xff] %vm1484, %v3358
      %3441 = vst.msk [vmem:[#allocation3 + $0x10] sm:$0xff] %vm1484, %v3360
      %3442 = vst.msk [vmem:[#allocation3 + $0x18] sm:$0xff] %vm1484, %v3362
      %3443 = vst.msk [vmem:[#allocation3 + $0x20] sm:$0xff] %vm1484, %v3364
      %3444 = vst.msk [vmem:[#allocation3 + $0x28] sm:$0xff] %vm1484, %v3366
      %3445 = vst.msk [vmem:[#allocation3 + $0x30] sm:$0xff] %vm1484, %v3368
      %3446 = vst.msk [vmem:[#allocation3 + $0x38] sm:$0xff] %vm1484, %v3370
      %3447 = vst.msk [vmem:[#allocation3 + $0x40] sm:$0xff] %vm1484, %v3372
      %3448 = vst.msk [vmem:[#allocation3 + $0x48] sm:$0xff] %vm1484, %v3374
      %3449 = vst.msk [vmem:[#allocation3 + $0x50] sm:$0xff] %vm1484, %v3376
      %3450 = vst.msk [vmem:[#allocation3 + $0x58] sm:$0xff] %vm1484, %v3378
      %3451 = vst.msk [vmem:[#allocation3 + $0x60] sm:$0xff] %vm1484, %v3380
      %3452 = vst.msk [vmem:[#allocation3 + $0x68] sm:$0xff] %vm1484, %v3382
      %3453 = vst.msk [vmem:[#allocation3 + $0x70] sm:$0xff] %vm1484, %v3384
      %3454 = vst.msk [vmem:[#allocation3 + $0x78] sm:$0xff] %vm1484, %v3386
      %3455 = vst.msk [vmem:[#allocation3 + $0x80] sm:$0xff] %vm1484, %v3388
      %3456 = vst.msk [vmem:[#allocation3 + $0x88] sm:$0xff] %vm1484, %v3390
      %3457 = vst.msk [vmem:[#allocation3 + $0x90] sm:$0xff] %vm1484, %v3392
      %3458 = vst.msk [vmem:[#allocation3 + $0x98] sm:$0xff] %vm1484, %v3394
      %3459 = vst.msk [vmem:[#allocation3 + $0xa0] sm:$0xff] %vm1484, %v3396
      %3460 = vst.msk [vmem:[#allocation3 + $0xa8] sm:$0xff] %vm1484, %v3398
      %3461 = vst.msk [vmem:[#allocation3 + $0xb0] sm:$0xff] %vm1484, %v3400
      %3462 = vst.msk [vmem:[#allocation3 + $0xb8] sm:$0xff] %vm1484, %v3402
      %3463 = vst.msk [vmem:[#allocation3 + $0xc0] sm:$0xff] %vm1484, %v3404
      %3464 = vst.msk [vmem:[#allocation3 + $0xc8] sm:$0xff] %vm1484, %v3406
      %3465 = vst.msk [vmem:[#allocation3 + $0xd0] sm:$0xff] %vm1484, %v3408
      %3466 = vst.msk [vmem:[#allocation3 + $0xd8] sm:$0x3f] %vm1512, %v3410
      %v3467 = vld [vmem:[#allocation2 + $0x22] sm:$0xff]
      %v3468 = vld [vmem:[#allocation2 + $0x2a] sm:$0xff]
      %v3469 = vld [vmem:[#allocation2 + $0x32] sm:$0xff]
      %v3470 = vld [vmem:[#allocation2 + $0x3a] sm:$0xff]
      %v3471 = vld [vmem:[#allocation2 + $0x42] sm:$0xff]
      %v3472 = vld [vmem:[#allocation2 + $0x4a] sm:$0xff]
      %v3473 = vld [vmem:[#allocation2 + $0x52] sm:$0xff]
      %v3474 = vld [vmem:[#allocation2 + $0x5a] sm:$0xff]
      %v3475 = vld [vmem:[#allocation2 + $0x62] sm:$0xff]
      %v3476 = vld [vmem:[#allocation2 + $0x6a] sm:$0xff]
      %v3477 = vld [vmem:[#allocation2 + $0x72] sm:$0xff]
      %v3478 = vld [vmem:[#allocation2 + $0x7a] sm:$0xff]
      %v3479 = vld [vmem:[#allocation2 + $0x82] sm:$0xff]
      %v3480 = vld [vmem:[#allocation2 + $0x8a] sm:$0xff]
      %v3481 = vld [vmem:[#allocation2 + $0x92] sm:$0xff]
      %v3482 = vld [vmem:[#allocation2 + $0x9a] sm:$0xff]
      %v3483 = vld [vmem:[#allocation2 + $0xa2] sm:$0xff]
      %v3484 = vld [vmem:[#allocation2 + $0xaa] sm:$0xff]
      %v3485 = vld [vmem:[#allocation2 + $0xb2] sm:$0xff]
      %v3486 = vld [vmem:[#allocation2 + $0xba] sm:$0xff]
      %v3487 = vld [vmem:[#allocation2 + $0xc2] sm:$0xff]
      %v3488 = vld [vmem:[#allocation2 + $0xca] sm:$0xff]
      %v3489 = vld [vmem:[#allocation2 + $0xd2] sm:$0xff]
      %v3490 = vld [vmem:[#allocation2 + $0xda] sm:$0xff]
      %v3491 = vld [vmem:[#allocation2 + $0xe2] sm:$0xff]
      %v3492 = vld [vmem:[#allocation2 + $0xea] sm:$0xff]
      %v3493 = vld [vmem:[#allocation2 + $0xf2] sm:$0xff]
      %v3494 = vld [vmem:[#allocation2 + $0xfa] sm:$0x3f]
      %3523 = vrot.lane.b32.xlu0 %v3467, 32
      %v3524 = vpop.permute.xlu0 %3523
      %3525 = vrot.lane.b32.xlu0 %v3468, 32
      %v3526 = vpop.permute.xlu0 %3525
      %3527 = vrot.lane.b32.xlu0 %v3469, 32
      %v3528 = vpop.permute.xlu0 %3527
      %3529 = vrot.lane.b32.xlu0 %v3470, 32
      %v3530 = vpop.permute.xlu0 %3529
      %3531 = vrot.lane.b32.xlu0 %v3471, 32
      %v3532 = vpop.permute.xlu0 %3531
      %3533 = vrot.lane.b32.xlu0 %v3472, 32
      %v3534 = vpop.permute.xlu0 %3533
      %3535 = vrot.lane.b32.xlu0 %v3473, 32
      %v3536 = vpop.permute.xlu0 %3535
      %3537 = vrot.lane.b32.xlu0 %v3474, 32
      %v3538 = vpop.permute.xlu0 %3537
      %3539 = vrot.lane.b32.xlu0 %v3475, 32
      %v3540 = vpop.permute.xlu0 %3539
      %3541 = vrot.lane.b32.xlu0 %v3476, 32
      %v3542 = vpop.permute.xlu0 %3541
      %3543 = vrot.lane.b32.xlu0 %v3477, 32
      %v3544 = vpop.permute.xlu0 %3543
      %3545 = vrot.lane.b32.xlu0 %v3478, 32
      %v3546 = vpop.permute.xlu0 %3545
      %3547 = vrot.lane.b32.xlu0 %v3479, 32
      %v3548 = vpop.permute.xlu0 %3547
      %3549 = vrot.lane.b32.xlu0 %v3480, 32
      %v3550 = vpop.permute.xlu0 %3549
      %3551 = vrot.lane.b32.xlu0 %v3481, 32
      %v3552 = vpop.permute.xlu0 %3551
      %3553 = vrot.lane.b32.xlu0 %v3482, 32
      %v3554 = vpop.permute.xlu0 %3553
      %3555 = vrot.lane.b32.xlu0 %v3483, 32
      %v3556 = vpop.permute.xlu0 %3555
      %3557 = vrot.lane.b32.xlu0 %v3484, 32
      %v3558 = vpop.permute.xlu0 %3557
      %3559 = vrot.lane.b32.xlu0 %v3485, 32
      %v3560 = vpop.permute.xlu0 %3559
      %3561 = vrot.lane.b32.xlu0 %v3486, 32
      %v3562 = vpop.permute.xlu0 %3561
      %3563 = vrot.lane.b32.xlu0 %v3487, 32
      %v3564 = vpop.permute.xlu0 %3563
      %3565 = vrot.lane.b32.xlu0 %v3488, 32
      %v3566 = vpop.permute.xlu0 %3565
      %3567 = vrot.lane.b32.xlu0 %v3489, 32
      %v3568 = vpop.permute.xlu0 %3567
      %3569 = vrot.lane.b32.xlu0 %v3490, 32
      %v3570 = vpop.permute.xlu0 %3569
      %3571 = vrot.lane.b32.xlu0 %v3491, 32
      %v3572 = vpop.permute.xlu0 %3571
      %3573 = vrot.lane.b32.xlu0 %v3492, 32
      %v3574 = vpop.permute.xlu0 %3573
      %3575 = vrot.lane.b32.xlu0 %v3493, 32
      %v3576 = vpop.permute.xlu0 %3575
      %3577 = vrot.lane.b32.xlu0 %v3494, 32
      %v3578 = vpop.permute.xlu0 %3577
      %3607 = vst.msk [vmem:[#allocation3] sm:$0xff] %vm1654, %v3524
      %3608 = vst.msk [vmem:[#allocation3 + $0x8] sm:$0xff] %vm1654, %v3526
      %3609 = vst.msk [vmem:[#allocation3 + $0x10] sm:$0xff] %vm1654, %v3528
      %3610 = vst.msk [vmem:[#allocation3 + $0x18] sm:$0xff] %vm1654, %v3530
      %3611 = vst.msk [vmem:[#allocation3 + $0x20] sm:$0xff] %vm1654, %v3532
      %3612 = vst.msk [vmem:[#allocation3 + $0x28] sm:$0xff] %vm1654, %v3534
      %3613 = vst.msk [vmem:[#allocation3 + $0x30] sm:$0xff] %vm1654, %v3536
      %3614 = vst.msk [vmem:[#allocation3 + $0x38] sm:$0xff] %vm1654, %v3538
      %3615 = vst.msk [vmem:[#allocation3 + $0x40] sm:$0xff] %vm1654, %v3540
      %3616 = vst.msk [vmem:[#allocation3 + $0x48] sm:$0xff] %vm1654, %v3542
      %3617 = vst.msk [vmem:[#allocation3 + $0x50] sm:$0xff] %vm1654, %v3544
      %3618 = vst.msk [vmem:[#allocation3 + $0x58] sm:$0xff] %vm1654, %v3546
      %3619 = vst.msk [vmem:[#allocation3 + $0x60] sm:$0xff] %vm1654, %v3548
      %3620 = vst.msk [vmem:[#allocation3 + $0x68] sm:$0xff] %vm1654, %v3550
      %3621 = vst.msk [vmem:[#allocation3 + $0x70] sm:$0xff] %vm1654, %v3552
      %3622 = vst.msk [vmem:[#allocation3 + $0x78] sm:$0xff] %vm1654, %v3554
      %3623 = vst.msk [vmem:[#allocation3 + $0x80] sm:$0xff] %vm1654, %v3556
      %3624 = vst.msk [vmem:[#allocation3 + $0x88] sm:$0xff] %vm1654, %v3558
      %3625 = vst.msk [vmem:[#allocation3 + $0x90] sm:$0xff] %vm1654, %v3560
      %3626 = vst.msk [vmem:[#allocation3 + $0x98] sm:$0xff] %vm1654, %v3562
      %3627 = vst.msk [vmem:[#allocation3 + $0xa0] sm:$0xff] %vm1654, %v3564
      %3628 = vst.msk [vmem:[#allocation3 + $0xa8] sm:$0xff] %vm1654, %v3566
      %3629 = vst.msk [vmem:[#allocation3 + $0xb0] sm:$0xff] %vm1654, %v3568
      %3630 = vst.msk [vmem:[#allocation3 + $0xb8] sm:$0xff] %vm1654, %v3570
      %3631 = vst.msk [vmem:[#allocation3 + $0xc0] sm:$0xff] %vm1654, %v3572
      %3632 = vst.msk [vmem:[#allocation3 + $0xc8] sm:$0xff] %vm1654, %v3574
      %3633 = vst.msk [vmem:[#allocation3 + $0xd0] sm:$0xff] %vm1654, %v3576
      %3634 = vst.msk [vmem:[#allocation3 + $0xd8] sm:$0x3f] %vm1682, %v3578
      %v3635 = vld [vmem:[#allocation3] sm:$0xff]
      %v3636 = vld [vmem:[#allocation3 + $0x8] sm:$0xff]
      %v3637 = vld [vmem:[#allocation3 + $0x10] sm:$0xff]
      %v3638 = vld [vmem:[#allocation3 + $0x18] sm:$0xff]
      %v3639 = vld [vmem:[#allocation3 + $0x20] sm:$0xff]
      %v3640 = vld [vmem:[#allocation3 + $0x28] sm:$0xff]
      %v3641 = vld [vmem:[#allocation3 + $0x30] sm:$0xff]
      %v3642 = vld [vmem:[#allocation3 + $0x38] sm:$0xff]
      %v3643 = vld [vmem:[#allocation3 + $0x40] sm:$0xff]
      %v3644 = vld [vmem:[#allocation3 + $0x48] sm:$0xff]
      %v3645 = vld [vmem:[#allocation3 + $0x50] sm:$0xff]
      %v3646 = vld [vmem:[#allocation3 + $0x58] sm:$0xff]
      %v3647 = vld [vmem:[#allocation3 + $0x60] sm:$0xff]
      %v3648 = vld [vmem:[#allocation3 + $0x68] sm:$0xff]
      %v3649 = vld [vmem:[#allocation3 + $0x70] sm:$0xff]
      %v3650 = vld [vmem:[#allocation3 + $0x78] sm:$0xff]
      %v3651 = vld [vmem:[#allocation3 + $0x80] sm:$0xff]
      %v3652 = vld [vmem:[#allocation3 + $0x88] sm:$0xff]
      %v3653 = vld [vmem:[#allocation3 + $0x90] sm:$0xff]
      %v3654 = vld [vmem:[#allocation3 + $0x98] sm:$0xff]
      %v3655 = vld [vmem:[#allocation3 + $0xa0] sm:$0xff]
      %v3656 = vld [vmem:[#allocation3 + $0xa8] sm:$0xff]
      %v3657 = vld [vmem:[#allocation3 + $0xb0] sm:$0xff]
      %v3658 = vld [vmem:[#allocation3 + $0xb8] sm:$0xff]
      %v3659 = vld [vmem:[#allocation3 + $0xc0] sm:$0xff]
      %v3660 = vld [vmem:[#allocation3 + $0xc8] sm:$0xff]
      %v3661 = vld [vmem:[#allocation3 + $0xd0] sm:$0xff]
      %v3662 = vld [vmem:[#allocation3 + $0xd8] sm:$0x3f]
      %v3663 = vld [vmem:[%s3] sm:$0xff]
      %v3664 = vld [vmem:[%s3 + $0x8] sm:$0xff]
      %v3665 = vld [vmem:[%s3 + $0x10] sm:$0xff]
      %v3666 = vld [vmem:[%s3 + $0x18] sm:$0xff]
      %v3667 = vld [vmem:[%s3 + $0x20] sm:$0xf]
      %v3669 = vsel %vm1717, %v3635, 0
      %v3672 = vsel %vm1717, %v3636, 0
      %v3675 = vsel %vm1717, %v3637, 0
      %v3678 = vsel %vm1717, %v3638, 0
      %v3681 = vsel %vm1717, %v3639, 0
      %v3684 = vsel %vm1717, %v3640, 0
      %v3687 = vsel %vm1717, %v3641, 0
      %v3690 = vsel %vm1717, %v3642, 0
      %v3693 = vsel %vm1717, %v3643, 0
      %v3696 = vsel %vm1717, %v3644, 0
      %v3699 = vsel %vm1717, %v3645, 0
      %v3702 = vsel %vm1717, %v3646, 0
      %v3705 = vsel %vm1717, %v3647, 0
      %v3708 = vsel %vm1717, %v3648, 0
      %v3711 = vsel %vm1717, %v3649, 0
      %v3714 = vsel %vm1717, %v3650, 0
      %v3717 = vsel %vm1717, %v3651, 0
      %v3720 = vsel %vm1717, %v3652, 0
      %v3723 = vsel %vm1717, %v3653, 0
      %v3726 = vsel %vm1717, %v3654, 0
      %v3729 = vsel %vm1717, %v3655, 0
      %v3732 = vsel %vm1717, %v3656, 0
      %v3735 = vsel %vm1717, %v3657, 0
      %v3738 = vsel %vm1717, %v3658, 0
      %v3741 = vsel %vm1717, %v3659, 0
      %v3744 = vsel %vm1717, %v3660, 0
      %v3747 = vsel %vm1717, %v3661, 0
      %v3750 = vsel %vm1717, %v3662, 0
      %v3753 = vsel %vm1802, %v3667, 0
      %3755 = vmatprep.subr.mxu0 0.0
      %3756 = vmatpush1.msra.mxu0 %v3663
      %3757 = vmatprep.subr.mxu0 0.0
      %3758 = vmatpush1.msra.mxu0 %v3664
      %3759 = vmatprep.subr.mxu0 0.0
      %3760 = vmatpush1.msra.mxu0 %v3665
      %3761 = vmatprep.subr.mxu0 0.0
      %3762 = vmatpush1.msra.mxu0 %v3666
      %3763 = vmatprep.subr.mxu0 0.0
      %3764 = vmatpush1.msra.mxu0 %v3753
      %3765 = vmatprep.subr.mxu0 0.0
      %3766 = vmatpush1.msra.mxu0 0.0
      %3767 = vmatprep.subr.mxu0 0.0
      %3768 = vmatpush1.msra.mxu0 0.0
      %3769 = vmatprep.subr.mxu0 0.0
      %3770 = vmatpush1.msra.mxu0 0.0
      %3771 = vmatprep.subr.mxu0 0.0
      %3772 = vmatpush1.msra.mxu0 0.0
      %3773 = vmatprep.subr.mxu0 0.0
      %3774 = vmatpush1.msra.mxu0 0.0
      %3775 = vmatprep.subr.mxu0 0.0
      %3776 = vmatpush1.msra.mxu0 0.0
      %3777 = vmatprep.subr.mxu0 0.0
      %3778 = vmatpush1.msra.mxu0 0.0
      %3779 = vmatprep.subr.mxu0 0.0
      %3780 = vmatpush1.msra.mxu0 0.0
      %3781 = vmatprep.subr.mxu0 0.0
      %3782 = vmatpush1.msra.mxu0 0.0
      %3783 = vmatprep.subr.mxu0 0.0
      %3784 = vmatpush1.msra.mxu0 0.0
      %3785 = vmatprep.subr.mxu0 0.0
      %3786 = vmatpush1.msra.mxu0 0.0
      %3787 = vmatprep.subr.mxu0 0.0
      %3788 = vmatpush1.msra.mxu0 0.0
      %3789 = vmatprep.subr.mxu0 0.0
      %3790 = vmatpush1.msra.mxu0 0.0
      %3791 = vmatprep.subr.mxu0 0.0
      %3792 = vmatpush1.msra.mxu0 0.0
      %3793 = vmatprep.subr.mxu0 0.0
      %3794 = vmatpush1.msra.mxu0 0.0
      %3795 = vmatprep.subr.mxu0 0.0
      %3796 = vmatpush1.msra.mxu0 0.0
      %3797 = vmatprep.subr.mxu0 0.0
      %3798 = vmatpush1.msra.mxu0 0.0
      %3799 = vmatprep.subr.mxu0 0.0
      %3800 = vmatpush1.msra.mxu0 0.0
      %3801 = vmatprep.subr.mxu0 0.0
      %3802 = vmatpush1.msra.mxu0 0.0
      %3803 = vmatprep.subr.mxu0 0.0
      %3804 = vmatpush1.msra.mxu0 0.0
      %3805 = vmatprep.subr.mxu0 0.0
      %3806 = vmatpush1.msra.mxu0 0.0
      %3807 = vmatprep.subr.mxu0 0.0
      %3808 = vmatpush1.msra.mxu0 0.0
      %3809 = vmatprep.subr.mxu0 0.0
      %3810 = vmatpush1.msra.mxu0 0.0
      %3811 = vmatprep.subr.mxu0 0.0
      %3812 = vmatpush1.msra.mxu0 0.0
      %3813 = vmatprep.subr.mxu0 0.0
      %3814 = vmatpush1.msra.mxu0 0.0
      %3815 = vmatprep.subr.mxu0 0.0
      %3816 = vmatpush1.msra.mxu0 0.0
      %3817 = vmatprep.subr.mxu0 0.0
      %3818 = vmatpush1.msra.mxu0 0.0
      %3819 = vmatprep.mubr.f32.mxu0 0.0
      %3820 = vmatmul.mubr.f32.gmra.mrb[0].mxu0 %v3669
      %v3821 = vpop.f32.mrb[0].mxu0
      %v3822 = vadd.f32 0.0, %v3821
      %v3823 = vpop.f32.mrb[0].mxu0
      %3824 = vmatprep.mubr.f32.mxu0 0.0
      %3825 = vmatmul.mubr.f32.gmra.mrb[0].mxu0 %v3672
      %v3826 = vpop.f32.mrb[0].mxu0
      %v3827 = vadd.f32 0.0, %v3826
      %v3828 = vpop.f32.mrb[0].mxu0
      %3829 = vmatprep.mubr.f32.mxu0 0.0
      %3830 = vmatmul.mubr.f32.gmra.mrb[0].mxu0 %v3675
      %v3831 = vpop.f32.mrb[0].mxu0
      %v3832 = vadd.f32 0.0, %v3831
      %v3833 = vpop.f32.mrb[0].mxu0
      %3834 = vmatprep.mubr.f32.mxu0 0.0
      %3835 = vmatmul.mubr.f32.gmra.mrb[0].mxu0 %v3678
      %v3836 = vpop.f32.mrb[0].mxu0
      %v3837 = vadd.f32 0.0, %v3836
      %v3838 = vpop.f32.mrb[0].mxu0
      %3839 = vmatprep.mubr.f32.mxu0 0.0
      %3840 = vmatmul.mubr.f32.gmra.mrb[0].mxu0 %v3681
      %v3841 = vpop.f32.mrb[0].mxu0
      %v3842 = vadd.f32 0.0, %v3841
      %v3843 = vpop.f32.mrb[0].mxu0
      %3844 = vmatprep.mubr.f32.mxu0 0.0
      %3845 = vmatmul.mubr.f32.gmra.mrb[0].mxu0 %v3684
      %v3846 = vpop.f32.mrb[0].mxu0
      %v3847 = vadd.f32 0.0, %v3846
      %v3848 = vpop.f32.mrb[0].mxu0
      %3849 = vmatprep.mubr.f32.mxu0 0.0
      %3850 = vmatmul.mubr.f32.gmra.mrb[0].mxu0 %v3687
      %v3851 = vpop.f32.mrb[0].mxu0
      %v3852 = vadd.f32 0.0, %v3851
      %v3853 = vpop.f32.mrb[0].mxu0
      %3854 = vmatprep.mubr.f32.mxu0 0.0
      %3855 = vmatmul.mubr.f32.gmra.mrb[0].mxu0 %v3690
      %v3856 = vpop.f32.mrb[0].mxu0
      %v3857 = vadd.f32 0.0, %v3856
      %v3858 = vpop.f32.mrb[0].mxu0
      %3859 = vmatprep.mubr.f32.mxu0 0.0
      %3860 = vmatmul.mubr.f32.gmra.mrb[0].mxu0 %v3693
      %v3861 = vpop.f32.mrb[0].mxu0
      %v3862 = vadd.f32 0.0, %v3861
      %v3863 = vpop.f32.mrb[0].mxu0
      %3864 = vmatprep.mubr.f32.mxu0 0.0
      %3865 = vmatmul.mubr.f32.gmra.mrb[0].mxu0 %v3696
      %v3866 = vpop.f32.mrb[0].mxu0
      %v3867 = vadd.f32 0.0, %v3866
      %v3868 = vpop.f32.mrb[0].mxu0
      %3869 = vmatprep.mubr.f32.mxu0 0.0
      %3870 = vmatmul.mubr.f32.gmra.mrb[0].mxu0 %v3699
      %v3871 = vpop.f32.mrb[0].mxu0
      %v3872 = vadd.f32 0.0, %v3871
      %v3873 = vpop.f32.mrb[0].mxu0
      %3874 = vmatprep.mubr.f32.mxu0 0.0
      %3875 = vmatmul.mubr.f32.gmra.mrb[0].mxu0 %v3702
      %v3876 = vpop.f32.mrb[0].mxu0
      %v3877 = vadd.f32 0.0, %v3876
      %v3878 = vpop.f32.mrb[0].mxu0
      %3879 = vmatprep.mubr.f32.mxu0 0.0
      %3880 = vmatmul.mubr.f32.gmra.mrb[0].mxu0 %v3705
      %v3881 = vpop.f32.mrb[0].mxu0
      %v3882 = vadd.f32 0.0, %v3881
      %v3883 = vpop.f32.mrb[0].mxu0
      %3884 = vmatprep.mubr.f32.mxu0 0.0
      %3885 = vmatmul.mubr.f32.gmra.mrb[0].mxu0 %v3708
      %v3886 = vpop.f32.mrb[0].mxu0
      %v3887 = vadd.f32 0.0, %v3886
      %v3888 = vpop.f32.mrb[0].mxu0
      %3889 = vmatprep.mubr.f32.mxu0 0.0
      %3890 = vmatmul.mubr.f32.gmra.mrb[0].mxu0 %v3711
      %v3891 = vpop.f32.mrb[0].mxu0
      %v3892 = vadd.f32 0.0, %v3891
      %v3893 = vpop.f32.mrb[0].mxu0
      %3894 = vmatprep.mubr.f32.mxu0 0.0
      %3895 = vmatmul.mubr.f32.gmra.mrb[0].mxu0 %v3714
      %v3896 = vpop.f32.mrb[0].mxu0
      %v3897 = vadd.f32 0.0, %v3896
      %v3898 = vpop.f32.mrb[0].mxu0
      %3899 = vmatprep.mubr.f32.mxu0 0.0
      %3900 = vmatmul.mubr.f32.gmra.mrb[0].mxu0 %v3717
      %v3901 = vpop.f32.mrb[0].mxu0
      %v3902 = vadd.f32 0.0, %v3901
      %v3903 = vpop.f32.mrb[0].mxu0
      %3904 = vmatprep.mubr.f32.mxu0 0.0
      %3905 = vmatmul.mubr.f32.gmra.mrb[0].mxu0 %v3720
      %v3906 = vpop.f32.mrb[0].mxu0
      %v3907 = vadd.f32 0.0, %v3906
      %v3908 = vpop.f32.mrb[0].mxu0
      %3909 = vmatprep.mubr.f32.mxu0 0.0
      %3910 = vmatmul.mubr.f32.gmra.mrb[0].mxu0 %v3723
      %v3911 = vpop.f32.mrb[0].mxu0
      %v3912 = vadd.f32 0.0, %v3911
      %v3913 = vpop.f32.mrb[0].mxu0
      %3914 = vmatprep.mubr.f32.mxu0 0.0
      %3915 = vmatmul.mubr.f32.gmra.mrb[0].mxu0 %v3726
      %v3916 = vpop.f32.mrb[0].mxu0
      %v3917 = vadd.f32 0.0, %v3916
      %v3918 = vpop.f32.mrb[0].mxu0
      %3919 = vmatprep.mubr.f32.mxu0 0.0
      %3920 = vmatmul.mubr.f32.gmra.mrb[0].mxu0 %v3729
      %v3921 = vpop.f32.mrb[0].mxu0
      %v3922 = vadd.f32 0.0, %v3921
      %v3923 = vpop.f32.mrb[0].mxu0
      %3924 = vmatprep.mubr.f32.mxu0 0.0
      %3925 = vmatmul.mubr.f32.gmra.mrb[0].mxu0 %v3732
      %v3926 = vpop.f32.mrb[0].mxu0
      %v3927 = vadd.f32 0.0, %v3926
      %v3928 = vpop.f32.mrb[0].mxu0
      %3929 = vmatprep.mubr.f32.mxu0 0.0
      %3930 = vmatmul.mubr.f32.gmra.mrb[0].mxu0 %v3735
      %v3931 = vpop.f32.mrb[0].mxu0
      %v3932 = vadd.f32 0.0, %v3931
      %v3933 = vpop.f32.mrb[0].mxu0
      %3934 = vmatprep.mubr.f32.mxu0 0.0
      %3935 = vmatmul.mubr.f32.gmra.mrb[0].mxu0 %v3738
      %v3936 = vpop.f32.mrb[0].mxu0
      %v3937 = vadd.f32 0.0, %v3936
      %v3938 = vpop.f32.mrb[0].mxu0
      %3939 = vmatprep.mubr.f32.mxu0 0.0
      %3940 = vmatmul.mubr.f32.gmra.mrb[0].mxu0 %v3741
      %v3941 = vpop.f32.mrb[0].mxu0
      %v3942 = vadd.f32 0.0, %v3941
      %v3943 = vpop.f32.mrb[0].mxu0
      %3944 = vmatprep.mubr.f32.mxu0 0.0
      %3945 = vmatmul.mubr.f32.gmra.mrb[0].mxu0 %v3744
      %v3946 = vpop.f32.mrb[0].mxu0
      %v3947 = vadd.f32 0.0, %v3946
      %v3948 = vpop.f32.mrb[0].mxu0
      %3949 = vmatprep.mubr.f32.mxu0 0.0
      %3950 = vmatmul.mubr.f32.gmra.mrb[0].mxu0 %v3747
      %v3951 = vpop.f32.mrb[0].mxu0
      %v3952 = vadd.f32 0.0, %v3951
      %v3953 = vpop.f32.mrb[0].mxu0
      %3954 = vmatprep.mubr.f32.mxu0 0.0
      %3955 = vmatmul.mubr.f32.gmra.mrb[0].mxu0 %v3750
      %v3956 = vpop.f32.mrb[0].mxu0
      %v3957 = vadd.f32 0.0, %v3956
      %v3958 = vpop.f32.mrb[0].mxu0
      %3959 = vdwg.mxu0
      %v3960 = vmax.f32 %v3822, 0.0
      %v3961 = vmax.f32 %v3827, 0.0
      %v3962 = vmax.f32 %v3832, 0.0
      %v3963 = vmax.f32 %v3837, 0.0
      %v3964 = vmax.f32 %v3842, 0.0
      %v3965 = vmax.f32 %v3847, 0.0
      %v3966 = vmax.f32 %v3852, 0.0
      %v3967 = vmax.f32 %v3857, 0.0
      %v3968 = vmax.f32 %v3862, 0.0
      %v3969 = vmax.f32 %v3867, 0.0
      %v3970 = vmax.f32 %v3872, 0.0
      %v3971 = vmax.f32 %v3877, 0.0
      %v3972 = vmax.f32 %v3882, 0.0
      %v3973 = vmax.f32 %v3887, 0.0
      %v3974 = vmax.f32 %v3892, 0.0
      %v3975 = vmax.f32 %v3897, 0.0
      %v3976 = vmax.f32 %v3902, 0.0
      %v3977 = vmax.f32 %v3907, 0.0
      %v3978 = vmax.f32 %v3912, 0.0
      %v3979 = vmax.f32 %v3917, 0.0
      %v3980 = vmax.f32 %v3922, 0.0
      %v3981 = vmax.f32 %v3927, 0.0
      %v3982 = vmax.f32 %v3932, 0.0
      %v3983 = vmax.f32 %v3937, 0.0
      %v3984 = vmax.f32 %v3942, 0.0
      %v3985 = vmax.f32 %v3947, 0.0
      %v3986 = vmax.f32 %v3952, 0.0
      %v3987 = vmax.f32 %v3957, 0.0
      %v3988 = vmul.f32 %v3960, %v2042
      %v3989 = vmul.f32 %v3961, %v2047
      %v3990 = vmul.f32 %v3962, %v2052
      %v3991 = vmul.f32 %v3963, %v2057
      %v3992 = vmul.f32 %v3964, %v2062
      %v3993 = vmul.f32 %v3965, %v2067
      %v3994 = vmul.f32 %v3966, %v2072
      %v3995 = vmul.f32 %v3967, %v2077
      %v3996 = vmul.f32 %v3968, %v2082
      %v3997 = vmul.f32 %v3969, %v2087
      %v3998 = vmul.f32 %v3970, %v2092
      %v3999 = vmul.f32 %v3971, %v2097
      %v4000 = vmul.f32 %v3972, %v2102
      %v4001 = vmul.f32 %v3973, %v2107
      %v4002 = vmul.f32 %v3974, %v2112
      %v4003 = vmul.f32 %v3975, %v2117
      %v4004 = vmul.f32 %v3976, %v2122
      %v4005 = vmul.f32 %v3977, %v2127
      %v4006 = vmul.f32 %v3978, %v2132
      %v4007 = vmul.f32 %v3979, %v2137
      %v4008 = vmul.f32 %v3980, %v2142
      %v4009 = vmul.f32 %v3981, %v2147
      %v4010 = vmul.f32 %v3982, %v2152
      %v4011 = vmul.f32 %v3983, %v2157
      %v4012 = vmul.f32 %v3984, %v2162
      %v4013 = vmul.f32 %v3985, %v2167
      %v4014 = vmul.f32 %v3986, %v2172
      %v4015 = vmul.f32 %v3987, %v2177
      %4016 = vst.msk [vmem:[#allocation2 + $0x11] sm:$0xff] %vm256, %v3988
      %4017 = vst.msk [vmem:[#allocation2 + $0x19] sm:$0xff] %vm256, %v3989
      %4018 = vst.msk [vmem:[#allocation2 + $0x21] sm:$0xff] %vm256, %v3990
      %4019 = vst.msk [vmem:[#allocation2 + $0x29] sm:$0xff] %vm256, %v3991
      %4020 = vst.msk [vmem:[#allocation2 + $0x31] sm:$0xff] %vm256, %v3992
      %4021 = vst.msk [vmem:[#allocation2 + $0x39] sm:$0xff] %vm256, %v3993
      %4022 = vst.msk [vmem:[#allocation2 + $0x41] sm:$0xff] %vm256, %v3994
      %4023 = vst.msk [vmem:[#allocation2 + $0x49] sm:$0xff] %vm256, %v3995
      %4024 = vst.msk [vmem:[#allocation2 + $0x51] sm:$0xff] %vm256, %v3996
      %4025 = vst.msk [vmem:[#allocation2 + $0x59] sm:$0xff] %vm256, %v3997
      %4026 = vst.msk [vmem:[#allocation2 + $0x61] sm:$0xff] %vm256, %v3998
      %4027 = vst.msk [vmem:[#allocation2 + $0x69] sm:$0xff] %vm256, %v3999
      %4028 = vst.msk [vmem:[#allocation2 + $0x71] sm:$0xff] %vm256, %v4000
      %4029 = vst.msk [vmem:[#allocation2 + $0x79] sm:$0xff] %vm256, %v4001
      %4030 = vst.msk [vmem:[#allocation2 + $0x81] sm:$0xff] %vm256, %v4002
      %4031 = vst.msk [vmem:[#allocation2 + $0x89] sm:$0xff] %vm256, %v4003
      %4032 = vst.msk [vmem:[#allocation2 + $0x91] sm:$0xff] %vm256, %v4004
      %4033 = vst.msk [vmem:[#allocation2 + $0x99] sm:$0xff] %vm256, %v4005
      %4034 = vst.msk [vmem:[#allocation2 + $0xa1] sm:$0xff] %vm256, %v4006
      %4035 = vst.msk [vmem:[#allocation2 + $0xa9] sm:$0xff] %vm256, %v4007
      %4036 = vst.msk [vmem:[#allocation2 + $0xb1] sm:$0xff] %vm256, %v4008
      %4037 = vst.msk [vmem:[#allocation2 + $0xb9] sm:$0xff] %vm256, %v4009
      %4038 = vst.msk [vmem:[#allocation2 + $0xc1] sm:$0xff] %vm256, %v4010
      %4039 = vst.msk [vmem:[#allocation2 + $0xc9] sm:$0xff] %vm256, %v4011
      %4040 = vst.msk [vmem:[#allocation2 + $0xd1] sm:$0xff] %vm256, %v4012
      %4041 = vst.msk [vmem:[#allocation2 + $0xd9] sm:$0xff] %vm256, %v4013
      %4042 = vst.msk [vmem:[#allocation2 + $0xe1] sm:$0xff] %vm256, %v4014
      %4043 = vst.msk [vmem:[#allocation2 + $0xe9] sm:$0x3f] %vm322, %v4015
      %v4044 = vld [vmem:[#allocation2 + $0x11] sm:$0xff]
      %v4045 = vld [vmem:[#allocation2 + $0x19] sm:$0xff]
      %v4046 = vld [vmem:[#allocation2 + $0x21] sm:$0xff]
      %v4047 = vld [vmem:[#allocation2 + $0x29] sm:$0xff]
      %v4048 = vld [vmem:[#allocation2 + $0x31] sm:$0xff]
      %v4049 = vld [vmem:[#allocation2 + $0x39] sm:$0xff]
      %v4050 = vld [vmem:[#allocation2 + $0x41] sm:$0xff]
      %v4051 = vld [vmem:[#allocation2 + $0x49] sm:$0xff]
      %v4052 = vld [vmem:[#allocation2 + $0x51] sm:$0xff]
      %v4053 = vld [vmem:[#allocation2 + $0x59] sm:$0xff]
      %v4054 = vld [vmem:[#allocation2 + $0x61] sm:$0xff]
      %v4055 = vld [vmem:[#allocation2 + $0x69] sm:$0xff]
      %v4056 = vld [vmem:[#allocation2 + $0x71] sm:$0xff]
      %v4057 = vld [vmem:[#allocation2 + $0x79] sm:$0xff]
      %v4058 = vld [vmem:[#allocation2 + $0x81] sm:$0xff]
      %v4059 = vld [vmem:[#allocation2 + $0x89] sm:$0xff]
      %v4060 = vld [vmem:[#allocation2 + $0x91] sm:$0xff]
      %v4061 = vld [vmem:[#allocation2 + $0x99] sm:$0xff]
      %v4062 = vld [vmem:[#allocation2 + $0xa1] sm:$0xff]
      %v4063 = vld [vmem:[#allocation2 + $0xa9] sm:$0xff]
      %v4064 = vld [vmem:[#allocation2 + $0xb1] sm:$0xff]
      %v4065 = vld [vmem:[#allocation2 + $0xb9] sm:$0xff]
      %v4066 = vld [vmem:[#allocation2 + $0xc1] sm:$0xff]
      %v4067 = vld [vmem:[#allocation2 + $0xc9] sm:$0xff]
      %v4068 = vld [vmem:[#allocation2 + $0xd1] sm:$0xff]
      %v4069 = vld [vmem:[#allocation2 + $0xd9] sm:$0xff]
      %v4070 = vld [vmem:[#allocation2 + $0xe1] sm:$0xff]
      %v4071 = vld [vmem:[#allocation2 + $0xe9] sm:$0x3f]
      %4072 = vst.msk [vmem:[#allocation3] sm:$0xff] %vm256, %v4044
      %4073 = vst.msk [vmem:[#allocation3 + $0x8] sm:$0xff] %vm256, %v4045
      %4074 = vst.msk [vmem:[#allocation3 + $0x10] sm:$0xff] %vm256, %v4046
      %4075 = vst.msk [vmem:[#allocation3 + $0x18] sm:$0xff] %vm256, %v4047
      %4076 = vst.msk [vmem:[#allocation3 + $0x20] sm:$0xff] %vm256, %v4048
      %4077 = vst.msk [vmem:[#allocation3 + $0x28] sm:$0xff] %vm256, %v4049
      %4078 = vst.msk [vmem:[#allocation3 + $0x30] sm:$0xff] %vm256, %v4050
      %4079 = vst.msk [vmem:[#allocation3 + $0x38] sm:$0xff] %vm256, %v4051
      %4080 = vst.msk [vmem:[#allocation3 + $0x40] sm:$0xff] %vm256, %v4052
      %4081 = vst.msk [vmem:[#allocation3 + $0x48] sm:$0xff] %vm256, %v4053
      %4082 = vst.msk [vmem:[#allocation3 + $0x50] sm:$0xff] %vm256, %v4054
      %4083 = vst.msk [vmem:[#allocation3 + $0x58] sm:$0xff] %vm256, %v4055
      %4084 = vst.msk [vmem:[#allocation3 + $0x60] sm:$0xff] %vm256, %v4056
      %4085 = vst.msk [vmem:[#allocation3 + $0x68] sm:$0xff] %vm256, %v4057
      %4086 = vst.msk [vmem:[#allocation3 + $0x70] sm:$0xff] %vm256, %v4058
      %4087 = vst.msk [vmem:[#allocation3 + $0x78] sm:$0xff] %vm256, %v4059
      %4088 = vst.msk [vmem:[#allocation3 + $0x80] sm:$0xff] %vm256, %v4060
      %4089 = vst.msk [vmem:[#allocation3 + $0x88] sm:$0xff] %vm256, %v4061
      %4090 = vst.msk [vmem:[#allocation3 + $0x90] sm:$0xff] %vm256, %v4062
      %4091 = vst.msk [vmem:[#allocation3 + $0x98] sm:$0xff] %vm256, %v4063
      %4092 = vst.msk [vmem:[#allocation3 + $0xa0] sm:$0xff] %vm256, %v4064
      %4093 = vst.msk [vmem:[#allocation3 + $0xa8] sm:$0xff] %vm256, %v4065
      %4094 = vst.msk [vmem:[#allocation3 + $0xb0] sm:$0xff] %vm256, %v4066
      %4095 = vst.msk [vmem:[#allocation3 + $0xb8] sm:$0xff] %vm256, %v4067
      %4096 = vst.msk [vmem:[#allocation3 + $0xc0] sm:$0xff] %vm256, %v4068
      %4097 = vst.msk [vmem:[#allocation3 + $0xc8] sm:$0xff] %vm256, %v4069
      %4098 = vst.msk [vmem:[#allocation3 + $0xd0] sm:$0xff] %vm256, %v4070
      %4099 = vst.msk [vmem:[#allocation3 + $0xd8] sm:$0x3f] %vm322, %v4071
      %v4100 = vld [vmem:[#allocation2 + $0x12] sm:$0xff]
      %v4101 = vld [vmem:[#allocation2 + $0x1a] sm:$0xff]
      %v4102 = vld [vmem:[#allocation2 + $0x22] sm:$0xff]
      %v4103 = vld [vmem:[#allocation2 + $0x2a] sm:$0xff]
      %v4104 = vld [vmem:[#allocation2 + $0x32] sm:$0xff]
      %v4105 = vld [vmem:[#allocation2 + $0x3a] sm:$0xff]
      %v4106 = vld [vmem:[#allocation2 + $0x42] sm:$0xff]
      %v4107 = vld [vmem:[#allocation2 + $0x4a] sm:$0xff]
      %v4108 = vld [vmem:[#allocation2 + $0x52] sm:$0xff]
      %v4109 = vld [vmem:[#allocation2 + $0x5a] sm:$0xff]
      %v4110 = vld [vmem:[#allocation2 + $0x62] sm:$0xff]
      %v4111 = vld [vmem:[#allocation2 + $0x6a] sm:$0xff]
      %v4112 = vld [vmem:[#allocation2 + $0x72] sm:$0xff]
      %v4113 = vld [vmem:[#allocation2 + $0x7a] sm:$0xff]
      %v4114 = vld [vmem:[#allocation2 + $0x82] sm:$0xff]
      %v4115 = vld [vmem:[#allocation2 + $0x8a] sm:$0xff]
      %v4116 = vld [vmem:[#allocation2 + $0x92] sm:$0xff]
      %v4117 = vld [vmem:[#allocation2 + $0x9a] sm:$0xff]
      %v4118 = vld [vmem:[#allocation2 + $0xa2] sm:$0xff]
      %v4119 = vld [vmem:[#allocation2 + $0xaa] sm:$0xff]
      %v4120 = vld [vmem:[#allocation2 + $0xb2] sm:$0xff]
      %v4121 = vld [vmem:[#allocation2 + $0xba] sm:$0xff]
      %v4122 = vld [vmem:[#allocation2 + $0xc2] sm:$0xff]
      %v4123 = vld [vmem:[#allocation2 + $0xca] sm:$0xff]
      %v4124 = vld [vmem:[#allocation2 + $0xd2] sm:$0xff]
      %v4125 = vld [vmem:[#allocation2 + $0xda] sm:$0xff]
      %v4126 = vld [vmem:[#allocation2 + $0xe2] sm:$0xff]
      %v4127 = vld [vmem:[#allocation2 + $0xea] sm:$0x3f]
      %4156 = vrot.lane.b32.xlu0 %v4100, 4
      %v4157 = vpop.permute.xlu0 %4156
      %4158 = vrot.lane.b32.xlu0 %v4101, 4
      %v4159 = vpop.permute.xlu0 %4158
      %4160 = vrot.lane.b32.xlu0 %v4102, 4
      %v4161 = vpop.permute.xlu0 %4160
      %4162 = vrot.lane.b32.xlu0 %v4103, 4
      %v4163 = vpop.permute.xlu0 %4162
      %4164 = vrot.lane.b32.xlu0 %v4104, 4
      %v4165 = vpop.permute.xlu0 %4164
      %4166 = vrot.lane.b32.xlu0 %v4105, 4
      %v4167 = vpop.permute.xlu0 %4166
      %4168 = vrot.lane.b32.xlu0 %v4106, 4
      %v4169 = vpop.permute.xlu0 %4168
      %4170 = vrot.lane.b32.xlu0 %v4107, 4
      %v4171 = vpop.permute.xlu0 %4170
      %4172 = vrot.lane.b32.xlu0 %v4108, 4
      %v4173 = vpop.permute.xlu0 %4172
      %4174 = vrot.lane.b32.xlu0 %v4109, 4
      %v4175 = vpop.permute.xlu0 %4174
      %4176 = vrot.lane.b32.xlu0 %v4110, 4
      %v4177 = vpop.permute.xlu0 %4176
      %4178 = vrot.lane.b32.xlu0 %v4111, 4
      %v4179 = vpop.permute.xlu0 %4178
      %4180 = vrot.lane.b32.xlu0 %v4112, 4
      %v4181 = vpop.permute.xlu0 %4180
      %4182 = vrot.lane.b32.xlu0 %v4113, 4
      %v4183 = vpop.permute.xlu0 %4182
      %4184 = vrot.lane.b32.xlu0 %v4114, 4
      %v4185 = vpop.permute.xlu0 %4184
      %4186 = vrot.lane.b32.xlu0 %v4115, 4
      %v4187 = vpop.permute.xlu0 %4186
      %4188 = vrot.lane.b32.xlu0 %v4116, 4
      %v4189 = vpop.permute.xlu0 %4188
      %4190 = vrot.lane.b32.xlu0 %v4117, 4
      %v4191 = vpop.permute.xlu0 %4190
      %4192 = vrot.lane.b32.xlu0 %v4118, 4
      %v4193 = vpop.permute.xlu0 %4192
      %4194 = vrot.lane.b32.xlu0 %v4119, 4
      %v4195 = vpop.permute.xlu0 %4194
      %4196 = vrot.lane.b32.xlu0 %v4120, 4
      %v4197 = vpop.permute.xlu0 %4196
      %4198 = vrot.lane.b32.xlu0 %v4121, 4
      %v4199 = vpop.permute.xlu0 %4198
      %4200 = vrot.lane.b32.xlu0 %v4122, 4
      %v4201 = vpop.permute.xlu0 %4200
      %4202 = vrot.lane.b32.xlu0 %v4123, 4
      %v4203 = vpop.permute.xlu0 %4202
      %4204 = vrot.lane.b32.xlu0 %v4124, 4
      %v4205 = vpop.permute.xlu0 %4204
      %4206 = vrot.lane.b32.xlu0 %v4125, 4
      %v4207 = vpop.permute.xlu0 %4206
      %4208 = vrot.lane.b32.xlu0 %v4126, 4
      %v4209 = vpop.permute.xlu0 %4208
      %4210 = vrot.lane.b32.xlu0 %v4127, 4
      %v4211 = vpop.permute.xlu0 %4210
      %4240 = vst.msk [vmem:[#allocation3] sm:$0xff] %vm464, %v4157
      %4241 = vst.msk [vmem:[#allocation3 + $0x8] sm:$0xff] %vm464, %v4159
      %4242 = vst.msk [vmem:[#allocation3 + $0x10] sm:$0xff] %vm464, %v4161
      %4243 = vst.msk [vmem:[#allocation3 + $0x18] sm:$0xff] %vm464, %v4163
      %4244 = vst.msk [vmem:[#allocation3 + $0x20] sm:$0xff] %vm464, %v4165
      %4245 = vst.msk [vmem:[#allocation3 + $0x28] sm:$0xff] %vm464, %v4167
      %4246 = vst.msk [vmem:[#allocation3 + $0x30] sm:$0xff] %vm464, %v4169
      %4247 = vst.msk [vmem:[#allocation3 + $0x38] sm:$0xff] %vm464, %v4171
      %4248 = vst.msk [vmem:[#allocation3 + $0x40] sm:$0xff] %vm464, %v4173
      %4249 = vst.msk [vmem:[#allocation3 + $0x48] sm:$0xff] %vm464, %v4175
      %4250 = vst.msk [vmem:[#allocation3 + $0x50] sm:$0xff] %vm464, %v4177
      %4251 = vst.msk [vmem:[#allocation3 + $0x58] sm:$0xff] %vm464, %v4179
      %4252 = vst.msk [vmem:[#allocation3 + $0x60] sm:$0xff] %vm464, %v4181
      %4253 = vst.msk [vmem:[#allocation3 + $0x68] sm:$0xff] %vm464, %v4183
      %4254 = vst.msk [vmem:[#allocation3 + $0x70] sm:$0xff] %vm464, %v4185
      %4255 = vst.msk [vmem:[#allocation3 + $0x78] sm:$0xff] %vm464, %v4187
      %4256 = vst.msk [vmem:[#allocation3 + $0x80] sm:$0xff] %vm464, %v4189
      %4257 = vst.msk [vmem:[#allocation3 + $0x88] sm:$0xff] %vm464, %v4191
      %4258 = vst.msk [vmem:[#allocation3 + $0x90] sm:$0xff] %vm464, %v4193
      %4259 = vst.msk [vmem:[#allocation3 + $0x98] sm:$0xff] %vm464, %v4195
      %4260 = vst.msk [vmem:[#allocation3 + $0xa0] sm:$0xff] %vm464, %v4197
      %4261 = vst.msk [vmem:[#allocation3 + $0xa8] sm:$0xff] %vm464, %v4199
      %4262 = vst.msk [vmem:[#allocation3 + $0xb0] sm:$0xff] %vm464, %v4201
      %4263 = vst.msk [vmem:[#allocation3 + $0xb8] sm:$0xff] %vm464, %v4203
      %4264 = vst.msk [vmem:[#allocation3 + $0xc0] sm:$0xff] %vm464, %v4205
      %4265 = vst.msk [vmem:[#allocation3 + $0xc8] sm:$0xff] %vm464, %v4207
      %4266 = vst.msk [vmem:[#allocation3 + $0xd0] sm:$0xff] %vm464, %v4209
      %4267 = vst.msk [vmem:[#allocation3 + $0xd8] sm:$0x3f] %vm492, %v4211
      %v4268 = vld [vmem:[#allocation2 + $0x13] sm:$0xff]
      %v4269 = vld [vmem:[#allocation2 + $0x1b] sm:$0xff]
      %v4270 = vld [vmem:[#allocation2 + $0x23] sm:$0xff]
      %v4271 = vld [vmem:[#allocation2 + $0x2b] sm:$0xff]
      %v4272 = vld [vmem:[#allocation2 + $0x33] sm:$0xff]
      %v4273 = vld [vmem:[#allocation2 + $0x3b] sm:$0xff]
      %v4274 = vld [vmem:[#allocation2 + $0x43] sm:$0xff]
      %v4275 = vld [vmem:[#allocation2 + $0x4b] sm:$0xff]
      %v4276 = vld [vmem:[#allocation2 + $0x53] sm:$0xff]
      %v4277 = vld [vmem:[#allocation2 + $0x5b] sm:$0xff]
      %v4278 = vld [vmem:[#allocation2 + $0x63] sm:$0xff]
      %v4279 = vld [vmem:[#allocation2 + $0x6b] sm:$0xff]
      %v4280 = vld [vmem:[#allocation2 + $0x73] sm:$0xff]
      %v4281 = vld [vmem:[#allocation2 + $0x7b] sm:$0xff]
      %v4282 = vld [vmem:[#allocation2 + $0x83] sm:$0xff]
      %v4283 = vld [vmem:[#allocation2 + $0x8b] sm:$0xff]
      %v4284 = vld [vmem:[#allocation2 + $0x93] sm:$0xff]
      %v4285 = vld [vmem:[#allocation2 + $0x9b] sm:$0xff]
      %v4286 = vld [vmem:[#allocation2 + $0xa3] sm:$0xff]
      %v4287 = vld [vmem:[#allocation2 + $0xab] sm:$0xff]
      %v4288 = vld [vmem:[#allocation2 + $0xb3] sm:$0xff]
      %v4289 = vld [vmem:[#allocation2 + $0xbb] sm:$0xff]
      %v4290 = vld [vmem:[#allocation2 + $0xc3] sm:$0xff]
      %v4291 = vld [vmem:[#allocation2 + $0xcb] sm:$0xff]
      %v4292 = vld [vmem:[#allocation2 + $0xd3] sm:$0xff]
      %v4293 = vld [vmem:[#allocation2 + $0xdb] sm:$0xff]
      %v4294 = vld [vmem:[#allocation2 + $0xe3] sm:$0xff]
      %v4295 = vld [vmem:[#allocation2 + $0xeb] sm:$0x3f]
      %4324 = vrot.lane.b32.xlu0 %v4268, 8
      %v4325 = vpop.permute.xlu0 %4324
      %4326 = vrot.lane.b32.xlu0 %v4269, 8
      %v4327 = vpop.permute.xlu0 %4326
      %4328 = vrot.lane.b32.xlu0 %v4270, 8
      %v4329 = vpop.permute.xlu0 %4328
      %4330 = vrot.lane.b32.xlu0 %v4271, 8
      %v4331 = vpop.permute.xlu0 %4330
      %4332 = vrot.lane.b32.xlu0 %v4272, 8
      %v4333 = vpop.permute.xlu0 %4332
      %4334 = vrot.lane.b32.xlu0 %v4273, 8
      %v4335 = vpop.permute.xlu0 %4334
      %4336 = vrot.lane.b32.xlu0 %v4274, 8
      %v4337 = vpop.permute.xlu0 %4336
      %4338 = vrot.lane.b32.xlu0 %v4275, 8
      %v4339 = vpop.permute.xlu0 %4338
      %4340 = vrot.lane.b32.xlu0 %v4276, 8
      %v4341 = vpop.permute.xlu0 %4340
      %4342 = vrot.lane.b32.xlu0 %v4277, 8
      %v4343 = vpop.permute.xlu0 %4342
      %4344 = vrot.lane.b32.xlu0 %v4278, 8
      %v4345 = vpop.permute.xlu0 %4344
      %4346 = vrot.lane.b32.xlu0 %v4279, 8
      %v4347 = vpop.permute.xlu0 %4346
      %4348 = vrot.lane.b32.xlu0 %v4280, 8
      %v4349 = vpop.permute.xlu0 %4348
      %4350 = vrot.lane.b32.xlu0 %v4281, 8
      %v4351 = vpop.permute.xlu0 %4350
      %4352 = vrot.lane.b32.xlu0 %v4282, 8
      %v4353 = vpop.permute.xlu0 %4352
      %4354 = vrot.lane.b32.xlu0 %v4283, 8
      %v4355 = vpop.permute.xlu0 %4354
      %4356 = vrot.lane.b32.xlu0 %v4284, 8
      %v4357 = vpop.permute.xlu0 %4356
      %4358 = vrot.lane.b32.xlu0 %v4285, 8
      %v4359 = vpop.permute.xlu0 %4358
      %4360 = vrot.lane.b32.xlu0 %v4286, 8
      %v4361 = vpop.permute.xlu0 %4360
      %4362 = vrot.lane.b32.xlu0 %v4287, 8
      %v4363 = vpop.permute.xlu0 %4362
      %4364 = vrot.lane.b32.xlu0 %v4288, 8
      %v4365 = vpop.permute.xlu0 %4364
      %4366 = vrot.lane.b32.xlu0 %v4289, 8
      %v4367 = vpop.permute.xlu0 %4366
      %4368 = vrot.lane.b32.xlu0 %v4290, 8
      %v4369 = vpop.permute.xlu0 %4368
      %4370 = vrot.lane.b32.xlu0 %v4291, 8
      %v4371 = vpop.permute.xlu0 %4370
      %4372 = vrot.lane.b32.xlu0 %v4292, 8
      %v4373 = vpop.permute.xlu0 %4372
      %4374 = vrot.lane.b32.xlu0 %v4293, 8
      %v4375 = vpop.permute.xlu0 %4374
      %4376 = vrot.lane.b32.xlu0 %v4294, 8
      %v4377 = vpop.permute.xlu0 %4376
      %4378 = vrot.lane.b32.xlu0 %v4295, 8
      %v4379 = vpop.permute.xlu0 %4378
      %4408 = vst.msk [vmem:[#allocation3] sm:$0xff] %vm634, %v4325
      %4409 = vst.msk [vmem:[#allocation3 + $0x8] sm:$0xff] %vm634, %v4327
      %4410 = vst.msk [vmem:[#allocation3 + $0x10] sm:$0xff] %vm634, %v4329
      %4411 = vst.msk [vmem:[#allocation3 + $0x18] sm:$0xff] %vm634, %v4331
      %4412 = vst.msk [vmem:[#allocation3 + $0x20] sm:$0xff] %vm634, %v4333
      %4413 = vst.msk [vmem:[#allocation3 + $0x28] sm:$0xff] %vm634, %v4335
      %4414 = vst.msk [vmem:[#allocation3 + $0x30] sm:$0xff] %vm634, %v4337
      %4415 = vst.msk [vmem:[#allocation3 + $0x38] sm:$0xff] %vm634, %v4339
      %4416 = vst.msk [vmem:[#allocation3 + $0x40] sm:$0xff] %vm634, %v4341
      %4417 = vst.msk [vmem:[#allocation3 + $0x48] sm:$0xff] %vm634, %v4343
      %4418 = vst.msk [vmem:[#allocation3 + $0x50] sm:$0xff] %vm634, %v4345
      %4419 = vst.msk [vmem:[#allocation3 + $0x58] sm:$0xff] %vm634, %v4347
      %4420 = vst.msk [vmem:[#allocation3 + $0x60] sm:$0xff] %vm634, %v4349
      %4421 = vst.msk [vmem:[#allocation3 + $0x68] sm:$0xff] %vm634, %v4351
      %4422 = vst.msk [vmem:[#allocation3 + $0x70] sm:$0xff] %vm634, %v4353
      %4423 = vst.msk [vmem:[#allocation3 + $0x78] sm:$0xff] %vm634, %v4355
      %4424 = vst.msk [vmem:[#allocation3 + $0x80] sm:$0xff] %vm634, %v4357
      %4425 = vst.msk [vmem:[#allocation3 + $0x88] sm:$0xff] %vm634, %v4359
      %4426 = vst.msk [vmem:[#allocation3 + $0x90] sm:$0xff] %vm634, %v4361
      %4427 = vst.msk [vmem:[#allocation3 + $0x98] sm:$0xff] %vm634, %v4363
      %4428 = vst.msk [vmem:[#allocation3 + $0xa0] sm:$0xff] %vm634, %v4365
      %4429 = vst.msk [vmem:[#allocation3 + $0xa8] sm:$0xff] %vm634, %v4367
      %4430 = vst.msk [vmem:[#allocation3 + $0xb0] sm:$0xff] %vm634, %v4369
      %4431 = vst.msk [vmem:[#allocation3 + $0xb8] sm:$0xff] %vm634, %v4371
      %4432 = vst.msk [vmem:[#allocation3 + $0xc0] sm:$0xff] %vm634, %v4373
      %4433 = vst.msk [vmem:[#allocation3 + $0xc8] sm:$0xff] %vm634, %v4375
      %4434 = vst.msk [vmem:[#allocation3 + $0xd0] sm:$0xff] %vm634, %v4377
      %4435 = vst.msk [vmem:[#allocation3 + $0xd8] sm:$0x3f] %vm662, %v4379
      %v4436 = vld [vmem:[#allocation2 + $0x21] sm:$0xff]
      %v4437 = vld [vmem:[#allocation2 + $0x29] sm:$0xff]
      %v4438 = vld [vmem:[#allocation2 + $0x31] sm:$0xff]
      %v4439 = vld [vmem:[#allocation2 + $0x39] sm:$0xff]
      %v4440 = vld [vmem:[#allocation2 + $0x41] sm:$0xff]
      %v4441 = vld [vmem:[#allocation2 + $0x49] sm:$0xff]
      %v4442 = vld [vmem:[#allocation2 + $0x51] sm:$0xff]
      %v4443 = vld [vmem:[#allocation2 + $0x59] sm:$0xff]
      %v4444 = vld [vmem:[#allocation2 + $0x61] sm:$0xff]
      %v4445 = vld [vmem:[#allocation2 + $0x69] sm:$0xff]
      %v4446 = vld [vmem:[#allocation2 + $0x71] sm:$0xff]
      %v4447 = vld [vmem:[#allocation2 + $0x79] sm:$0xff]
      %v4448 = vld [vmem:[#allocation2 + $0x81] sm:$0xff]
      %v4449 = vld [vmem:[#allocation2 + $0x89] sm:$0xff]
      %v4450 = vld [vmem:[#allocation2 + $0x91] sm:$0xff]
      %v4451 = vld [vmem:[#allocation2 + $0x99] sm:$0xff]
      %v4452 = vld [vmem:[#allocation2 + $0xa1] sm:$0xff]
      %v4453 = vld [vmem:[#allocation2 + $0xa9] sm:$0xff]
      %v4454 = vld [vmem:[#allocation2 + $0xb1] sm:$0xff]
      %v4455 = vld [vmem:[#allocation2 + $0xb9] sm:$0xff]
      %v4456 = vld [vmem:[#allocation2 + $0xc1] sm:$0xff]
      %v4457 = vld [vmem:[#allocation2 + $0xc9] sm:$0xff]
      %v4458 = vld [vmem:[#allocation2 + $0xd1] sm:$0xff]
      %v4459 = vld [vmem:[#allocation2 + $0xd9] sm:$0xff]
      %v4460 = vld [vmem:[#allocation2 + $0xe1] sm:$0xff]
      %v4461 = vld [vmem:[#allocation2 + $0xe9] sm:$0xff]
      %v4462 = vld [vmem:[#allocation2 + $0xf1] sm:$0xff]
      %v4463 = vld [vmem:[#allocation2 + $0xf9] sm:$0x3f]
      %4492 = vrot.lane.b32.xlu0 %v4436, 12
      %v4493 = vpop.permute.xlu0 %4492
      %4494 = vrot.lane.b32.xlu0 %v4437, 12
      %v4495 = vpop.permute.xlu0 %4494
      %4496 = vrot.lane.b32.xlu0 %v4438, 12
      %v4497 = vpop.permute.xlu0 %4496
      %4498 = vrot.lane.b32.xlu0 %v4439, 12
      %v4499 = vpop.permute.xlu0 %4498
      %4500 = vrot.lane.b32.xlu0 %v4440, 12
      %v4501 = vpop.permute.xlu0 %4500
      %4502 = vrot.lane.b32.xlu0 %v4441, 12
      %v4503 = vpop.permute.xlu0 %4502
      %4504 = vrot.lane.b32.xlu0 %v4442, 12
      %v4505 = vpop.permute.xlu0 %4504
      %4506 = vrot.lane.b32.xlu0 %v4443, 12
      %v4507 = vpop.permute.xlu0 %4506
      %4508 = vrot.lane.b32.xlu0 %v4444, 12
      %v4509 = vpop.permute.xlu0 %4508
      %4510 = vrot.lane.b32.xlu0 %v4445, 12
      %v4511 = vpop.permute.xlu0 %4510
      %4512 = vrot.lane.b32.xlu0 %v4446, 12
      %v4513 = vpop.permute.xlu0 %4512
      %4514 = vrot.lane.b32.xlu0 %v4447, 12
      %v4515 = vpop.permute.xlu0 %4514
      %4516 = vrot.lane.b32.xlu0 %v4448, 12
      %v4517 = vpop.permute.xlu0 %4516
      %4518 = vrot.lane.b32.xlu0 %v4449, 12
      %v4519 = vpop.permute.xlu0 %4518
      %4520 = vrot.lane.b32.xlu0 %v4450, 12
      %v4521 = vpop.permute.xlu0 %4520
      %4522 = vrot.lane.b32.xlu0 %v4451, 12
      %v4523 = vpop.permute.xlu0 %4522
      %4524 = vrot.lane.b32.xlu0 %v4452, 12
      %v4525 = vpop.permute.xlu0 %4524
      %4526 = vrot.lane.b32.xlu0 %v4453, 12
      %v4527 = vpop.permute.xlu0 %4526
      %4528 = vrot.lane.b32.xlu0 %v4454, 12
      %v4529 = vpop.permute.xlu0 %4528
      %4530 = vrot.lane.b32.xlu0 %v4455, 12
      %v4531 = vpop.permute.xlu0 %4530
      %4532 = vrot.lane.b32.xlu0 %v4456, 12
      %v4533 = vpop.permute.xlu0 %4532
      %4534 = vrot.lane.b32.xlu0 %v4457, 12
      %v4535 = vpop.permute.xlu0 %4534
      %4536 = vrot.lane.b32.xlu0 %v4458, 12
      %v4537 = vpop.permute.xlu0 %4536
      %4538 = vrot.lane.b32.xlu0 %v4459, 12
      %v4539 = vpop.permute.xlu0 %4538
      %4540 = vrot.lane.b32.xlu0 %v4460, 12
      %v4541 = vpop.permute.xlu0 %4540
      %4542 = vrot.lane.b32.xlu0 %v4461, 12
      %v4543 = vpop.permute.xlu0 %4542
      %4544 = vrot.lane.b32.xlu0 %v4462, 12
      %v4545 = vpop.permute.xlu0 %4544
      %4546 = vrot.lane.b32.xlu0 %v4463, 12
      %v4547 = vpop.permute.xlu0 %4546
      %4576 = vst.msk [vmem:[#allocation3] sm:$0xff] %vm804, %v4493
      %4577 = vst.msk [vmem:[#allocation3 + $0x8] sm:$0xff] %vm804, %v4495
      %4578 = vst.msk [vmem:[#allocation3 + $0x10] sm:$0xff] %vm804, %v4497
      %4579 = vst.msk [vmem:[#allocation3 + $0x18] sm:$0xff] %vm804, %v4499
      %4580 = vst.msk [vmem:[#allocation3 + $0x20] sm:$0xff] %vm804, %v4501
      %4581 = vst.msk [vmem:[#allocation3 + $0x28] sm:$0xff] %vm804, %v4503
      %4582 = vst.msk [vmem:[#allocation3 + $0x30] sm:$0xff] %vm804, %v4505
      %4583 = vst.msk [vmem:[#allocation3 + $0x38] sm:$0xff] %vm804, %v4507
      %4584 = vst.msk [vmem:[#allocation3 + $0x40] sm:$0xff] %vm804, %v4509
      %4585 = vst.msk [vmem:[#allocation3 + $0x48] sm:$0xff] %vm804, %v4511
      %4586 = vst.msk [vmem:[#allocation3 + $0x50] sm:$0xff] %vm804, %v4513
      %4587 = vst.msk [vmem:[#allocation3 + $0x58] sm:$0xff] %vm804, %v4515
      %4588 = vst.msk [vmem:[#allocation3 + $0x60] sm:$0xff] %vm804, %v4517
      %4589 = vst.msk [vmem:[#allocation3 + $0x68] sm:$0xff] %vm804, %v4519
      %4590 = vst.msk [vmem:[#allocation3 + $0x70] sm:$0xff] %vm804, %v4521
      %4591 = vst.msk [vmem:[#allocation3 + $0x78] sm:$0xff] %vm804, %v4523
      %4592 = vst.msk [vmem:[#allocation3 + $0x80] sm:$0xff] %vm804, %v4525
      %4593 = vst.msk [vmem:[#allocation3 + $0x88] sm:$0xff] %vm804, %v4527
      %4594 = vst.msk [vmem:[#allocation3 + $0x90] sm:$0xff] %vm804, %v4529
      %4595 = vst.msk [vmem:[#allocation3 + $0x98] sm:$0xff] %vm804, %v4531
      %4596 = vst.msk [vmem:[#allocation3 + $0xa0] sm:$0xff] %vm804, %v4533
      %4597 = vst.msk [vmem:[#allocation3 + $0xa8] sm:$0xff] %vm804, %v4535
      %4598 = vst.msk [vmem:[#allocation3 + $0xb0] sm:$0xff] %vm804, %v4537
      %4599 = vst.msk [vmem:[#allocation3 + $0xb8] sm:$0xff] %vm804, %v4539
      %4600 = vst.msk [vmem:[#allocation3 + $0xc0] sm:$0xff] %vm804, %v4541
      %4601 = vst.msk [vmem:[#allocation3 + $0xc8] sm:$0xff] %vm804, %v4543
      %4602 = vst.msk [vmem:[#allocation3 + $0xd0] sm:$0xff] %vm804, %v4545
      %4603 = vst.msk [vmem:[#allocation3 + $0xd8] sm:$0x3f] %vm832, %v4547
      %v4604 = vld [vmem:[#allocation2 + $0x22] sm:$0xff]
      %v4605 = vld [vmem:[#allocation2 + $0x2a] sm:$0xff]
      %v4606 = vld [vmem:[#allocation2 + $0x32] sm:$0xff]
      %v4607 = vld [vmem:[#allocation2 + $0x3a] sm:$0xff]
      %v4608 = vld [vmem:[#allocation2 + $0x42] sm:$0xff]
      %v4609 = vld [vmem:[#allocation2 + $0x4a] sm:$0xff]
      %v4610 = vld [vmem:[#allocation2 + $0x52] sm:$0xff]
      %v4611 = vld [vmem:[#allocation2 + $0x5a] sm:$0xff]
      %v4612 = vld [vmem:[#allocation2 + $0x62] sm:$0xff]
      %v4613 = vld [vmem:[#allocation2 + $0x6a] sm:$0xff]
      %v4614 = vld [vmem:[#allocation2 + $0x72] sm:$0xff]
      %v4615 = vld [vmem:[#allocation2 + $0x7a] sm:$0xff]
      %v4616 = vld [vmem:[#allocation2 + $0x82] sm:$0xff]
      %v4617 = vld [vmem:[#allocation2 + $0x8a] sm:$0xff]
      %v4618 = vld [vmem:[#allocation2 + $0x92] sm:$0xff]
      %v4619 = vld [vmem:[#allocation2 + $0x9a] sm:$0xff]
      %v4620 = vld [vmem:[#allocation2 + $0xa2] sm:$0xff]
      %v4621 = vld [vmem:[#allocation2 + $0xaa] sm:$0xff]
      %v4622 = vld [vmem:[#allocation2 + $0xb2] sm:$0xff]
      %v4623 = vld [vmem:[#allocation2 + $0xba] sm:$0xff]
      %v4624 = vld [vmem:[#allocation2 + $0xc2] sm:$0xff]
      %v4625 = vld [vmem:[#allocation2 + $0xca] sm:$0xff]
      %v4626 = vld [vmem:[#allocation2 + $0xd2] sm:$0xff]
      %v4627 = vld [vmem:[#allocation2 + $0xda] sm:$0xff]
      %v4628 = vld [vmem:[#allocation2 + $0xe2] sm:$0xff]
      %v4629 = vld [vmem:[#allocation2 + $0xea] sm:$0xff]
      %v4630 = vld [vmem:[#allocation2 + $0xf2] sm:$0xff]
      %v4631 = vld [vmem:[#allocation2 + $0xfa] sm:$0x3f]
      %4660 = vrot.lane.b32.xlu0 %v4604, 16
      %v4661 = vpop.permute.xlu0 %4660
      %4662 = vrot.lane.b32.xlu0 %v4605, 16
      %v4663 = vpop.permute.xlu0 %4662
      %4664 = vrot.lane.b32.xlu0 %v4606, 16
      %v4665 = vpop.permute.xlu0 %4664
      %4666 = vrot.lane.b32.xlu0 %v4607, 16
      %v4667 = vpop.permute.xlu0 %4666
      %4668 = vrot.lane.b32.xlu0 %v4608, 16
      %v4669 = vpop.permute.xlu0 %4668
      %4670 = vrot.lane.b32.xlu0 %v4609, 16
      %v4671 = vpop.permute.xlu0 %4670
      %4672 = vrot.lane.b32.xlu0 %v4610, 16
      %v4673 = vpop.permute.xlu0 %4672
      %4674 = vrot.lane.b32.xlu0 %v4611, 16
      %v4675 = vpop.permute.xlu0 %4674
      %4676 = vrot.lane.b32.xlu0 %v4612, 16
      %v4677 = vpop.permute.xlu0 %4676
      %4678 = vrot.lane.b32.xlu0 %v4613, 16
      %v4679 = vpop.permute.xlu0 %4678
      %4680 = vrot.lane.b32.xlu0 %v4614, 16
      %v4681 = vpop.permute.xlu0 %4680
      %4682 = vrot.lane.b32.xlu0 %v4615, 16
      %v4683 = vpop.permute.xlu0 %4682
      %4684 = vrot.lane.b32.xlu0 %v4616, 16
      %v4685 = vpop.permute.xlu0 %4684
      %4686 = vrot.lane.b32.xlu0 %v4617, 16
      %v4687 = vpop.permute.xlu0 %4686
      %4688 = vrot.lane.b32.xlu0 %v4618, 16
      %v4689 = vpop.permute.xlu0 %4688
      %4690 = vrot.lane.b32.xlu0 %v4619, 16
      %v4691 = vpop.permute.xlu0 %4690
      %4692 = vrot.lane.b32.xlu0 %v4620, 16
      %v4693 = vpop.permute.xlu0 %4692
      %4694 = vrot.lane.b32.xlu0 %v4621, 16
      %v4695 = vpop.permute.xlu0 %4694
      %4696 = vrot.lane.b32.xlu0 %v4622, 16
      %v4697 = vpop.permute.xlu0 %4696
      %4698 = vrot.lane.b32.xlu0 %v4623, 16
      %v4699 = vpop.permute.xlu0 %4698
      %4700 = vrot.lane.b32.xlu0 %v4624, 16
      %v4701 = vpop.permute.xlu0 %4700
      %4702 = vrot.lane.b32.xlu0 %v4625, 16
      %v4703 = vpop.permute.xlu0 %4702
      %4704 = vrot.lane.b32.xlu0 %v4626, 16
      %v4705 = vpop.permute.xlu0 %4704
      %4706 = vrot.lane.b32.xlu0 %v4627, 16
      %v4707 = vpop.permute.xlu0 %4706
      %4708 = vrot.lane.b32.xlu0 %v4628, 16
      %v4709 = vpop.permute.xlu0 %4708
      %4710 = vrot.lane.b32.xlu0 %v4629, 16
      %v4711 = vpop.permute.xlu0 %4710
      %4712 = vrot.lane.b32.xlu0 %v4630, 16
      %v4713 = vpop.permute.xlu0 %4712
      %4714 = vrot.lane.b32.xlu0 %v4631, 16
      %v4715 = vpop.permute.xlu0 %4714
      %4744 = vst.msk [vmem:[#allocation3] sm:$0xff] %vm974, %v4661
      %4745 = vst.msk [vmem:[#allocation3 + $0x8] sm:$0xff] %vm974, %v4663
      %4746 = vst.msk [vmem:[#allocation3 + $0x10] sm:$0xff] %vm974, %v4665
      %4747 = vst.msk [vmem:[#allocation3 + $0x18] sm:$0xff] %vm974, %v4667
      %4748 = vst.msk [vmem:[#allocation3 + $0x20] sm:$0xff] %vm974, %v4669
      %4749 = vst.msk [vmem:[#allocation3 + $0x28] sm:$0xff] %vm974, %v4671
      %4750 = vst.msk [vmem:[#allocation3 + $0x30] sm:$0xff] %vm974, %v4673
      %4751 = vst.msk [vmem:[#allocation3 + $0x38] sm:$0xff] %vm974, %v4675
      %4752 = vst.msk [vmem:[#allocation3 + $0x40] sm:$0xff] %vm974, %v4677
      %4753 = vst.msk [vmem:[#allocation3 + $0x48] sm:$0xff] %vm974, %v4679
      %4754 = vst.msk [vmem:[#allocation3 + $0x50] sm:$0xff] %vm974, %v4681
      %4755 = vst.msk [vmem:[#allocation3 + $0x58] sm:$0xff] %vm974, %v4683
      %4756 = vst.msk [vmem:[#allocation3 + $0x60] sm:$0xff] %vm974, %v4685
      %4757 = vst.msk [vmem:[#allocation3 + $0x68] sm:$0xff] %vm974, %v4687
      %4758 = vst.msk [vmem:[#allocation3 + $0x70] sm:$0xff] %vm974, %v4689
      %4759 = vst.msk [vmem:[#allocation3 + $0x78] sm:$0xff] %vm974, %v4691
      %4760 = vst.msk [vmem:[#allocation3 + $0x80] sm:$0xff] %vm974, %v4693
      %4761 = vst.msk [vmem:[#allocation3 + $0x88] sm:$0xff] %vm974, %v4695
      %4762 = vst.msk [vmem:[#allocation3 + $0x90] sm:$0xff] %vm974, %v4697
      %4763 = vst.msk [vmem:[#allocation3 + $0x98] sm:$0xff] %vm974, %v4699
      %4764 = vst.msk [vmem:[#allocation3 + $0xa0] sm:$0xff] %vm974, %v4701
      %4765 = vst.msk [vmem:[#allocation3 + $0xa8] sm:$0xff] %vm974, %v4703
      %4766 = vst.msk [vmem:[#allocation3 + $0xb0] sm:$0xff] %vm974, %v4705
      %4767 = vst.msk [vmem:[#allocation3 + $0xb8] sm:$0xff] %vm974, %v4707
      %4768 = vst.msk [vmem:[#allocation3 + $0xc0] sm:$0xff] %vm974, %v4709
      %4769 = vst.msk [vmem:[#allocation3 + $0xc8] sm:$0xff] %vm974, %v4711
      %4770 = vst.msk [vmem:[#allocation3 + $0xd0] sm:$0xff] %vm974, %v4713
      %4771 = vst.msk [vmem:[#allocation3 + $0xd8] sm:$0x3f] %vm1002, %v4715
      %v4772 = vld [vmem:[#allocation2 + $0x23] sm:$0xff]
      %v4773 = vld [vmem:[#allocation2 + $0x2b] sm:$0xff]
      %v4774 = vld [vmem:[#allocation2 + $0x33] sm:$0xff]
      %v4775 = vld [vmem:[#allocation2 + $0x3b] sm:$0xff]
      %v4776 = vld [vmem:[#allocation2 + $0x43] sm:$0xff]
      %v4777 = vld [vmem:[#allocation2 + $0x4b] sm:$0xff]
      %v4778 = vld [vmem:[#allocation2 + $0x53] sm:$0xff]
      %v4779 = vld [vmem:[#allocation2 + $0x5b] sm:$0xff]
      %v4780 = vld [vmem:[#allocation2 + $0x63] sm:$0xff]
      %v4781 = vld [vmem:[#allocation2 + $0x6b] sm:$0xff]
      %v4782 = vld [vmem:[#allocation2 + $0x73] sm:$0xff]
      %v4783 = vld [vmem:[#allocation2 + $0x7b] sm:$0xff]
      %v4784 = vld [vmem:[#allocation2 + $0x83] sm:$0xff]
      %v4785 = vld [vmem:[#allocation2 + $0x8b] sm:$0xff]
      %v4786 = vld [vmem:[#allocation2 + $0x93] sm:$0xff]
      %v4787 = vld [vmem:[#allocation2 + $0x9b] sm:$0xff]
      %v4788 = vld [vmem:[#allocation2 + $0xa3] sm:$0xff]
      %v4789 = vld [vmem:[#allocation2 + $0xab] sm:$0xff]
      %v4790 = vld [vmem:[#allocation2 + $0xb3] sm:$0xff]
      %v4791 = vld [vmem:[#allocation2 + $0xbb] sm:$0xff]
      %v4792 = vld [vmem:[#allocation2 + $0xc3] sm:$0xff]
      %v4793 = vld [vmem:[#allocation2 + $0xcb] sm:$0xff]
      %v4794 = vld [vmem:[#allocation2 + $0xd3] sm:$0xff]
      %v4795 = vld [vmem:[#allocation2 + $0xdb] sm:$0xff]
      %v4796 = vld [vmem:[#allocation2 + $0xe3] sm:$0xff]
      %v4797 = vld [vmem:[#allocation2 + $0xeb] sm:$0xff]
      %v4798 = vld [vmem:[#allocation2 + $0xf3] sm:$0xff]
      %v4799 = vld [vmem:[#allocation2 + $0xfb] sm:$0x3f]
      %4828 = vrot.lane.b32.xlu0 %v4772, 20
      %v4829 = vpop.permute.xlu0 %4828
      %4830 = vrot.lane.b32.xlu0 %v4773, 20
      %v4831 = vpop.permute.xlu0 %4830
      %4832 = vrot.lane.b32.xlu0 %v4774, 20
      %v4833 = vpop.permute.xlu0 %4832
      %4834 = vrot.lane.b32.xlu0 %v4775, 20
      %v4835 = vpop.permute.xlu0 %4834
      %4836 = vrot.lane.b32.xlu0 %v4776, 20
      %v4837 = vpop.permute.xlu0 %4836
      %4838 = vrot.lane.b32.xlu0 %v4777, 20
      %v4839 = vpop.permute.xlu0 %4838
      %4840 = vrot.lane.b32.xlu0 %v4778, 20
      %v4841 = vpop.permute.xlu0 %4840
      %4842 = vrot.lane.b32.xlu0 %v4779, 20
      %v4843 = vpop.permute.xlu0 %4842
      %4844 = vrot.lane.b32.xlu0 %v4780, 20
      %v4845 = vpop.permute.xlu0 %4844
      %4846 = vrot.lane.b32.xlu0 %v4781, 20
      %v4847 = vpop.permute.xlu0 %4846
      %4848 = vrot.lane.b32.xlu0 %v4782, 20
      %v4849 = vpop.permute.xlu0 %4848
      %4850 = vrot.lane.b32.xlu0 %v4783, 20
      %v4851 = vpop.permute.xlu0 %4850
      %4852 = vrot.lane.b32.xlu0 %v4784, 20
      %v4853 = vpop.permute.xlu0 %4852
      %4854 = vrot.lane.b32.xlu0 %v4785, 20
      %v4855 = vpop.permute.xlu0 %4854
      %4856 = vrot.lane.b32.xlu0 %v4786, 20
      %v4857 = vpop.permute.xlu0 %4856
      %4858 = vrot.lane.b32.xlu0 %v4787, 20
      %v4859 = vpop.permute.xlu0 %4858
      %4860 = vrot.lane.b32.xlu0 %v4788, 20
      %v4861 = vpop.permute.xlu0 %4860
      %4862 = vrot.lane.b32.xlu0 %v4789, 20
      %v4863 = vpop.permute.xlu0 %4862
      %4864 = vrot.lane.b32.xlu0 %v4790, 20
      %v4865 = vpop.permute.xlu0 %4864
      %4866 = vrot.lane.b32.xlu0 %v4791, 20
      %v4867 = vpop.permute.xlu0 %4866
      %4868 = vrot.lane.b32.xlu0 %v4792, 20
      %v4869 = vpop.permute.xlu0 %4868
      %4870 = vrot.lane.b32.xlu0 %v4793, 20
      %v4871 = vpop.permute.xlu0 %4870
      %4872 = vrot.lane.b32.xlu0 %v4794, 20
      %v4873 = vpop.permute.xlu0 %4872
      %4874 = vrot.lane.b32.xlu0 %v4795, 20
      %v4875 = vpop.permute.xlu0 %4874
      %4876 = vrot.lane.b32.xlu0 %v4796, 20
      %v4877 = vpop.permute.xlu0 %4876
      %4878 = vrot.lane.b32.xlu0 %v4797, 20
      %v4879 = vpop.permute.xlu0 %4878
      %4880 = vrot.lane.b32.xlu0 %v4798, 20
      %v4881 = vpop.permute.xlu0 %4880
      %4882 = vrot.lane.b32.xlu0 %v4799, 20
      %v4883 = vpop.permute.xlu0 %4882
      %4912 = vst.msk [vmem:[#allocation3] sm:$0xff] %vm1144, %v4829
      %4913 = vst.msk [vmem:[#allocation3 + $0x8] sm:$0xff] %vm1144, %v4831
      %4914 = vst.msk [vmem:[#allocation3 + $0x10] sm:$0xff] %vm1144, %v4833
      %4915 = vst.msk [vmem:[#allocation3 + $0x18] sm:$0xff] %vm1144, %v4835
      %4916 = vst.msk [vmem:[#allocation3 + $0x20] sm:$0xff] %vm1144, %v4837
      %4917 = vst.msk [vmem:[#allocation3 + $0x28] sm:$0xff] %vm1144, %v4839
      %4918 = vst.msk [vmem:[#allocation3 + $0x30] sm:$0xff] %vm1144, %v4841
      %4919 = vst.msk [vmem:[#allocation3 + $0x38] sm:$0xff] %vm1144, %v4843
      %4920 = vst.msk [vmem:[#allocation3 + $0x40] sm:$0xff] %vm1144, %v4845
      %4921 = vst.msk [vmem:[#allocation3 + $0x48] sm:$0xff] %vm1144, %v4847
      %4922 = vst.msk [vmem:[#allocation3 + $0x50] sm:$0xff] %vm1144, %v4849
      %4923 = vst.msk [vmem:[#allocation3 + $0x58] sm:$0xff] %vm1144, %v4851
      %4924 = vst.msk [vmem:[#allocation3 + $0x60] sm:$0xff] %vm1144, %v4853
      %4925 = vst.msk [vmem:[#allocation3 + $0x68] sm:$0xff] %vm1144, %v4855
      %4926 = vst.msk [vmem:[#allocation3 + $0x70] sm:$0xff] %vm1144, %v4857
      %4927 = vst.msk [vmem:[#allocation3 + $0x78] sm:$0xff] %vm1144, %v4859
      %4928 = vst.msk [vmem:[#allocation3 + $0x80] sm:$0xff] %vm1144, %v4861
      %4929 = vst.msk [vmem:[#allocation3 + $0x88] sm:$0xff] %vm1144, %v4863
      %4930 = vst.msk [vmem:[#allocation3 + $0x90] sm:$0xff] %vm1144, %v4865
      %4931 = vst.msk [vmem:[#allocation3 + $0x98] sm:$0xff] %vm1144, %v4867
      %4932 = vst.msk [vmem:[#allocation3 + $0xa0] sm:$0xff] %vm1144, %v4869
      %4933 = vst.msk [vmem:[#allocation3 + $0xa8] sm:$0xff] %vm1144, %v4871
      %4934 = vst.msk [vmem:[#allocation3 + $0xb0] sm:$0xff] %vm1144, %v4873
      %4935 = vst.msk [vmem:[#allocation3 + $0xb8] sm:$0xff] %vm1144, %v4875
      %4936 = vst.msk [vmem:[#allocation3 + $0xc0] sm:$0xff] %vm1144, %v4877
      %4937 = vst.msk [vmem:[#allocation3 + $0xc8] sm:$0xff] %vm1144, %v4879
      %4938 = vst.msk [vmem:[#allocation3 + $0xd0] sm:$0xff] %vm1144, %v4881
      %4939 = vst.msk [vmem:[#allocation3 + $0xd8] sm:$0x3f] %vm1172, %v4883
      %v4940 = vld [vmem:[#allocation2 + $0x31] sm:$0xff]
      %v4941 = vld [vmem:[#allocation2 + $0x39] sm:$0xff]
      %v4942 = vld [vmem:[#allocation2 + $0x41] sm:$0xff]
      %v4943 = vld [vmem:[#allocation2 + $0x49] sm:$0xff]
      %v4944 = vld [vmem:[#allocation2 + $0x51] sm:$0xff]
      %v4945 = vld [vmem:[#allocation2 + $0x59] sm:$0xff]
      %v4946 = vld [vmem:[#allocation2 + $0x61] sm:$0xff]
      %v4947 = vld [vmem:[#allocation2 + $0x69] sm:$0xff]
      %v4948 = vld [vmem:[#allocation2 + $0x71] sm:$0xff]
      %v4949 = vld [vmem:[#allocation2 + $0x79] sm:$0xff]
      %v4950 = vld [vmem:[#allocation2 + $0x81] sm:$0xff]
      %v4951 = vld [vmem:[#allocation2 + $0x89] sm:$0xff]
      %v4952 = vld [vmem:[#allocation2 + $0x91] sm:$0xff]
      %v4953 = vld [vmem:[#allocation2 + $0x99] sm:$0xff]
      %v4954 = vld [vmem:[#allocation2 + $0xa1] sm:$0xff]
      %v4955 = vld [vmem:[#allocation2 + $0xa9] sm:$0xff]
      %v4956 = vld [vmem:[#allocation2 + $0xb1] sm:$0xff]
      %v4957 = vld [vmem:[#allocation2 + $0xb9] sm:$0xff]
      %v4958 = vld [vmem:[#allocation2 + $0xc1] sm:$0xff]
      %v4959 = vld [vmem:[#allocation2 + $0xc9] sm:$0xff]
      %v4960 = vld [vmem:[#allocation2 + $0xd1] sm:$0xff]
      %v4961 = vld [vmem:[#allocation2 + $0xd9] sm:$0xff]
      %v4962 = vld [vmem:[#allocation2 + $0xe1] sm:$0xff]
      %v4963 = vld [vmem:[#allocation2 + $0xe9] sm:$0xff]
      %v4964 = vld [vmem:[#allocation2 + $0xf1] sm:$0xff]
      %v4965 = vld [vmem:[#allocation2 + $0xf9] sm:$0xff]
      %v4966 = vld [vmem:[#allocation2 + $0x101] sm:$0xff]
      %v4967 = vld [vmem:[#allocation2 + $0x109] sm:$0x3f]
      %4996 = vrot.lane.b32.xlu0 %v4940, 24
      %v4997 = vpop.permute.xlu0 %4996
      %4998 = vrot.lane.b32.xlu0 %v4941, 24
      %v4999 = vpop.permute.xlu0 %4998
      %5000 = vrot.lane.b32.xlu0 %v4942, 24
      %v5001 = vpop.permute.xlu0 %5000
      %5002 = vrot.lane.b32.xlu0 %v4943, 24
      %v5003 = vpop.permute.xlu0 %5002
      %5004 = vrot.lane.b32.xlu0 %v4944, 24
      %v5005 = vpop.permute.xlu0 %5004
      %5006 = vrot.lane.b32.xlu0 %v4945, 24
      %v5007 = vpop.permute.xlu0 %5006
      %5008 = vrot.lane.b32.xlu0 %v4946, 24
      %v5009 = vpop.permute.xlu0 %5008
      %5010 = vrot.lane.b32.xlu0 %v4947, 24
      %v5011 = vpop.permute.xlu0 %5010
      %5012 = vrot.lane.b32.xlu0 %v4948, 24
      %v5013 = vpop.permute.xlu0 %5012
      %5014 = vrot.lane.b32.xlu0 %v4949, 24
      %v5015 = vpop.permute.xlu0 %5014
      %5016 = vrot.lane.b32.xlu0 %v4950, 24
      %v5017 = vpop.permute.xlu0 %5016
      %5018 = vrot.lane.b32.xlu0 %v4951, 24
      %v5019 = vpop.permute.xlu0 %5018
      %5020 = vrot.lane.b32.xlu0 %v4952, 24
      %v5021 = vpop.permute.xlu0 %5020
      %5022 = vrot.lane.b32.xlu0 %v4953, 24
      %v5023 = vpop.permute.xlu0 %5022
      %5024 = vrot.lane.b32.xlu0 %v4954, 24
      %v5025 = vpop.permute.xlu0 %5024
      %5026 = vrot.lane.b32.xlu0 %v4955, 24
      %v5027 = vpop.permute.xlu0 %5026
      %5028 = vrot.lane.b32.xlu0 %v4956, 24
      %v5029 = vpop.permute.xlu0 %5028
      %5030 = vrot.lane.b32.xlu0 %v4957, 24
      %v5031 = vpop.permute.xlu0 %5030
      %5032 = vrot.lane.b32.xlu0 %v4958, 24
      %v5033 = vpop.permute.xlu0 %5032
      %5034 = vrot.lane.b32.xlu0 %v4959, 24
      %v5035 = vpop.permute.xlu0 %5034
      %5036 = vrot.lane.b32.xlu0 %v4960, 24
      %v5037 = vpop.permute.xlu0 %5036
      %5038 = vrot.lane.b32.xlu0 %v4961, 24
      %v5039 = vpop.permute.xlu0 %5038
      %5040 = vrot.lane.b32.xlu0 %v4962, 24
      %v5041 = vpop.permute.xlu0 %5040
      %5042 = vrot.lane.b32.xlu0 %v4963, 24
      %v5043 = vpop.permute.xlu0 %5042
      %5044 = vrot.lane.b32.xlu0 %v4964, 24
      %v5045 = vpop.permute.xlu0 %5044
      %5046 = vrot.lane.b32.xlu0 %v4965, 24
      %v5047 = vpop.permute.xlu0 %5046
      %5048 = vrot.lane.b32.xlu0 %v4966, 24
      %v5049 = vpop.permute.xlu0 %5048
      %5050 = vrot.lane.b32.xlu0 %v4967, 24
      %v5051 = vpop.permute.xlu0 %5050
      %5080 = vst.msk [vmem:[#allocation3] sm:$0xff] %vm1314, %v4997
      %5081 = vst.msk [vmem:[#allocation3 + $0x8] sm:$0xff] %vm1314, %v4999
      %5082 = vst.msk [vmem:[#allocation3 + $0x10] sm:$0xff] %vm1314, %v5001
      %5083 = vst.msk [vmem:[#allocation3 + $0x18] sm:$0xff] %vm1314, %v5003
      %5084 = vst.msk [vmem:[#allocation3 + $0x20] sm:$0xff] %vm1314, %v5005
      %5085 = vst.msk [vmem:[#allocation3 + $0x28] sm:$0xff] %vm1314, %v5007
      %5086 = vst.msk [vmem:[#allocation3 + $0x30] sm:$0xff] %vm1314, %v5009
      %5087 = vst.msk [vmem:[#allocation3 + $0x38] sm:$0xff] %vm1314, %v5011
      %5088 = vst.msk [vmem:[#allocation3 + $0x40] sm:$0xff] %vm1314, %v5013
      %5089 = vst.msk [vmem:[#allocation3 + $0x48] sm:$0xff] %vm1314, %v5015
      %5090 = vst.msk [vmem:[#allocation3 + $0x50] sm:$0xff] %vm1314, %v5017
      %5091 = vst.msk [vmem:[#allocation3 + $0x58] sm:$0xff] %vm1314, %v5019
      %5092 = vst.msk [vmem:[#allocation3 + $0x60] sm:$0xff] %vm1314, %v5021
      %5093 = vst.msk [vmem:[#allocation3 + $0x68] sm:$0xff] %vm1314, %v5023
      %5094 = vst.msk [vmem:[#allocation3 + $0x70] sm:$0xff] %vm1314, %v5025
      %5095 = vst.msk [vmem:[#allocation3 + $0x78] sm:$0xff] %vm1314, %v5027
      %5096 = vst.msk [vmem:[#allocation3 + $0x80] sm:$0xff] %vm1314, %v5029
      %5097 = vst.msk [vmem:[#allocation3 + $0x88] sm:$0xff] %vm1314, %v5031
      %5098 = vst.msk [vmem:[#allocation3 + $0x90] sm:$0xff] %vm1314, %v5033
      %5099 = vst.msk [vmem:[#allocation3 + $0x98] sm:$0xff] %vm1314, %v5035
      %5100 = vst.msk [vmem:[#allocation3 + $0xa0] sm:$0xff] %vm1314, %v5037
      %5101 = vst.msk [vmem:[#allocation3 + $0xa8] sm:$0xff] %vm1314, %v5039
      %5102 = vst.msk [vmem:[#allocation3 + $0xb0] sm:$0xff] %vm1314, %v5041
      %5103 = vst.msk [vmem:[#allocation3 + $0xb8] sm:$0xff] %vm1314, %v5043
      %5104 = vst.msk [vmem:[#allocation3 + $0xc0] sm:$0xff] %vm1314, %v5045
      %5105 = vst.msk [vmem:[#allocation3 + $0xc8] sm:$0xff] %vm1314, %v5047
      %5106 = vst.msk [vmem:[#allocation3 + $0xd0] sm:$0xff] %vm1314, %v5049
      %5107 = vst.msk [vmem:[#allocation3 + $0xd8] sm:$0x3f] %vm1342, %v5051
      %v5108 = vld [vmem:[#allocation2 + $0x32] sm:$0xff]
      %v5109 = vld [vmem:[#allocation2 + $0x3a] sm:$0xff]
      %v5110 = vld [vmem:[#allocation2 + $0x42] sm:$0xff]
      %v5111 = vld [vmem:[#allocation2 + $0x4a] sm:$0xff]
      %v5112 = vld [vmem:[#allocation2 + $0x52] sm:$0xff]
      %v5113 = vld [vmem:[#allocation2 + $0x5a] sm:$0xff]
      %v5114 = vld [vmem:[#allocation2 + $0x62] sm:$0xff]
      %v5115 = vld [vmem:[#allocation2 + $0x6a] sm:$0xff]
      %v5116 = vld [vmem:[#allocation2 + $0x72] sm:$0xff]
      %v5117 = vld [vmem:[#allocation2 + $0x7a] sm:$0xff]
      %v5118 = vld [vmem:[#allocation2 + $0x82] sm:$0xff]
      %v5119 = vld [vmem:[#allocation2 + $0x8a] sm:$0xff]
      %v5120 = vld [vmem:[#allocation2 + $0x92] sm:$0xff]
      %v5121 = vld [vmem:[#allocation2 + $0x9a] sm:$0xff]
      %v5122 = vld [vmem:[#allocation2 + $0xa2] sm:$0xff]
      %v5123 = vld [vmem:[#allocation2 + $0xaa] sm:$0xff]
      %v5124 = vld [vmem:[#allocation2 + $0xb2] sm:$0xff]
      %v5125 = vld [vmem:[#allocation2 + $0xba] sm:$0xff]
      %v5126 = vld [vmem:[#allocation2 + $0xc2] sm:$0xff]
      %v5127 = vld [vmem:[#allocation2 + $0xca] sm:$0xff]
      %v5128 = vld [vmem:[#allocation2 + $0xd2] sm:$0xff]
      %v5129 = vld [vmem:[#allocation2 + $0xda] sm:$0xff]
      %v5130 = vld [vmem:[#allocation2 + $0xe2] sm:$0xff]
      %v5131 = vld [vmem:[#allocation2 + $0xea] sm:$0xff]
      %v5132 = vld [vmem:[#allocation2 + $0xf2] sm:$0xff]
      %v5133 = vld [vmem:[#allocation2 + $0xfa] sm:$0xff]
      %v5134 = vld [vmem:[#allocation2 + $0x102] sm:$0xff]
      %v5135 = vld [vmem:[#allocation2 + $0x10a] sm:$0x3f]
      %5164 = vrot.lane.b32.xlu0 %v5108, 28
      %v5165 = vpop.permute.xlu0 %5164
      %5166 = vrot.lane.b32.xlu0 %v5109, 28
      %v5167 = vpop.permute.xlu0 %5166
      %5168 = vrot.lane.b32.xlu0 %v5110, 28
      %v5169 = vpop.permute.xlu0 %5168
      %5170 = vrot.lane.b32.xlu0 %v5111, 28
      %v5171 = vpop.permute.xlu0 %5170
      %5172 = vrot.lane.b32.xlu0 %v5112, 28
      %v5173 = vpop.permute.xlu0 %5172
      %5174 = vrot.lane.b32.xlu0 %v5113, 28
      %v5175 = vpop.permute.xlu0 %5174
      %5176 = vrot.lane.b32.xlu0 %v5114, 28
      %v5177 = vpop.permute.xlu0 %5176
      %5178 = vrot.lane.b32.xlu0 %v5115, 28
      %v5179 = vpop.permute.xlu0 %5178
      %5180 = vrot.lane.b32.xlu0 %v5116, 28
      %v5181 = vpop.permute.xlu0 %5180
      %5182 = vrot.lane.b32.xlu0 %v5117, 28
      %v5183 = vpop.permute.xlu0 %5182
      %5184 = vrot.lane.b32.xlu0 %v5118, 28
      %v5185 = vpop.permute.xlu0 %5184
      %5186 = vrot.lane.b32.xlu0 %v5119, 28
      %v5187 = vpop.permute.xlu0 %5186
      %5188 = vrot.lane.b32.xlu0 %v5120, 28
      %v5189 = vpop.permute.xlu0 %5188
      %5190 = vrot.lane.b32.xlu0 %v5121, 28
      %v5191 = vpop.permute.xlu0 %5190
      %5192 = vrot.lane.b32.xlu0 %v5122, 28
      %v5193 = vpop.permute.xlu0 %5192
      %5194 = vrot.lane.b32.xlu0 %v5123, 28
      %v5195 = vpop.permute.xlu0 %5194
      %5196 = vrot.lane.b32.xlu0 %v5124, 28
      %v5197 = vpop.permute.xlu0 %5196
      %5198 = vrot.lane.b32.xlu0 %v5125, 28
      %v5199 = vpop.permute.xlu0 %5198
      %5200 = vrot.lane.b32.xlu0 %v5126, 28
      %v5201 = vpop.permute.xlu0 %5200
      %5202 = vrot.lane.b32.xlu0 %v5127, 28
      %v5203 = vpop.permute.xlu0 %5202
      %5204 = vrot.lane.b32.xlu0 %v5128, 28
      %v5205 = vpop.permute.xlu0 %5204
      %5206 = vrot.lane.b32.xlu0 %v5129, 28
      %v5207 = vpop.permute.xlu0 %5206
      %5208 = vrot.lane.b32.xlu0 %v5130, 28
      %v5209 = vpop.permute.xlu0 %5208
      %5210 = vrot.lane.b32.xlu0 %v5131, 28
      %v5211 = vpop.permute.xlu0 %5210
      %5212 = vrot.lane.b32.xlu0 %v5132, 28
      %v5213 = vpop.permute.xlu0 %5212
      %5214 = vrot.lane.b32.xlu0 %v5133, 28
      %v5215 = vpop.permute.xlu0 %5214
      %5216 = vrot.lane.b32.xlu0 %v5134, 28
      %v5217 = vpop.permute.xlu0 %5216
      %5218 = vrot.lane.b32.xlu0 %v5135, 28
      %v5219 = vpop.permute.xlu0 %5218
      %5248 = vst.msk [vmem:[#allocation3] sm:$0xff] %vm1484, %v5165
      %5249 = vst.msk [vmem:[#allocation3 + $0x8] sm:$0xff] %vm1484, %v5167
      %5250 = vst.msk [vmem:[#allocation3 + $0x10] sm:$0xff] %vm1484, %v5169
      %5251 = vst.msk [vmem:[#allocation3 + $0x18] sm:$0xff] %vm1484, %v5171
      %5252 = vst.msk [vmem:[#allocation3 + $0x20] sm:$0xff] %vm1484, %v5173
      %5253 = vst.msk [vmem:[#allocation3 + $0x28] sm:$0xff] %vm1484, %v5175
      %5254 = vst.msk [vmem:[#allocation3 + $0x30] sm:$0xff] %vm1484, %v5177
      %5255 = vst.msk [vmem:[#allocation3 + $0x38] sm:$0xff] %vm1484, %v5179
      %5256 = vst.msk [vmem:[#allocation3 + $0x40] sm:$0xff] %vm1484, %v5181
      %5257 = vst.msk [vmem:[#allocation3 + $0x48] sm:$0xff] %vm1484, %v5183
      %5258 = vst.msk [vmem:[#allocation3 + $0x50] sm:$0xff] %vm1484, %v5185
      %5259 = vst.msk [vmem:[#allocation3 + $0x58] sm:$0xff] %vm1484, %v5187
      %5260 = vst.msk [vmem:[#allocation3 + $0x60] sm:$0xff] %vm1484, %v5189
      %5261 = vst.msk [vmem:[#allocation3 + $0x68] sm:$0xff] %vm1484, %v5191
      %5262 = vst.msk [vmem:[#allocation3 + $0x70] sm:$0xff] %vm1484, %v5193
      %5263 = vst.msk [vmem:[#allocation3 + $0x78] sm:$0xff] %vm1484, %v5195
      %5264 = vst.msk [vmem:[#allocation3 + $0x80] sm:$0xff] %vm1484, %v5197
      %5265 = vst.msk [vmem:[#allocation3 + $0x88] sm:$0xff] %vm1484, %v5199
      %5266 = vst.msk [vmem:[#allocation3 + $0x90] sm:$0xff] %vm1484, %v5201
      %5267 = vst.msk [vmem:[#allocation3 + $0x98] sm:$0xff] %vm1484, %v5203
      %5268 = vst.msk [vmem:[#allocation3 + $0xa0] sm:$0xff] %vm1484, %v5205
      %5269 = vst.msk [vmem:[#allocation3 + $0xa8] sm:$0xff] %vm1484, %v5207
      %5270 = vst.msk [vmem:[#allocation3 + $0xb0] sm:$0xff] %vm1484, %v5209
      %5271 = vst.msk [vmem:[#allocation3 + $0xb8] sm:$0xff] %vm1484, %v5211
      %5272 = vst.msk [vmem:[#allocation3 + $0xc0] sm:$0xff] %vm1484, %v5213
      %5273 = vst.msk [vmem:[#allocation3 + $0xc8] sm:$0xff] %vm1484, %v5215
      %5274 = vst.msk [vmem:[#allocation3 + $0xd0] sm:$0xff] %vm1484, %v5217
      %5275 = vst.msk [vmem:[#allocation3 + $0xd8] sm:$0x3f] %vm1512, %v5219
      %v5276 = vld [vmem:[#allocation2 + $0x33] sm:$0xff]
      %v5277 = vld [vmem:[#allocation2 + $0x3b] sm:$0xff]
      %v5278 = vld [vmem:[#allocation2 + $0x43] sm:$0xff]
      %v5279 = vld [vmem:[#allocation2 + $0x4b] sm:$0xff]
      %v5280 = vld [vmem:[#allocation2 + $0x53] sm:$0xff]
      %v5281 = vld [vmem:[#allocation2 + $0x5b] sm:$0xff]
      %v5282 = vld [vmem:[#allocation2 + $0x63] sm:$0xff]
      %v5283 = vld [vmem:[#allocation2 + $0x6b] sm:$0xff]
      %v5284 = vld [vmem:[#allocation2 + $0x73] sm:$0xff]
      %v5285 = vld [vmem:[#allocation2 + $0x7b] sm:$0xff]
      %v5286 = vld [vmem:[#allocation2 + $0x83] sm:$0xff]
      %v5287 = vld [vmem:[#allocation2 + $0x8b] sm:$0xff]
      %v5288 = vld [vmem:[#allocation2 + $0x93] sm:$0xff]
      %v5289 = vld [vmem:[#allocation2 + $0x9b] sm:$0xff]
      %v5290 = vld [vmem:[#allocation2 + $0xa3] sm:$0xff]
      %v5291 = vld [vmem:[#allocation2 + $0xab] sm:$0xff]
      %v5292 = vld [vmem:[#allocation2 + $0xb3] sm:$0xff]
      %v5293 = vld [vmem:[#allocation2 + $0xbb] sm:$0xff]
      %v5294 = vld [vmem:[#allocation2 + $0xc3] sm:$0xff]
      %v5295 = vld [vmem:[#allocation2 + $0xcb] sm:$0xff]
      %v5296 = vld [vmem:[#allocation2 + $0xd3] sm:$0xff]
      %v5297 = vld [vmem:[#allocation2 + $0xdb] sm:$0xff]
      %v5298 = vld [vmem:[#allocation2 + $0xe3] sm:$0xff]
      %v5299 = vld [vmem:[#allocation2 + $0xeb] sm:$0xff]
      %v5300 = vld [vmem:[#allocation2 + $0xf3] sm:$0xff]
      %v5301 = vld [vmem:[#allocation2 + $0xfb] sm:$0xff]
      %v5302 = vld [vmem:[#allocation2 + $0x103] sm:$0xff]
      %v5303 = vld [vmem:[#allocation2 + $0x10b] sm:$0x3f]
      %5332 = vrot.lane.b32.xlu0 %v5276, 32
      %v5333 = vpop.permute.xlu0 %5332
      %5334 = vrot.lane.b32.xlu0 %v5277, 32
      %v5335 = vpop.permute.xlu0 %5334
      %5336 = vrot.lane.b32.xlu0 %v5278, 32
      %v5337 = vpop.permute.xlu0 %5336
      %5338 = vrot.lane.b32.xlu0 %v5279, 32
      %v5339 = vpop.permute.xlu0 %5338
      %5340 = vrot.lane.b32.xlu0 %v5280, 32
      %v5341 = vpop.permute.xlu0 %5340
      %5342 = vrot.lane.b32.xlu0 %v5281, 32
      %v5343 = vpop.permute.xlu0 %5342
      %5344 = vrot.lane.b32.xlu0 %v5282, 32
      %v5345 = vpop.permute.xlu0 %5344
      %5346 = vrot.lane.b32.xlu0 %v5283, 32
      %v5347 = vpop.permute.xlu0 %5346
      %5348 = vrot.lane.b32.xlu0 %v5284, 32
      %v5349 = vpop.permute.xlu0 %5348
      %5350 = vrot.lane.b32.xlu0 %v5285, 32
      %v5351 = vpop.permute.xlu0 %5350
      %5352 = vrot.lane.b32.xlu0 %v5286, 32
      %v5353 = vpop.permute.xlu0 %5352
      %5354 = vrot.lane.b32.xlu0 %v5287, 32
      %v5355 = vpop.permute.xlu0 %5354
      %5356 = vrot.lane.b32.xlu0 %v5288, 32
      %v5357 = vpop.permute.xlu0 %5356
      %5358 = vrot.lane.b32.xlu0 %v5289, 32
      %v5359 = vpop.permute.xlu0 %5358
      %5360 = vrot.lane.b32.xlu0 %v5290, 32
      %v5361 = vpop.permute.xlu0 %5360
      %5362 = vrot.lane.b32.xlu0 %v5291, 32
      %v5363 = vpop.permute.xlu0 %5362
      %5364 = vrot.lane.b32.xlu0 %v5292, 32
      %v5365 = vpop.permute.xlu0 %5364
      %5366 = vrot.lane.b32.xlu0 %v5293, 32
      %v5367 = vpop.permute.xlu0 %5366
      %5368 = vrot.lane.b32.xlu0 %v5294, 32
      %v5369 = vpop.permute.xlu0 %5368
      %5370 = vrot.lane.b32.xlu0 %v5295, 32
      %v5371 = vpop.permute.xlu0 %5370
      %5372 = vrot.lane.b32.xlu0 %v5296, 32
      %v5373 = vpop.permute.xlu0 %5372
      %5374 = vrot.lane.b32.xlu0 %v5297, 32
      %v5375 = vpop.permute.xlu0 %5374
      %5376 = vrot.lane.b32.xlu0 %v5298, 32
      %v5377 = vpop.permute.xlu0 %5376
      %5378 = vrot.lane.b32.xlu0 %v5299, 32
      %v5379 = vpop.permute.xlu0 %5378
      %5380 = vrot.lane.b32.xlu0 %v5300, 32
      %v5381 = vpop.permute.xlu0 %5380
      %5382 = vrot.lane.b32.xlu0 %v5301, 32
      %v5383 = vpop.permute.xlu0 %5382
      %5384 = vrot.lane.b32.xlu0 %v5302, 32
      %v5385 = vpop.permute.xlu0 %5384
      %5386 = vrot.lane.b32.xlu0 %v5303, 32
      %v5387 = vpop.permute.xlu0 %5386
      %5416 = vst.msk [vmem:[#allocation3] sm:$0xff] %vm1654, %v5333
      %5417 = vst.msk [vmem:[#allocation3 + $0x8] sm:$0xff] %vm1654, %v5335
      %5418 = vst.msk [vmem:[#allocation3 + $0x10] sm:$0xff] %vm1654, %v5337
      %5419 = vst.msk [vmem:[#allocation3 + $0x18] sm:$0xff] %vm1654, %v5339
      %5420 = vst.msk [vmem:[#allocation3 + $0x20] sm:$0xff] %vm1654, %v5341
      %5421 = vst.msk [vmem:[#allocation3 + $0x28] sm:$0xff] %vm1654, %v5343
      %5422 = vst.msk [vmem:[#allocation3 + $0x30] sm:$0xff] %vm1654, %v5345
      %5423 = vst.msk [vmem:[#allocation3 + $0x38] sm:$0xff] %vm1654, %v5347
      %5424 = vst.msk [vmem:[#allocation3 + $0x40] sm:$0xff] %vm1654, %v5349
      %5425 = vst.msk [vmem:[#allocation3 + $0x48] sm:$0xff] %vm1654, %v5351
      %5426 = vst.msk [vmem:[#allocation3 + $0x50] sm:$0xff] %vm1654, %v5353
      %5427 = vst.msk [vmem:[#allocation3 + $0x58] sm:$0xff] %vm1654, %v5355
      %5428 = vst.msk [vmem:[#allocation3 + $0x60] sm:$0xff] %vm1654, %v5357
      %5429 = vst.msk [vmem:[#allocation3 + $0x68] sm:$0xff] %vm1654, %v5359
      %5430 = vst.msk [vmem:[#allocation3 + $0x70] sm:$0xff] %vm1654, %v5361
      %5431 = vst.msk [vmem:[#allocation3 + $0x78] sm:$0xff] %vm1654, %v5363
      %5432 = vst.msk [vmem:[#allocation3 + $0x80] sm:$0xff] %vm1654, %v5365
      %5433 = vst.msk [vmem:[#allocation3 + $0x88] sm:$0xff] %vm1654, %v5367
      %5434 = vst.msk [vmem:[#allocation3 + $0x90] sm:$0xff] %vm1654, %v5369
      %5435 = vst.msk [vmem:[#allocation3 + $0x98] sm:$0xff] %vm1654, %v5371
      %5436 = vst.msk [vmem:[#allocation3 + $0xa0] sm:$0xff] %vm1654, %v5373
      %5437 = vst.msk [vmem:[#allocation3 + $0xa8] sm:$0xff] %vm1654, %v5375
      %5438 = vst.msk [vmem:[#allocation3 + $0xb0] sm:$0xff] %vm1654, %v5377
      %5439 = vst.msk [vmem:[#allocation3 + $0xb8] sm:$0xff] %vm1654, %v5379
      %5440 = vst.msk [vmem:[#allocation3 + $0xc0] sm:$0xff] %vm1654, %v5381
      %5441 = vst.msk [vmem:[#allocation3 + $0xc8] sm:$0xff] %vm1654, %v5383
      %5442 = vst.msk [vmem:[#allocation3 + $0xd0] sm:$0xff] %vm1654, %v5385
      %5443 = vst.msk [vmem:[#allocation3 + $0xd8] sm:$0x3f] %vm1682, %v5387
      %v5444 = vld [vmem:[#allocation3] sm:$0xff]
      %v5445 = vld [vmem:[#allocation3 + $0x8] sm:$0xff]
      %v5446 = vld [vmem:[#allocation3 + $0x10] sm:$0xff]
      %v5447 = vld [vmem:[#allocation3 + $0x18] sm:$0xff]
      %v5448 = vld [vmem:[#allocation3 + $0x20] sm:$0xff]
      %v5449 = vld [vmem:[#allocation3 + $0x28] sm:$0xff]
      %v5450 = vld [vmem:[#allocation3 + $0x30] sm:$0xff]
      %v5451 = vld [vmem:[#allocation3 + $0x38] sm:$0xff]
      %v5452 = vld [vmem:[#allocation3 + $0x40] sm:$0xff]
      %v5453 = vld [vmem:[#allocation3 + $0x48] sm:$0xff]
      %v5454 = vld [vmem:[#allocation3 + $0x50] sm:$0xff]
      %v5455 = vld [vmem:[#allocation3 + $0x58] sm:$0xff]
      %v5456 = vld [vmem:[#allocation3 + $0x60] sm:$0xff]
      %v5457 = vld [vmem:[#allocation3 + $0x68] sm:$0xff]
      %v5458 = vld [vmem:[#allocation3 + $0x70] sm:$0xff]
      %v5459 = vld [vmem:[#allocation3 + $0x78] sm:$0xff]
      %v5460 = vld [vmem:[#allocation3 + $0x80] sm:$0xff]
      %v5461 = vld [vmem:[#allocation3 + $0x88] sm:$0xff]
      %v5462 = vld [vmem:[#allocation3 + $0x90] sm:$0xff]
      %v5463 = vld [vmem:[#allocation3 + $0x98] sm:$0xff]
      %v5464 = vld [vmem:[#allocation3 + $0xa0] sm:$0xff]
      %v5465 = vld [vmem:[#allocation3 + $0xa8] sm:$0xff]
      %v5466 = vld [vmem:[#allocation3 + $0xb0] sm:$0xff]
      %v5467 = vld [vmem:[#allocation3 + $0xb8] sm:$0xff]
      %v5468 = vld [vmem:[#allocation3 + $0xc0] sm:$0xff]
      %v5469 = vld [vmem:[#allocation3 + $0xc8] sm:$0xff]
      %v5470 = vld [vmem:[#allocation3 + $0xd0] sm:$0xff]
      %v5471 = vld [vmem:[#allocation3 + $0xd8] sm:$0x3f]
      %v5472 = vld [vmem:[%s4] sm:$0xff]
      %v5473 = vld [vmem:[%s4 + $0x8] sm:$0xff]
      %v5474 = vld [vmem:[%s4 + $0x10] sm:$0xff]
      %v5475 = vld [vmem:[%s4 + $0x18] sm:$0xff]
      %v5476 = vld [vmem:[%s4 + $0x20] sm:$0xf]
      %v5478 = vsel %vm1717, %v5444, 0
      %v5481 = vsel %vm1717, %v5445, 0
      %v5484 = vsel %vm1717, %v5446, 0
      %v5487 = vsel %vm1717, %v5447, 0
      %v5490 = vsel %vm1717, %v5448, 0
      %v5493 = vsel %vm1717, %v5449, 0
      %v5496 = vsel %vm1717, %v5450, 0
      %v5499 = vsel %vm1717, %v5451, 0
      %v5502 = vsel %vm1717, %v5452, 0
      %v5505 = vsel %vm1717, %v5453, 0
      %v5508 = vsel %vm1717, %v5454, 0
      %v5511 = vsel %vm1717, %v5455, 0
      %v5514 = vsel %vm1717, %v5456, 0
      %v5517 = vsel %vm1717, %v5457, 0
      %v5520 = vsel %vm1717, %v5458, 0
      %v5523 = vsel %vm1717, %v5459, 0
      %v5526 = vsel %vm1717, %v5460, 0
      %v5529 = vsel %vm1717, %v5461, 0
      %v5532 = vsel %vm1717, %v5462, 0
      %v5535 = vsel %vm1717, %v5463, 0
      %v5538 = vsel %vm1717, %v5464, 0
      %v5541 = vsel %vm1717, %v5465, 0
      %v5544 = vsel %vm1717, %v5466, 0
      %v5547 = vsel %vm1717, %v5467, 0
      %v5550 = vsel %vm1717, %v5468, 0
      %v5553 = vsel %vm1717, %v5469, 0
      %v5556 = vsel %vm1717, %v5470, 0
      %v5559 = vsel %vm1717, %v5471, 0
      %v5562 = vsel %vm1802, %v5476, 0
      %5564 = vmatprep.subr.mxu0 0.0
      %5565 = vmatpush1.msra.mxu0 %v5472
      %5566 = vmatprep.subr.mxu0 0.0
      %5567 = vmatpush1.msra.mxu0 %v5473
      %5568 = vmatprep.subr.mxu0 0.0
      %5569 = vmatpush1.msra.mxu0 %v5474
      %5570 = vmatprep.subr.mxu0 0.0
      %5571 = vmatpush1.msra.mxu0 %v5475
      %5572 = vmatprep.subr.mxu0 0.0
      %5573 = vmatpush1.msra.mxu0 %v5562
      %5574 = vmatprep.subr.mxu0 0.0
      %5575 = vmatpush1.msra.mxu0 0.0
      %5576 = vmatprep.subr.mxu0 0.0
      %5577 = vmatpush1.msra.mxu0 0.0
      %5578 = vmatprep.subr.mxu0 0.0
      %5579 = vmatpush1.msra.mxu0 0.0
      %5580 = vmatprep.subr.mxu0 0.0
      %5581 = vmatpush1.msra.mxu0 0.0
      %5582 = vmatprep.subr.mxu0 0.0
      %5583 = vmatpush1.msra.mxu0 0.0
      %5584 = vmatprep.subr.mxu0 0.0
      %5585 = vmatpush1.msra.mxu0 0.0
      %5586 = vmatprep.subr.mxu0 0.0
      %5587 = vmatpush1.msra.mxu0 0.0
      %5588 = vmatprep.subr.mxu0 0.0
      %5589 = vmatpush1.msra.mxu0 0.0
      %5590 = vmatprep.subr.mxu0 0.0
      %5591 = vmatpush1.msra.mxu0 0.0
      %5592 = vmatprep.subr.mxu0 0.0
      %5593 = vmatpush1.msra.mxu0 0.0
      %5594 = vmatprep.subr.mxu0 0.0
      %5595 = vmatpush1.msra.mxu0 0.0
      %5596 = vmatprep.subr.mxu0 0.0
      %5597 = vmatpush1.msra.mxu0 0.0
      %5598 = vmatprep.subr.mxu0 0.0
      %5599 = vmatpush1.msra.mxu0 0.0
      %5600 = vmatprep.subr.mxu0 0.0
      %5601 = vmatpush1.msra.mxu0 0.0
      %5602 = vmatprep.subr.mxu0 0.0
      %5603 = vmatpush1.msra.mxu0 0.0
      %5604 = vmatprep.subr.mxu0 0.0
      %5605 = vmatpush1.msra.mxu0 0.0
      %5606 = vmatprep.subr.mxu0 0.0
      %5607 = vmatpush1.msra.mxu0 0.0
      %5608 = vmatprep.subr.mxu0 0.0
      %5609 = vmatpush1.msra.mxu0 0.0
      %5610 = vmatprep.subr.mxu0 0.0
      %5611 = vmatpush1.msra.mxu0 0.0
      %5612 = vmatprep.subr.mxu0 0.0
      %5613 = vmatpush1.msra.mxu0 0.0
      %5614 = vmatprep.subr.mxu0 0.0
      %5615 = vmatpush1.msra.mxu0 0.0
      %5616 = vmatprep.subr.mxu0 0.0
      %5617 = vmatpush1.msra.mxu0 0.0
      %5618 = vmatprep.subr.mxu0 0.0
      %5619 = vmatpush1.msra.mxu0 0.0
      %5620 = vmatprep.subr.mxu0 0.0
      %5621 = vmatpush1.msra.mxu0 0.0
      %5622 = vmatprep.subr.mxu0 0.0
      %5623 = vmatpush1.msra.mxu0 0.0
      %5624 = vmatprep.subr.mxu0 0.0
      %5625 = vmatpush1.msra.mxu0 0.0
      %5626 = vmatprep.subr.mxu0 0.0
      %5627 = vmatpush1.msra.mxu0 0.0
      %5628 = vmatprep.mubr.f32.mxu0 0.0
      %5629 = vmatmul.mubr.f32.gmra.mrb[0].mxu0 %v5478
      %v5630 = vpop.f32.mrb[0].mxu0
      %v5631 = vadd.f32 0.0, %v5630
      %v5632 = vpop.f32.mrb[0].mxu0
      %5633 = vmatprep.mubr.f32.mxu0 0.0
      %5634 = vmatmul.mubr.f32.gmra.mrb[0].mxu0 %v5481
      %v5635 = vpop.f32.mrb[0].mxu0
      %v5636 = vadd.f32 0.0, %v5635
      %v5637 = vpop.f32.mrb[0].mxu0
      %5638 = vmatprep.mubr.f32.mxu0 0.0
      %5639 = vmatmul.mubr.f32.gmra.mrb[0].mxu0 %v5484
      %v5640 = vpop.f32.mrb[0].mxu0
      %v5641 = vadd.f32 0.0, %v5640
      %v5642 = vpop.f32.mrb[0].mxu0
      %5643 = vmatprep.mubr.f32.mxu0 0.0
      %5644 = vmatmul.mubr.f32.gmra.mrb[0].mxu0 %v5487
      %v5645 = vpop.f32.mrb[0].mxu0
      %v5646 = vadd.f32 0.0, %v5645
      %v5647 = vpop.f32.mrb[0].mxu0
      %5648 = vmatprep.mubr.f32.mxu0 0.0
      %5649 = vmatmul.mubr.f32.gmra.mrb[0].mxu0 %v5490
      %v5650 = vpop.f32.mrb[0].mxu0
      %v5651 = vadd.f32 0.0, %v5650
      %v5652 = vpop.f32.mrb[0].mxu0
      %5653 = vmatprep.mubr.f32.mxu0 0.0
      %5654 = vmatmul.mubr.f32.gmra.mrb[0].mxu0 %v5493
      %v5655 = vpop.f32.mrb[0].mxu0
      %v5656 = vadd.f32 0.0, %v5655
      %v5657 = vpop.f32.mrb[0].mxu0
      %5658 = vmatprep.mubr.f32.mxu0 0.0
      %5659 = vmatmul.mubr.f32.gmra.mrb[0].mxu0 %v5496
      %v5660 = vpop.f32.mrb[0].mxu0
      %v5661 = vadd.f32 0.0, %v5660
      %v5662 = vpop.f32.mrb[0].mxu0
      %5663 = vmatprep.mubr.f32.mxu0 0.0
      %5664 = vmatmul.mubr.f32.gmra.mrb[0].mxu0 %v5499
      %v5665 = vpop.f32.mrb[0].mxu0
      %v5666 = vadd.f32 0.0, %v5665
      %v5667 = vpop.f32.mrb[0].mxu0
      %5668 = vmatprep.mubr.f32.mxu0 0.0
      %5669 = vmatmul.mubr.f32.gmra.mrb[0].mxu0 %v5502
      %v5670 = vpop.f32.mrb[0].mxu0
      %v5671 = vadd.f32 0.0, %v5670
      %v5672 = vpop.f32.mrb[0].mxu0
      %5673 = vmatprep.mubr.f32.mxu0 0.0
      %5674 = vmatmul.mubr.f32.gmra.mrb[0].mxu0 %v5505
      %v5675 = vpop.f32.mrb[0].mxu0
      %v5676 = vadd.f32 0.0, %v5675
      %v5677 = vpop.f32.mrb[0].mxu0
      %5678 = vmatprep.mubr.f32.mxu0 0.0
      %5679 = vmatmul.mubr.f32.gmra.mrb[0].mxu0 %v5508
      %v5680 = vpop.f32.mrb[0].mxu0
      %v5681 = vadd.f32 0.0, %v5680
      %v5682 = vpop.f32.mrb[0].mxu0
      %5683 = vmatprep.mubr.f32.mxu0 0.0
      %5684 = vmatmul.mubr.f32.gmra.mrb[0].mxu0 %v5511
      %v5685 = vpop.f32.mrb[0].mxu0
      %v5686 = vadd.f32 0.0, %v5685
      %v5687 = vpop.f32.mrb[0].mxu0
      %5688 = vmatprep.mubr.f32.mxu0 0.0
      %5689 = vmatmul.mubr.f32.gmra.mrb[0].mxu0 %v5514
      %v5690 = vpop.f32.mrb[0].mxu0
      %v5691 = vadd.f32 0.0, %v5690
      %v5692 = vpop.f32.mrb[0].mxu0
      %5693 = vmatprep.mubr.f32.mxu0 0.0
      %5694 = vmatmul.mubr.f32.gmra.mrb[0].mxu0 %v5517
      %v5695 = vpop.f32.mrb[0].mxu0
      %v5696 = vadd.f32 0.0, %v5695
      %v5697 = vpop.f32.mrb[0].mxu0
      %5698 = vmatprep.mubr.f32.mxu0 0.0
      %5699 = vmatmul.mubr.f32.gmra.mrb[0].mxu0 %v5520
      %v5700 = vpop.f32.mrb[0].mxu0
      %v5701 = vadd.f32 0.0, %v5700
      %v5702 = vpop.f32.mrb[0].mxu0
      %5703 = vmatprep.mubr.f32.mxu0 0.0
      %5704 = vmatmul.mubr.f32.gmra.mrb[0].mxu0 %v5523
      %v5705 = vpop.f32.mrb[0].mxu0
      %v5706 = vadd.f32 0.0, %v5705
      %v5707 = vpop.f32.mrb[0].mxu0
      %5708 = vmatprep.mubr.f32.mxu0 0.0
      %5709 = vmatmul.mubr.f32.gmra.mrb[0].mxu0 %v5526
      %v5710 = vpop.f32.mrb[0].mxu0
      %v5711 = vadd.f32 0.0, %v5710
      %v5712 = vpop.f32.mrb[0].mxu0
      %5713 = vmatprep.mubr.f32.mxu0 0.0
      %5714 = vmatmul.mubr.f32.gmra.mrb[0].mxu0 %v5529
      %v5715 = vpop.f32.mrb[0].mxu0
      %v5716 = vadd.f32 0.0, %v5715
      %v5717 = vpop.f32.mrb[0].mxu0
      %5718 = vmatprep.mubr.f32.mxu0 0.0
      %5719 = vmatmul.mubr.f32.gmra.mrb[0].mxu0 %v5532
      %v5720 = vpop.f32.mrb[0].mxu0
      %v5721 = vadd.f32 0.0, %v5720
      %v5722 = vpop.f32.mrb[0].mxu0
      %5723 = vmatprep.mubr.f32.mxu0 0.0
      %5724 = vmatmul.mubr.f32.gmra.mrb[0].mxu0 %v5535
      %v5725 = vpop.f32.mrb[0].mxu0
      %v5726 = vadd.f32 0.0, %v5725
      %v5727 = vpop.f32.mrb[0].mxu0
      %5728 = vmatprep.mubr.f32.mxu0 0.0
      %5729 = vmatmul.mubr.f32.gmra.mrb[0].mxu0 %v5538
      %v5730 = vpop.f32.mrb[0].mxu0
      %v5731 = vadd.f32 0.0, %v5730
      %v5732 = vpop.f32.mrb[0].mxu0
      %5733 = vmatprep.mubr.f32.mxu0 0.0
      %5734 = vmatmul.mubr.f32.gmra.mrb[0].mxu0 %v5541
      %v5735 = vpop.f32.mrb[0].mxu0
      %v5736 = vadd.f32 0.0, %v5735
      %v5737 = vpop.f32.mrb[0].mxu0
      %5738 = vmatprep.mubr.f32.mxu0 0.0
      %5739 = vmatmul.mubr.f32.gmra.mrb[0].mxu0 %v5544
      %v5740 = vpop.f32.mrb[0].mxu0
      %v5741 = vadd.f32 0.0, %v5740
      %v5742 = vpop.f32.mrb[0].mxu0
      %5743 = vmatprep.mubr.f32.mxu0 0.0
      %5744 = vmatmul.mubr.f32.gmra.mrb[0].mxu0 %v5547
      %v5745 = vpop.f32.mrb[0].mxu0
      %v5746 = vadd.f32 0.0, %v5745
      %v5747 = vpop.f32.mrb[0].mxu0
      %5748 = vmatprep.mubr.f32.mxu0 0.0
      %5749 = vmatmul.mubr.f32.gmra.mrb[0].mxu0 %v5550
      %v5750 = vpop.f32.mrb[0].mxu0
      %v5751 = vadd.f32 0.0, %v5750
      %v5752 = vpop.f32.mrb[0].mxu0
      %5753 = vmatprep.mubr.f32.mxu0 0.0
      %5754 = vmatmul.mubr.f32.gmra.mrb[0].mxu0 %v5553
      %v5755 = vpop.f32.mrb[0].mxu0
      %v5756 = vadd.f32 0.0, %v5755
      %v5757 = vpop.f32.mrb[0].mxu0
      %5758 = vmatprep.mubr.f32.mxu0 0.0
      %5759 = vmatmul.mubr.f32.gmra.mrb[0].mxu0 %v5556
      %v5760 = vpop.f32.mrb[0].mxu0
      %v5761 = vadd.f32 0.0, %v5760
      %v5762 = vpop.f32.mrb[0].mxu0
      %5763 = vmatprep.mubr.f32.mxu0 0.0
      %5764 = vmatmul.mubr.f32.gmra.mrb[0].mxu0 %v5559
      %v5765 = vpop.f32.mrb[0].mxu0
      %v5766 = vadd.f32 0.0, %v5765
      %v5767 = vpop.f32.mrb[0].mxu0
      %5768 = vdwg.mxu0
      %v5769 = vmax.f32 %v5631, 0.0
      %v5770 = vmax.f32 %v5636, 0.0
      %v5771 = vmax.f32 %v5641, 0.0
      %v5772 = vmax.f32 %v5646, 0.0
      %v5773 = vmax.f32 %v5651, 0.0
      %v5774 = vmax.f32 %v5656, 0.0
      %v5775 = vmax.f32 %v5661, 0.0
      %v5776 = vmax.f32 %v5666, 0.0
      %v5777 = vmax.f32 %v5671, 0.0
      %v5778 = vmax.f32 %v5676, 0.0
      %v5779 = vmax.f32 %v5681, 0.0
      %v5780 = vmax.f32 %v5686, 0.0
      %v5781 = vmax.f32 %v5691, 0.0
      %v5782 = vmax.f32 %v5696, 0.0
      %v5783 = vmax.f32 %v5701, 0.0
      %v5784 = vmax.f32 %v5706, 0.0
      %v5785 = vmax.f32 %v5711, 0.0
      %v5786 = vmax.f32 %v5716, 0.0
      %v5787 = vmax.f32 %v5721, 0.0
      %v5788 = vmax.f32 %v5726, 0.0
      %v5789 = vmax.f32 %v5731, 0.0
      %v5790 = vmax.f32 %v5736, 0.0
      %v5791 = vmax.f32 %v5741, 0.0
      %v5792 = vmax.f32 %v5746, 0.0
      %v5793 = vmax.f32 %v5751, 0.0
      %v5794 = vmax.f32 %v5756, 0.0
      %v5795 = vmax.f32 %v5761, 0.0
      %v5796 = vmax.f32 %v5766, 0.0
      %vm5797 = vcmask 130048
      %5798 = vst.msk [vmem:[%s226] sm:$0xff] %vm5797, %v5769
      %5799 = vst.msk [vmem:[%s226 + $0x8] sm:$0xff] %vm5797, %v5770
      %5800 = vst.msk [vmem:[%s226 + $0x10] sm:$0xff] %vm5797, %v5771
      %5801 = vst.msk [vmem:[%s226 + $0x18] sm:$0xff] %vm5797, %v5772
      %5802 = vst.msk [vmem:[%s226 + $0x20] sm:$0xff] %vm5797, %v5773
      %5803 = vst.msk [vmem:[%s226 + $0x28] sm:$0xff] %vm5797, %v5774
      %5804 = vst.msk [vmem:[%s226 + $0x30] sm:$0xff] %vm5797, %v5775
      %5805 = vst.msk [vmem:[%s226 + $0x38] sm:$0xff] %vm5797, %v5776
      %5806 = vst.msk [vmem:[%s226 + $0x40] sm:$0xff] %vm5797, %v5777
      %5807 = vst.msk [vmem:[%s226 + $0x48] sm:$0xff] %vm5797, %v5778
      %5808 = vst.msk [vmem:[%s226 + $0x50] sm:$0xff] %vm5797, %v5779
      %5809 = vst.msk [vmem:[%s226 + $0x58] sm:$0xff] %vm5797, %v5780
      %5810 = vst.msk [vmem:[%s226 + $0x60] sm:$0xff] %vm5797, %v5781
      %5811 = vst.msk [vmem:[%s226 + $0x68] sm:$0xff] %vm5797, %v5782
      %5812 = vst.msk [vmem:[%s226 + $0x70] sm:$0xff] %vm5797, %v5783
      %5813 = vst.msk [vmem:[%s226 + $0x78] sm:$0xff] %vm5797, %v5784
      %5814 = vst.msk [vmem:[%s226 + $0x80] sm:$0xff] %vm5797, %v5785
      %5815 = vst.msk [vmem:[%s226 + $0x88] sm:$0xff] %vm5797, %v5786
      %5816 = vst.msk [vmem:[%s226 + $0x90] sm:$0xff] %vm5797, %v5787
      %5817 = vst.msk [vmem:[%s226 + $0x98] sm:$0xff] %vm5797, %v5788
      %5818 = vst.msk [vmem:[%s226 + $0xa0] sm:$0xff] %vm5797, %v5789
      %5819 = vst.msk [vmem:[%s226 + $0xa8] sm:$0xff] %vm5797, %v5790
      %5820 = vst.msk [vmem:[%s226 + $0xb0] sm:$0xff] %vm5797, %v5791
      %5821 = vst.msk [vmem:[%s226 + $0xb8] sm:$0xff] %vm5797, %v5792
      %5822 = vst.msk [vmem:[%s226 + $0xc0] sm:$0xff] %vm5797, %v5793
      %5823 = vst.msk [vmem:[%s226 + $0xc8] sm:$0xff] %vm5797, %v5794
      %5824 = vst.msk [vmem:[%s226 + $0xd0] sm:$0xff] %vm5797, %v5795
      %vm5825 = vcmask 128000
      %5826 = vst.msk [vmem:[%s226 + $0xd8] sm:$0x3f] %vm5825, %v5796
      %5827 = vst.msk [vmem:[%s226 + $0xde] sm:$0xff] %vm5797, 0.0
      %5828 = vst.msk [vmem:[%s226 + $0xe6] sm:$0xff] %vm5797, 0.0
      %5829 = vst.msk [vmem:[%s226 + $0xee] sm:$0xff] %vm5797, 0.0
      %5830 = vst.msk [vmem:[%s226 + $0xf6] sm:$0xff] %vm5797, 0.0
      %vm5831 = vcmask 123904
      %5832 = vst.msk [vmem:[%s226 + $0xfe] sm:$0x3] %vm5831, 0.0
      %s5833 = smul.u32 32, %s16
      %p5834 = scmp.lt.s32.totalorder %s5833, 63
      %s5835 = scalar_select %p5834, %s5833, 63
      %s5836 = smul.addr %s5835, 8
      %s5837 = scalar_lea.vmem %s5, %s5836
      // Predicated region
      $region41: #{bottleneck_forward.1} parent=39 // pred_check
        %p5838 = pneg %p144
      $region42: #{bottleneck_forward.1} parent=39 // pred_check_branch
        %5840 = sbr.rel (%p5838) target = $region44
      $region43: #{bottleneck_forward.1} parent=39 // pred_region
        %s5841 = smul.u32 32, %s16
      $region44: #{bottleneck_forward.1} parent=39 // pred_fallthru
        _
    $region40: #{bottleneck_forward.1} parent=5 // pred_fallthru
      _
    %p5842 = scmp.le.s32.totalorder 2, %s11
    // Predicated region
    $region45: #{bottleneck_forward.1} parent=5 // pred_check
      %p5843 = pneg %p5842
    $region46: #{bottleneck_forward.1} parent=5 // pred_check_branch
      %5845 = sbr.rel (%p5843) target = $region48
    $region47: #{bottleneck_forward.1} parent=5 // pred_region
      %s5846 = ssub.s32 %s11, 2
      // Predicated region
      $region49: #{bottleneck_forward.1} parent=47 // pred_check
        %p5847 = pneg %p150
      $region50: #{bottleneck_forward.1} parent=47 // pred_check_branch
        %5849 = sbr.rel (%p5847) target = $region52
      $region51: #{bottleneck_forward.1} parent=47 // pred_region
        %s5850 = smul.u32 32, %s17
        %p5851 = scmp.lt.s32.totalorder %s5850, 63
        %s5852 = scalar_select %p5851, %s5850, 63
        %s5853 = smul.addr %s5852, 8
        %s5854 = scalar_lea.vmem %s5, %s5853
      $region52: #{bottleneck_forward.1} parent=47 // pred_fallthru
        _
    $region48: #{bottleneck_forward.1} parent=5 // pred_fallthru
      _
  $region6: #{bottleneck_forward.1} parent=0 // loop_footer
    %s15 = sadd.s32 1, %s11
  $region7: #{bottleneck_forward.1} parent=0 // loop_footer_branch
    %10 = sbr.rel target = $region3
  $region8: #{bottleneck_forward.1} parent=0 // loop_exit
    _

</llo_original>
